<compile_context>
chip_gen: v7x
topology: tpu7x:2x2x1
jax: 0.10.0
libtpu: 0.0.40
codegen_flags: <defaults>
</compile_context>

<pallas_src>
import numpy as np
import jax
import jax.numpy as jnp
from jax.experimental import pallas as pl
from jax.experimental.pallas import tpu as pltpu

# ------------------------- problem sizes (small, consistent with the module) -------------
B, N = 2, 8            # graphs, max nodes per graph
BN = B * N             # batch folded into the sublane axis
IN_FEAT = 16           # infeat_dim
FEAT = 128             # feat_dim
HID = 256              # hidden_dim
HEADS = 4              # num_heads
HEAD_DIM = FEAT // HEADS
NUM_LAYERS = 6
MAX_DEGREE = 8
MAX_DIST = 5
NEG_SLOPE = 0.1        # MLP LeakyReLU slope
LN_EPS = 1e-5
MASK_NEG = -1e9        # additive mask (replaces -inf; avoids NaN hazard, same probs in f32)


# ======================================= kernel ==========================================
def _layer_norm(x, g, b):
    mu = jnp.mean(x, axis=-1, keepdims=True)
    var = jnp.mean((x - mu) ** 2, axis=-1, keepdims=True)
    return (x - mu) * jax.lax.rsqrt(var + LN_EPS) * g + b


def _leaky_relu(x):
    return jnp.where(x >= 0.0, x, NEG_SLOPE * x)


def graphormer_body_kernel(nf_ref, deg_ref, bias_ref,
                           n_w1_ref, n_b1_ref, n_w2_ref, n_b2_ref,
                           wqkv_ref, bqkv_ref, wo_ref, bo_ref,
                           ln1g_ref, ln1b_ref, w1_ref, b1_ref, w2_ref, b2_ref,
                           ln2g_ref, ln2b_ref,
                           o_w1_ref, o_b1_ref, o_w2_ref, o_b2_ref,
                           out_ref, x_scr):
    """One GraphormerLayer per grid step; x carried in VMEM scratch across steps."""
    l = pl.program_id(0)

    # ---- first step: mlp_n + degree embedding -> x scratch -------------------------------
    @pl.when(l == 0)
    def _():
        h = jnp.dot(nf_ref[...], n_w1_ref[...],
                    preferred_element_type=jnp.float32) + n_b1_ref[...]
        h = _leaky_relu(h)
        x0 = jnp.dot(h, n_w2_ref[...], preferred_element_type=jnp.float32) + n_b2_ref[...]
        x_scr[...] = x0 + deg_ref[...]

    x = x_scr[...]                                                     # (B*N, FEAT) f32

    # ---- this layer's weights are the streamed (1, ...) blocks ---------------------------
    qkv = jnp.dot(x, wqkv_ref[0], preferred_element_type=jnp.float32) + bqkv_ref[0]

    heads_out = []
    for hd in range(HEADS):                                            # static head loop
        lo = hd * HEAD_DIM
        hi = lo + HEAD_DIM
        qh = qkv[:, lo:hi]                       # 1/sqrt(head_dim) pre-folded into wq/bq
        kh = qkv[:, FEAT + lo:FEAT + hi]
        vh = qkv[:, 2 * FEAT + lo:2 * FEAT + hi]
        s = jnp.dot(qh, kh.T, preferred_element_type=jnp.float32)      # (B*N, B*N)
        s = s + bias_ref[hd]                     # rand bias + mask + cross-graph blocking
        m = jnp.max(s, axis=-1, keepdims=True)
        e = jnp.exp(s - m)
        p = e / jnp.sum(e, axis=-1, keepdims=True)                     # exact division (f32)
        heads_out.append(jnp.dot(p, vh, preferred_element_type=jnp.float32))

    o_cat = jnp.concatenate(heads_out, axis=1)                         # (B*N, FEAT)
    attn = jnp.dot(o_cat, wo_ref[0], preferred_element_type=jnp.float32) + bo_ref[0]

    # residual + post-LN (norm_first=False)
    x = _layer_norm(x + attn, ln1g_ref[0], ln1b_ref[0])

    # FFN: Linear -> ReLU -> Linear
    hdn = jnp.dot(x, w1_ref[0], preferred_element_type=jnp.float32) + b1_ref[0]
    hdn = jnp.maximum(hdn, 0.0)
    ffn = jnp.dot(hdn, w2_ref[0], preferred_element_type=jnp.float32) + b2_ref[0]
    x = _layer_norm(x + ffn, ln2g_ref[0], ln2b_ref[0])
    x_scr[...] = x

    # ---- last step: mlp_out on all nodes (row-wise linear commutes with the PO gather) ---
    @pl.when(l == NUM_LAYERS - 1)
    def _():
        h = jnp.dot(x, o_w1_ref[...], preferred_element_type=jnp.float32) + o_b1_ref[...]
        h = _leaky_relu(h)
        out_ref[...] = jnp.dot(h, o_w2_ref[...],
                               preferred_element_type=jnp.float32) + o_b2_ref[...]


def fused_graphormer(nf2, deg2, bias_packed, params):
    n_w = params['mlp_n_bf16']
    o_w = params['mlp_out_bf16']
    S = params['stacked']
    per_layer = [S['wqkv'], S['bqkv'], S['wo'], S['bo'],
                 S['ln1_g'], S['ln1_b'], S['w1'], S['b1'], S['w2'], S['b2'],
                 S['ln2_g'], S['ln2_b']]

    def const_spec(a):                 # resident across all layers (constant block index)
        nd = a.ndim
        return pl.BlockSpec(a.shape, lambda l, _nd=nd: (0,) * _nd)

    def layer_spec(a):                 # streamed: layer l's slice, prefetched under layer l-1
        nd = a.ndim
        return pl.BlockSpec((1,) + a.shape[1:], lambda l, _nd=nd: (l,) + (0,) * (_nd - 1))

    in_specs = ([const_spec(nf2), const_spec(deg2), const_spec(bias_packed)]
                + [const_spec(w) for w in n_w]
                + [layer_spec(w) for w in per_layer]
                + [const_spec(w) for w in o_w])

    return pl.pallas_call(
        graphormer_body_kernel,
        out_shape=jax.ShapeDtypeStruct((BN, 1), jnp.float32),
        grid=(NUM_LAYERS,),
        in_specs=in_specs,
        out_specs=pl.BlockSpec((BN, 1), lambda l: (0, 0)),
        scratch_shapes=[pltpu.VMEM((BN, FEAT), jnp.float32)],
        compiler_params=pltpu.CompilerParams(
            # layer axis carries x in VMEM scratch -> sequential
            dimension_semantics=("arbitrary",)),
    )(nf2, deg2, bias_packed, *n_w, *per_layer, *o_w)


# ==================================== parameters =========================================
def _dense(key, din, dout):
    kw, kb = jax.random.split(key)
    w = jax.random.normal(kw, (din, dout), jnp.float32) * (din ** -0.5)
    b = jax.random.normal(kb, (1, dout), jnp.float32) * 0.01
    return w, b


def _bf16(x):
    return x.astype(jnp.bfloat16)


def init_params(key):
    ks = iter(jax.random.split(key, 64))
    params = {}
    # DegreeEncoder: two embedding tables, padding_idx=0 row zeroed (gather runs outside)
    t1 = jax.random.normal(next(ks), (MAX_DEGREE + 1, FEAT), jnp.float32) * 0.02
    t2 = jax.random.normal(next(ks), (MAX_DEGREE + 1, FEAT), jnp.float32) * 0.02
    params['deg_tab1'] = t1.at[0].set(0.0)
    params['deg_tab2'] = t2.at[0].set(0.0)
    # SpatialEncoder: embedding table (max_dist + 2, num_heads) - unused downstream
    st = jax.random.normal(next(ks), (MAX_DIST + 2, HEADS), jnp.float32) * 0.02
    params['spatial_tab'] = st.at[0].set(0.0)

    # mlp_n (infeat -> feat/2 -> feat) and mlp_out (feat -> feat/2 -> 1): bf16 for the kernel,
    # f32 upcasts of the SAME rounded values for the reference
    mlp_n = [*_dense(next(ks), IN_FEAT, FEAT // 2), *_dense(next(ks), FEAT // 2, FEAT)]
    mlp_out = [*_dense(next(ks), FEAT, FEAT // 2), *_dense(next(ks), FEAT // 2, 1)]
    params['mlp_n_bf16'] = tuple(_bf16(w) for w in mlp_n)
    params['mlp_out_bf16'] = tuple(_bf16(w) for w in mlp_out)
    params['mlp_n'] = tuple(w.astype(jnp.float32) for w in params['mlp_n_bf16'])
    params['mlp_out'] = tuple(w.astype(jnp.float32) for w in params['mlp_out_bf16'])

    # 6 Graphormer layers; 1/sqrt(head_dim) folded into the q projection (exact in real math)
    scaling = HEAD_DIM ** -0.5
    layers_bf, layers_f32 = [], []
    for _ in range(NUM_LAYERS):
        wq, bq = _dense(next(ks), FEAT, FEAT)
        wk, bk = _dense(next(ks), FEAT, FEAT)
        wv, bv = _dense(next(ks), FEAT, FEAT)
        wo, bo = _dense(next(ks), FEAT, FEAT)
        w1, b1 = _dense(next(ks), FEAT, HID)
        w2, b2 = _dense(next(ks), HID, FEAT)
        lp = dict(wq=wq * scaling, bq=bq * scaling,
                  wk=wk, bk=bk, wv=wv, bv=bv, wo=wo, bo=bo,
                  ln1_g=jnp.ones((1, FEAT), jnp.float32),
                  ln1_b=jnp.zeros((1, FEAT), jnp.float32),
                  w1=w1, b1=b1, w2=w2, b2=b2,
                  ln2_g=jnp.ones((1, FEAT), jnp.float32),
                  ln2_b=jnp.zeros((1, FEAT), jnp.float32))
        lp_bf = {k: _bf16(v) for k, v in lp.items()}
        layers_bf.append(lp_bf)
        layers_f32.append({k: v.astype(jnp.float32) for k, v in lp_bf.items()})
    params['layers'] = layers_f32       # reference weights (identical bf16-rounded values)

    # stacked (6, ...) bf16 weights for the streamed kernel; q/k/v fused along output dim
    stacked = {
        'wqkv': jnp.stack([jnp.concatenate([lp['wq'], lp['wk'], lp['wv']], axis=1)
                           for lp in layers_bf]),                   # (6, F, 3F)
        'bqkv': jnp.stack([jnp.concatenate([lp['bq'], lp['bk'], lp['bv']], axis=1)
                           for lp in layers_bf]),                   # (6, 1, 3F)
    }
    for name in ('wo', 'bo', 'ln1_g', 'ln1_b', 'w1', 'b1', 'w2', 'b2', 'ln2_g', 'ln2_b'):
        stacked[name] = jnp.stack([lp[name] for lp in layers_bf])
    params['stacked'] = stacked
    return params


# ==================================== forward pass =======================================
def graphormer_forward(gi, params, bias_key):
    nf = gi['node_feat_new']
    Bn, Nn, Din = nf.shape

    # DegreeEncoder (embedding gather is glue -> plain JAX)
    in_deg = jnp.clip(gi['in_degree'], 0, MAX_DEGREE)
    out_deg = jnp.clip(gi['out_degree'], 0, MAX_DEGREE)
    deg_emb = params['deg_tab1'][in_deg] + params['deg_tab2'][out_deg]       # (B, N, F)

    # SpatialEncoder - computed but NOT used, exactly as in the reference forward
    _spatial = params['spatial_tab'][jnp.clip(gi['dist'], -1, MAX_DIST) + 1]

    # attn_bias = th.rand(...) -> deterministic uniform (B, N, N, H)
    attn_bias = jax.random.uniform(bias_key, (Bn, Nn, Nn, HEADS), dtype=jnp.float32)

    # per-head (B*N, B*N) additive bias: rand bias on the per-graph diagonal blocks,
    # -1e9 where attn_mask is set and on ALL cross-graph blocks (no probability leak)
    bias_hbnn = jnp.transpose(attn_bias, (3, 0, 1, 2))                       # (H, B, N, N)
    bias_hbnn = jnp.where(gi['attn_mask'][None], MASK_NEG, bias_hbnn)
    bias_packed = jnp.full((HEADS, Bn * Nn, Bn * Nn), MASK_NEG, jnp.float32)
    for g in range(Bn):
        bias_packed = bias_packed.at[:, g * Nn:(g + 1) * Nn,
                                     g * Nn:(g + 1) * Nn].set(bias_hbnn[:, g])

    # single fused Pallas kernel: mlp_n + 6 layers (streamed) + mlp_out, batch folded
    out_flat = fused_graphormer(nf.reshape(Bn * Nn, Din),
                                deg_emb.reshape(Bn * Nn, FEAT).astype(jnp.float32),
                                bias_packed, params)                         # (B*N, 1)
    out_all = out_flat.reshape(Bn, Nn, 1)

    # dynamic-shape boolean gather -> eager JAX (equivalent to the cat_tensor loop)
    res = jnp.concatenate([out_all[i][gi['POs_mask'][i]] for i in range(Bn)], axis=0)
    return res, attn_bias


# ============================= pure-JAX reference (for checking) =========================
def _mlp2_ref(x, w1, b1, w2, b2):
    h = x @ w1 + b1
    h = jnp.where(h >= 0.0, h, NEG_SLOPE * h)
    return h @ w2 + b2


def _layer_ref(x, bias, mask_bool, p):
    q = x @ p['wq'] + p['bq']          # 1/sqrt(head_dim) already folded into wq/bq
    k = x @ p['wk'] + p['bk']
    v = x @ p['wv'] + p['bv']
    Bn, Nn, F = x.shape
    qh = q.reshape(Bn, Nn, HEADS, HEAD_DIM)
    kh = k.reshape(Bn, Nn, HEADS, HEAD_DIM)
    vh = v.reshape(Bn, Nn, HEADS, HEAD_DIM)
    scores = jnp.einsum('bihd,bjhd->bijh', qh, kh) + bias
    scores = jnp.where(mask_bool[..., None], -jnp.inf, scores)
    pw = jax.nn.softmax(scores, axis=2)
    attn = jnp.einsum('bijh,bjhd->bihd', pw, vh).reshape(Bn, Nn, F)
    attn = attn @ p['wo'] + p['bo']
    x = _layer_norm(x + attn, p['ln1_g'], p['ln1_b'])
    h = jnp.maximum(x @ p['w1'] + p['b1'], 0.0)
    x = _layer_norm(x + h @ p['w2'] + p['b2'], p['ln2_g'], p['ln2_b'])
    return x


def reference_forward(gi, params, attn_bias):
    deg_emb = (params['deg_tab1'][jnp.clip(gi['in_degree'], 0, MAX_DEGREE)]
               + params['deg_tab2'][jnp.clip(gi['out_degree'], 0, MAX_DEGREE)])
    nf = gi['node_feat_new']
    Bn, Nn, Din = nf.shape
    x = _mlp2_ref(nf.reshape(Bn * Nn, Din), *params['mlp_n']).reshape(Bn, Nn, FEAT) + deg_emb
    for lp in params['layers']:
        x = _layer_ref(x, attn_bias, gi['attn_mask'], lp)
    out_all = _mlp2_ref(x.reshape(Bn * Nn, FEAT), *params['mlp_out']).reshape(Bn, Nn, 1)
    return jnp.concatenate([out_all[i][gi['POs_mask'][i]] for i in range(Bn)], axis=0)


# ========================================= main ==========================================
if __name__ == "__main__":
    key = jax.random.PRNGKey(0)
    (k_param, k_din, k_dout, k_feat, k_dist, k_mask, k_po, k_bias) = jax.random.split(key, 8)
    params = init_params(k_param)

    in_degree = jax.random.randint(k_din, (B, N), 0, 10, dtype=jnp.int32)
    out_degree = jax.random.randint(k_dout, (B, N), 0, 10, dtype=jnp.int32)
    node_feat_new = jax.random.normal(k_feat, (B, N, IN_FEAT), jnp.float32)
    dist = jax.random.randint(k_dist, (B, N, N), -1, 8, dtype=jnp.int32)
    attn_mask = jax.random.bernoulli(k_mask, 0.3, (B, N, N))
    attn_mask = attn_mask & ~jnp.eye(N, dtype=bool)[None]     # keep self-attention unmasked
    POs_mask = jax.random.bernoulli(k_po, 0.5, (B, N)).at[:, 0].set(True)

    graphs_info = dict(in_degree=in_degree, out_degree=out_degree,
                       node_feat_new=node_feat_new, dist=dist,
                       attn_mask=attn_mask, POs_mask=POs_mask)

    res, used_bias = graphormer_forward(graphs_info, params, k_bias)
    res = jax.block_until_ready(res)

    ref = reference_forward(graphs_info, params, used_bias)
    np.testing.assert_allclose(np.asarray(res), np.asarray(ref), rtol=2e-3, atol=2e-3)

    print("KERNEL_OK")
</pallas_src>

<mosaic_0001>
module attributes {stable_mosaic.version = 11 : i64} {
  func.func @graphormer_body_kernel(%arg0: i32, %arg1: memref<16x16xf32, #tpu.memory_space<vmem>>, %arg2: memref<16x128xf32, #tpu.memory_space<vmem>>, %arg3: memref<4x16x16xf32, #tpu.memory_space<vmem>>, %arg4: memref<16x64xbf16, #tpu.memory_space<vmem>>, %arg5: memref<1x64xbf16, #tpu.memory_space<vmem>>, %arg6: memref<64x128xbf16, #tpu.memory_space<vmem>>, %arg7: memref<1x128xbf16, #tpu.memory_space<vmem>>, %arg8: memref<1x128x384xbf16, #tpu.memory_space<vmem>>, %arg9: memref<1x1x384xbf16, #tpu.memory_space<vmem>>, %arg10: memref<1x128x128xbf16, #tpu.memory_space<vmem>>, %arg11: memref<1x1x128xbf16, #tpu.memory_space<vmem>>, %arg12: memref<1x1x128xbf16, #tpu.memory_space<vmem>>, %arg13: memref<1x1x128xbf16, #tpu.memory_space<vmem>>, %arg14: memref<1x128x256xbf16, #tpu.memory_space<vmem>>, %arg15: memref<1x1x256xbf16, #tpu.memory_space<vmem>>, %arg16: memref<1x256x128xbf16, #tpu.memory_space<vmem>>, %arg17: memref<1x1x128xbf16, #tpu.memory_space<vmem>>, %arg18: memref<1x1x128xbf16, #tpu.memory_space<vmem>>, %arg19: memref<1x1x128xbf16, #tpu.memory_space<vmem>>, %arg20: memref<128x64xbf16, #tpu.memory_space<vmem>>, %arg21: memref<1x64xbf16, #tpu.memory_space<vmem>>, %arg22: memref<64x1xbf16, #tpu.memory_space<vmem>>, %arg23: memref<1x1xbf16, #tpu.memory_space<vmem>>, %arg24: memref<16x1xf32, #tpu.memory_space<vmem>>, %arg25: memref<16x128xf32, #tpu.memory_space<vmem>>) attributes {dimension_semantics = [#tpu.dimension_semantics<arbitrary>], iteration_bounds = array<i64: 6>, scalar_prefetch = 0 : i64, scratch_operands = 1 : i64, tpu.core_type = #tpu.core_type<tc>, window_params = [{pipeline_mode = #tpu.pipeline_mode<synchronous>, transform_indices = @transform_0, window_bounds = array<i64: 16, 16>}, {pipeline_mode = #tpu.pipeline_mode<synchronous>, transform_indices = @transform_1, window_bounds = array<i64: 16, 128>}, {pipeline_mode = #tpu.pipeline_mode<synchronous>, transform_indices = @transform_2, window_bounds = array<i64: 4, 16, 16>}, {pipeline_mode = #tpu.pipeline_mode<synchronous>, transform_indices = @transform_3, window_bounds = array<i64: 16, 64>}, {pipeline_mode = #tpu.pipeline_mode<synchronous>, transform_indices = @transform_4, window_bounds = array<i64: 1, 64>}, {pipeline_mode = #tpu.pipeline_mode<synchronous>, transform_indices = @transform_5, window_bounds = array<i64: 64, 128>}, {pipeline_mode = #tpu.pipeline_mode<synchronous>, transform_indices = @transform_6, window_bounds = array<i64: 1, 128>}, {transform_indices = @transform_7, window_bounds = array<i64: 1, 128, 384>}, {transform_indices = @transform_8, window_bounds = array<i64: 1, 1, 384>}, {transform_indices = @transform_9, window_bounds = array<i64: 1, 128, 128>}, {transform_indices = @transform_10, window_bounds = array<i64: 1, 1, 128>}, {transform_indices = @transform_11, window_bounds = array<i64: 1, 1, 128>}, {transform_indices = @transform_12, window_bounds = array<i64: 1, 1, 128>}, {transform_indices = @transform_13, window_bounds = array<i64: 1, 128, 256>}, {transform_indices = @transform_14, window_bounds = array<i64: 1, 1, 256>}, {transform_indices = @transform_15, window_bounds = array<i64: 1, 256, 128>}, {transform_indices = @transform_16, window_bounds = array<i64: 1, 1, 128>}, {transform_indices = @transform_17, window_bounds = array<i64: 1, 1, 128>}, {transform_indices = @transform_18, window_bounds = array<i64: 1, 1, 128>}, {pipeline_mode = #tpu.pipeline_mode<synchronous>, transform_indices = @transform_19, window_bounds = array<i64: 128, 64>}, {pipeline_mode = #tpu.pipeline_mode<synchronous>, transform_indices = @transform_20, window_bounds = array<i64: 1, 64>}, {pipeline_mode = #tpu.pipeline_mode<synchronous>, transform_indices = @transform_21, window_bounds = array<i64: 64, 1>}, {pipeline_mode = #tpu.pipeline_mode<synchronous>, transform_indices = @transform_22, window_bounds = array<i64: 1, 1>}, {pipeline_mode = #tpu.pipeline_mode<synchronous>, transform_indices = @transform_23, window_bounds = array<i64: 16, 1>}]} {
    %c0_i32 = arith.constant 0 : i32
    %0 = arith.cmpi eq, %arg0, %c0_i32 : i32
    %1 = arith.extui %0 : i1 to i32
    %c0_i32_0 = arith.constant 0 : i32
    %2 = arith.cmpi ne, %1, %c0_i32_0 : i32
    scf.if %2 {
      %c0_80 = arith.constant 0 : index
      %c0_81 = arith.constant 0 : index
      %173 = vector.load %arg1[%c0_80, %c0_81] : memref<16x16xf32, #tpu.memory_space<vmem>>, vector<16x16xf32>
      %c0_82 = arith.constant 0 : index
      %c0_83 = arith.constant 0 : index
      %174 = vector.load %arg4[%c0_82, %c0_83] : memref<16x64xbf16, #tpu.memory_space<vmem>>, vector<16x64xbf16>
      %cst_84 = arith.constant dense<0.000000e+00> : vector<16x64xf32>
      %175 = tpu.matmul %173, %174, %cst_84 {dimension_numbers = #tpu.dot_dimension_numbers<[1], [0], [0], [1], [0, 0, 1, 1], [], []>} : vector<16x16xf32>, vector<16x64xbf16>, vector<16x64xf32> -> vector<16x64xf32>
      %c0_85 = arith.constant 0 : index
      %c0_86 = arith.constant 0 : index
      %176 = vector.load %arg5[%c0_85, %c0_86] : memref<1x64xbf16, #tpu.memory_space<vmem>>, vector<1x64xbf16>
      %177 = arith.extf %176 : vector<1x64xbf16> to vector<1x64xf32>
      %178 = vector.broadcast %177 : vector<1x64xf32> to vector<16x64xf32>
      %179 = arith.addf %175, %178 : vector<16x64xf32>
      %cst_87 = arith.constant 0.000000e+00 : f32
      %180 = vector.broadcast %cst_87 : f32 to vector<16x64xf32>
      %181 = arith.cmpf oge, %179, %180 : vector<16x64xf32>
      %cst_88 = arith.constant 1.000000e-01 : f32
      %182 = vector.broadcast %cst_88 : f32 to vector<16x64xf32>
      %183 = arith.mulf %182, %179 : vector<16x64xf32>
      %184 = arith.select %181, %179, %183 : vector<16x64xi1>, vector<16x64xf32>
      %c0_89 = arith.constant 0 : index
      %c0_90 = arith.constant 0 : index
      %185 = vector.load %arg6[%c0_89, %c0_90] : memref<64x128xbf16, #tpu.memory_space<vmem>>, vector<64x128xbf16>
      %cst_91 = arith.constant dense<0.000000e+00> : vector<16x128xf32>
      %186 = tpu.matmul %184, %185, %cst_91 {dimension_numbers = #tpu.dot_dimension_numbers<[1], [0], [0], [1], [0, 0, 1, 1], [], []>} : vector<16x64xf32>, vector<64x128xbf16>, vector<16x128xf32> -> vector<16x128xf32>
      %c0_92 = arith.constant 0 : index
      %c0_93 = arith.constant 0 : index
      %187 = vector.load %arg7[%c0_92, %c0_93] : memref<1x128xbf16, #tpu.memory_space<vmem>>, vector<1x128xbf16>
      %188 = arith.extf %187 : vector<1x128xbf16> to vector<1x128xf32>
      %189 = vector.broadcast %188 : vector<1x128xf32> to vector<16x128xf32>
      %190 = arith.addf %186, %189 : vector<16x128xf32>
      %c0_94 = arith.constant 0 : index
      %c0_95 = arith.constant 0 : index
      %191 = vector.load %arg2[%c0_94, %c0_95] : memref<16x128xf32, #tpu.memory_space<vmem>>, vector<16x128xf32>
      %192 = arith.addf %190, %191 : vector<16x128xf32>
      %c0_96 = arith.constant 0 : index
      %c0_97 = arith.constant 0 : index
      %193 = vector.load %arg25[%c0_96, %c0_97] : memref<16x128xf32, #tpu.memory_space<vmem>>, vector<16x128xf32>
      tpu.vector_store %arg25[%c0_96, %c0_97], %192 {strides = array<i32>} : memref<16x128xf32, #tpu.memory_space<vmem>>, vector<16x128xf32>,
    } else {
    }
    %c0 = arith.constant 0 : index
    %c0_1 = arith.constant 0 : index
    %3 = vector.load %arg25[%c0, %c0_1] : memref<16x128xf32, #tpu.memory_space<vmem>>, vector<16x128xf32>
    %c0_2 = arith.constant 0 : index
    %c0_3 = arith.constant 0 : index
    %c0_4 = arith.constant 0 : index
    %4 = vector.load %arg8[%c0_2, %c0_3, %c0_4] : memref<1x128x384xbf16, #tpu.memory_space<vmem>>, vector<1x128x384xbf16>
    %5 = vector.shape_cast %4 : vector<1x128x384xbf16> to vector<128x384xbf16>
    %cst = arith.constant dense<0.000000e+00> : vector<16x384xf32>
    %6 = tpu.matmul %3, %5, %cst {dimension_numbers = #tpu.dot_dimension_numbers<[1], [0], [0], [1], [0, 0, 1, 1], [], []>} : vector<16x128xf32>, vector<128x384xbf16>, vector<16x384xf32> -> vector<16x384xf32>
    %c0_5 = arith.constant 0 : index
    %c0_6 = arith.constant 0 : index
    %c0_7 = arith.constant 0 : index
    %7 = vector.load %arg9[%c0_5, %c0_6, %c0_7] : memref<1x1x384xbf16, #tpu.memory_space<vmem>>, vector<1x1x384xbf16>
    %8 = vector.shape_cast %7 : vector<1x1x384xbf16> to vector<1x384xbf16>
    %9 = arith.extf %8 : vector<1x384xbf16> to vector<1x384xf32>
    %10 = vector.broadcast %9 : vector<1x384xf32> to vector<16x384xf32>
    %11 = arith.addf %6, %10 : vector<16x384xf32>
    %12 = vector.extract_strided_slice %11 {offsets = [0, 0], sizes = [16, 32], strides = [1, 1]} : vector<16x384xf32> to vector<16x32xf32>
    %13 = vector.extract_strided_slice %11 {offsets = [0, 128], sizes = [16, 32], strides = [1, 1]} : vector<16x384xf32> to vector<16x32xf32>
    %14 = vector.extract_strided_slice %11 {offsets = [0, 256], sizes = [16, 32], strides = [1, 1]} : vector<16x384xf32> to vector<16x32xf32>
    %15 = tpu.transpose %13, [1, 0] : vector<16x32xf32> -> vector<32x16xf32>
    %cst_8 = arith.constant dense<0.000000e+00> : vector<16x16xf32>
    %16 = tpu.matmul %12, %15, %cst_8 {dimension_numbers = #tpu.dot_dimension_numbers<[1], [0], [0], [1], [0, 0, 1, 1], [], []>} : vector<16x32xf32>, vector<32x16xf32>, vector<16x16xf32> -> vector<16x16xf32>
    %c0_9 = arith.constant 0 : index
    %c0_10 = arith.constant 0 : index
    %c0_11 = arith.constant 0 : index
    %17 = vector.load %arg3[%c0_9, %c0_10, %c0_11] : memref<4x16x16xf32, #tpu.memory_space<vmem>>, vector<1x16x16xf32>
    %18 = vector.shape_cast %17 : vector<1x16x16xf32> to vector<16x16xf32>
    %19 = arith.addf %16, %18 : vector<16x16xf32>
    %cst_12 = arith.constant dense<0xFF800000> : vector<16xf32>
    %20 = vector.multi_reduction <maximumf>, %19, %cst_12 [1] : vector<16x16xf32> to vector<16xf32>
    %21 = vector.shape_cast %20 : vector<16xf32> to vector<16x1xf32>
    %22 = vector.broadcast %21 : vector<16x1xf32> to vector<16x16xf32>
    %23 = arith.subf %19, %22 : vector<16x16xf32>
    %24 = math.exp %23 : vector<16x16xf32>
    %cst_13 = arith.constant dense<0.000000e+00> : vector<16xf32>
    %25 = vector.multi_reduction <add>, %24, %cst_13 [1] : vector<16x16xf32> to vector<16xf32>
    %26 = vector.shape_cast %25 : vector<16xf32> to vector<16x1xf32>
    %27 = vector.broadcast %26 : vector<16x1xf32> to vector<16x16xf32>
    %28 = arith.divf %24, %27 : vector<16x16xf32>
    %cst_14 = arith.constant dense<0.000000e+00> : vector<16x32xf32>
    %29 = tpu.matmul %28, %14, %cst_14 {dimension_numbers = #tpu.dot_dimension_numbers<[1], [0], [0], [1], [0, 0, 1, 1], [], []>} : vector<16x16xf32>, vector<16x32xf32>, vector<16x32xf32> -> vector<16x32xf32>
    %30 = vector.extract_strided_slice %11 {offsets = [0, 32], sizes = [16, 32], strides = [1, 1]} : vector<16x384xf32> to vector<16x32xf32>
    %31 = vector.extract_strided_slice %11 {offsets = [0, 160], sizes = [16, 32], strides = [1, 1]} : vector<16x384xf32> to vector<16x32xf32>
    %32 = vector.extract_strided_slice %11 {offsets = [0, 288], sizes = [16, 32], strides = [1, 1]} : vector<16x384xf32> to vector<16x32xf32>
    %33 = tpu.transpose %31, [1, 0] : vector<16x32xf32> -> vector<32x16xf32>
    %cst_15 = arith.constant dense<0.000000e+00> : vector<16x16xf32>
    %34 = tpu.matmul %30, %33, %cst_15 {dimension_numbers = #tpu.dot_dimension_numbers<[1], [0], [0], [1], [0, 0, 1, 1], [], []>} : vector<16x32xf32>, vector<32x16xf32>, vector<16x16xf32> -> vector<16x16xf32>
    %c1 = arith.constant 1 : index
    %c0_16 = arith.constant 0 : index
    %c0_17 = arith.constant 0 : index
    %35 = vector.load %arg3[%c1, %c0_16, %c0_17] : memref<4x16x16xf32, #tpu.memory_space<vmem>>, vector<1x16x16xf32>
    %36 = vector.shape_cast %35 : vector<1x16x16xf32> to vector<16x16xf32>
    %37 = arith.addf %34, %36 : vector<16x16xf32>
    %cst_18 = arith.constant dense<0xFF800000> : vector<16xf32>
    %38 = vector.multi_reduction <maximumf>, %37, %cst_18 [1] : vector<16x16xf32> to vector<16xf32>
    %39 = vector.shape_cast %38 : vector<16xf32> to vector<16x1xf32>
    %40 = vector.broadcast %39 : vector<16x1xf32> to vector<16x16xf32>
    %41 = arith.subf %37, %40 : vector<16x16xf32>
    %42 = math.exp %41 : vector<16x16xf32>
    %cst_19 = arith.constant dense<0.000000e+00> : vector<16xf32>
    %43 = vector.multi_reduction <add>, %42, %cst_19 [1] : vector<16x16xf32> to vector<16xf32>
    %44 = vector.shape_cast %43 : vector<16xf32> to vector<16x1xf32>
    %45 = vector.broadcast %44 : vector<16x1xf32> to vector<16x16xf32>
    %46 = arith.divf %42, %45 : vector<16x16xf32>
    %cst_20 = arith.constant dense<0.000000e+00> : vector<16x32xf32>
    %47 = tpu.matmul %46, %32, %cst_20 {dimension_numbers = #tpu.dot_dimension_numbers<[1], [0], [0], [1], [0, 0, 1, 1], [], []>} : vector<16x16xf32>, vector<16x32xf32>, vector<16x32xf32> -> vector<16x32xf32>
    %48 = vector.extract_strided_slice %11 {offsets = [0, 64], sizes = [16, 32], strides = [1, 1]} : vector<16x384xf32> to vector<16x32xf32>
    %49 = vector.extract_strided_slice %11 {offsets = [0, 192], sizes = [16, 32], strides = [1, 1]} : vector<16x384xf32> to vector<16x32xf32>
    %50 = vector.extract_strided_slice %11 {offsets = [0, 320], sizes = [16, 32], strides = [1, 1]} : vector<16x384xf32> to vector<16x32xf32>
    %51 = tpu.transpose %49, [1, 0] : vector<16x32xf32> -> vector<32x16xf32>
    %cst_21 = arith.constant dense<0.000000e+00> : vector<16x16xf32>
    %52 = tpu.matmul %48, %51, %cst_21 {dimension_numbers = #tpu.dot_dimension_numbers<[1], [0], [0], [1], [0, 0, 1, 1], [], []>} : vector<16x32xf32>, vector<32x16xf32>, vector<16x16xf32> -> vector<16x16xf32>
    %c2 = arith.constant 2 : index
    %c0_22 = arith.constant 0 : index
    %c0_23 = arith.constant 0 : index
    %53 = vector.load %arg3[%c2, %c0_22, %c0_23] : memref<4x16x16xf32, #tpu.memory_space<vmem>>, vector<1x16x16xf32>
    %54 = vector.shape_cast %53 : vector<1x16x16xf32> to vector<16x16xf32>
    %55 = arith.addf %52, %54 : vector<16x16xf32>
    %cst_24 = arith.constant dense<0xFF800000> : vector<16xf32>
    %56 = vector.multi_reduction <maximumf>, %55, %cst_24 [1] : vector<16x16xf32> to vector<16xf32>
    %57 = vector.shape_cast %56 : vector<16xf32> to vector<16x1xf32>
    %58 = vector.broadcast %57 : vector<16x1xf32> to vector<16x16xf32>
    %59 = arith.subf %55, %58 : vector<16x16xf32>
    %60 = math.exp %59 : vector<16x16xf32>
    %cst_25 = arith.constant dense<0.000000e+00> : vector<16xf32>
    %61 = vector.multi_reduction <add>, %60, %cst_25 [1] : vector<16x16xf32> to vector<16xf32>
    %62 = vector.shape_cast %61 : vector<16xf32> to vector<16x1xf32>
    %63 = vector.broadcast %62 : vector<16x1xf32> to vector<16x16xf32>
    %64 = arith.divf %60, %63 : vector<16x16xf32>
    %cst_26 = arith.constant dense<0.000000e+00> : vector<16x32xf32>
    %65 = tpu.matmul %64, %50, %cst_26 {dimension_numbers = #tpu.dot_dimension_numbers<[1], [0], [0], [1], [0, 0, 1, 1], [], []>} : vector<16x16xf32>, vector<16x32xf32>, vector<16x32xf32> -> vector<16x32xf32>
    %66 = vector.extract_strided_slice %11 {offsets = [0, 96], sizes = [16, 32], strides = [1, 1]} : vector<16x384xf32> to vector<16x32xf32>
    %67 = vector.extract_strided_slice %11 {offsets = [0, 224], sizes = [16, 32], strides = [1, 1]} : vector<16x384xf32> to vector<16x32xf32>
    %68 = vector.extract_strided_slice %11 {offsets = [0, 352], sizes = [16, 32], strides = [1, 1]} : vector<16x384xf32> to vector<16x32xf32>
    %69 = tpu.transpose %67, [1, 0] : vector<16x32xf32> -> vector<32x16xf32>
    %cst_27 = arith.constant dense<0.000000e+00> : vector<16x16xf32>
    %70 = tpu.matmul %66, %69, %cst_27 {dimension_numbers = #tpu.dot_dimension_numbers<[1], [0], [0], [1], [0, 0, 1, 1], [], []>} : vector<16x32xf32>, vector<32x16xf32>, vector<16x16xf32> -> vector<16x16xf32>
    %c3 = arith.constant 3 : index
    %c0_28 = arith.constant 0 : index
    %c0_29 = arith.constant 0 : index
    %71 = vector.load %arg3[%c3, %c0_28, %c0_29] : memref<4x16x16xf32, #tpu.memory_space<vmem>>, vector<1x16x16xf32>
    %72 = vector.shape_cast %71 : vector<1x16x16xf32> to vector<16x16xf32>
    %73 = arith.addf %70, %72 : vector<16x16xf32>
    %cst_30 = arith.constant dense<0xFF800000> : vector<16xf32>
    %74 = vector.multi_reduction <maximumf>, %73, %cst_30 [1] : vector<16x16xf32> to vector<16xf32>
    %75 = vector.shape_cast %74 : vector<16xf32> to vector<16x1xf32>
    %76 = vector.broadcast %75 : vector<16x1xf32> to vector<16x16xf32>
    %77 = arith.subf %73, %76 : vector<16x16xf32>
    %78 = math.exp %77 : vector<16x16xf32>
    %cst_31 = arith.constant dense<0.000000e+00> : vector<16xf32>
    %79 = vector.multi_reduction <add>, %78, %cst_31 [1] : vector<16x16xf32> to vector<16xf32>
    %80 = vector.shape_cast %79 : vector<16xf32> to vector<16x1xf32>
    %81 = vector.broadcast %80 : vector<16x1xf32> to vector<16x16xf32>
    %82 = arith.divf %78, %81 : vector<16x16xf32>
    %cst_32 = arith.constant dense<0.000000e+00> : vector<16x32xf32>
    %83 = tpu.matmul %82, %68, %cst_32 {dimension_numbers = #tpu.dot_dimension_numbers<[1], [0], [0], [1], [0, 0, 1, 1], [], []>} : vector<16x16xf32>, vector<16x32xf32>, vector<16x32xf32> -> vector<16x32xf32>
    %84 = tpu.concatenate %29, %47, %65, %83 in 1 : vector<16x32xf32>, vector<16x32xf32>, vector<16x32xf32>, vector<16x32xf32> -> vector<16x128xf32>
    %c0_33 = arith.constant 0 : index
    %c0_34 = arith.constant 0 : index
    %c0_35 = arith.constant 0 : index
    %85 = vector.load %arg10[%c0_33, %c0_34, %c0_35] : memref<1x128x128xbf16, #tpu.memory_space<vmem>>, vector<1x128x128xbf16>
    %86 = vector.shape_cast %85 : vector<1x128x128xbf16> to vector<128x128xbf16>
    %cst_36 = arith.constant dense<0.000000e+00> : vector<16x128xf32>
    %87 = tpu.matmul %84, %86, %cst_36 {dimension_numbers = #tpu.dot_dimension_numbers<[1], [0], [0], [1], [0, 0, 1, 1], [], []>} : vector<16x128xf32>, vector<128x128xbf16>, vector<16x128xf32> -> vector<16x128xf32>
    %c0_37 = arith.constant 0 : index
    %c0_38 = arith.constant 0 : index
    %c0_39 = arith.constant 0 : index
    %88 = vector.load %arg11[%c0_37, %c0_38, %c0_39] : memref<1x1x128xbf16, #tpu.memory_space<vmem>>, vector<1x1x128xbf16>
    %89 = vector.shape_cast %88 : vector<1x1x128xbf16> to vector<1x128xbf16>
    %90 = arith.extf %89 : vector<1x128xbf16> to vector<1x128xf32>
    %91 = vector.broadcast %90 : vector<1x128xf32> to vector<16x128xf32>
    %92 = arith.addf %87, %91 : vector<16x128xf32>
    %93 = arith.addf %3, %92 : vector<16x128xf32>
    %c0_40 = arith.constant 0 : index
    %c0_41 = arith.constant 0 : index
    %c0_42 = arith.constant 0 : index
    %94 = vector.load %arg12[%c0_40, %c0_41, %c0_42] : memref<1x1x128xbf16, #tpu.memory_space<vmem>>, vector<1x1x128xbf16>
    %95 = vector.shape_cast %94 : vector<1x1x128xbf16> to vector<1x128xbf16>
    %c0_43 = arith.constant 0 : index
    %c0_44 = arith.constant 0 : index
    %c0_45 = arith.constant 0 : index
    %96 = vector.load %arg13[%c0_43, %c0_44, %c0_45] : memref<1x1x128xbf16, #tpu.memory_space<vmem>>, vector<1x1x128xbf16>
    %97 = vector.shape_cast %96 : vector<1x1x128xbf16> to vector<1x128xbf16>
    %cst_46 = arith.constant dense<0.000000e+00> : vector<16xf32>
    %98 = vector.multi_reduction <add>, %93, %cst_46 [1] : vector<16x128xf32> to vector<16xf32>
    %99 = vector.shape_cast %98 : vector<16xf32> to vector<16x1xf32>
    %cst_47 = arith.constant 1.280000e+02 : f32
    %100 = vector.broadcast %cst_47 : f32 to vector<16x1xf32>
    %101 = arith.divf %99, %100 : vector<16x1xf32>
    %102 = vector.broadcast %101 : vector<16x1xf32> to vector<16x128xf32>
    %103 = arith.subf %93, %102 : vector<16x128xf32>
    %104 = arith.mulf %103, %103 : vector<16x128xf32>
    %cst_48 = arith.constant dense<0.000000e+00> : vector<16xf32>
    %105 = vector.multi_reduction <add>, %104, %cst_48 [1] : vector<16x128xf32> to vector<16xf32>
    %106 = vector.shape_cast %105 : vector<16xf32> to vector<16x1xf32>
    %cst_49 = arith.constant 1.280000e+02 : f32
    %107 = vector.broadcast %cst_49 : f32 to vector<16x1xf32>
    %108 = arith.divf %106, %107 : vector<16x1xf32>
    %109 = vector.broadcast %101 : vector<16x1xf32> to vector<16x128xf32>
    %110 = arith.subf %93, %109 : vector<16x128xf32>
    %cst_50 = arith.constant 9.99999974E-6 : f32
    %111 = vector.broadcast %cst_50 : f32 to vector<16x1xf32>
    %112 = arith.addf %108, %111 : vector<16x1xf32>
    %113 = math.rsqrt %112 : vector<16x1xf32>
    %114 = vector.broadcast %113 : vector<16x1xf32> to vector<16x128xf32>
    %115 = arith.mulf %110, %114 : vector<16x128xf32>
    %116 = arith.extf %95 : vector<1x128xbf16> to vector<1x128xf32>
    %117 = vector.broadcast %116 : vector<1x128xf32> to vector<16x128xf32>
    %118 = arith.mulf %115, %117 : vector<16x128xf32>
    %119 = arith.extf %97 : vector<1x128xbf16> to vector<1x128xf32>
    %120 = vector.broadcast %119 : vector<1x128xf32> to vector<16x128xf32>
    %121 = arith.addf %118, %120 : vector<16x128xf32>
    %c0_51 = arith.constant 0 : index
    %c0_52 = arith.constant 0 : index
    %c0_53 = arith.constant 0 : index
    %122 = vector.load %arg14[%c0_51, %c0_52, %c0_53] : memref<1x128x256xbf16, #tpu.memory_space<vmem>>, vector<1x128x256xbf16>
    %123 = vector.shape_cast %122 : vector<1x128x256xbf16> to vector<128x256xbf16>
    %cst_54 = arith.constant dense<0.000000e+00> : vector<16x256xf32>
    %124 = tpu.matmul %121, %123, %cst_54 {dimension_numbers = #tpu.dot_dimension_numbers<[1], [0], [0], [1], [0, 0, 1, 1], [], []>} : vector<16x128xf32>, vector<128x256xbf16>, vector<16x256xf32> -> vector<16x256xf32>
    %c0_55 = arith.constant 0 : index
    %c0_56 = arith.constant 0 : index
    %c0_57 = arith.constant 0 : index
    %125 = vector.load %arg15[%c0_55, %c0_56, %c0_57] : memref<1x1x256xbf16, #tpu.memory_space<vmem>>, vector<1x1x256xbf16>
    %126 = vector.shape_cast %125 : vector<1x1x256xbf16> to vector<1x256xbf16>
    %127 = arith.extf %126 : vector<1x256xbf16> to vector<1x256xf32>
    %128 = vector.broadcast %127 : vector<1x256xf32> to vector<16x256xf32>
    %129 = arith.addf %124, %128 : vector<16x256xf32>
    %cst_58 = arith.constant 0.000000e+00 : f32
    %130 = vector.broadcast %cst_58 : f32 to vector<16x256xf32>
    %131 = arith.maximumf %129, %130 : vector<16x256xf32>
    %c0_59 = arith.constant 0 : index
    %c0_60 = arith.constant 0 : index
    %c0_61 = arith.constant 0 : index
    %132 = vector.load %arg16[%c0_59, %c0_60, %c0_61] : memref<1x256x128xbf16, #tpu.memory_space<vmem>>, vector<1x256x128xbf16>
    %133 = vector.shape_cast %132 : vector<1x256x128xbf16> to vector<256x128xbf16>
    %cst_62 = arith.constant dense<0.000000e+00> : vector<16x128xf32>
    %134 = tpu.matmul %131, %133, %cst_62 {dimension_numbers = #tpu.dot_dimension_numbers<[1], [0], [0], [1], [0, 0, 1, 1], [], []>} : vector<16x256xf32>, vector<256x128xbf16>, vector<16x128xf32> -> vector<16x128xf32>
    %c0_63 = arith.constant 0 : index
    %c0_64 = arith.constant 0 : index
    %c0_65 = arith.constant 0 : index
    %135 = vector.load %arg17[%c0_63, %c0_64, %c0_65] : memref<1x1x128xbf16, #tpu.memory_space<vmem>>, vector<1x1x128xbf16>
    %136 = vector.shape_cast %135 : vector<1x1x128xbf16> to vector<1x128xbf16>
    %137 = arith.extf %136 : vector<1x128xbf16> to vector<1x128xf32>
    %138 = vector.broadcast %137 : vector<1x128xf32> to vector<16x128xf32>
    %139 = arith.addf %134, %138 : vector<16x128xf32>
    %140 = arith.addf %121, %139 : vector<16x128xf32>
    %c0_66 = arith.constant 0 : index
    %c0_67 = arith.constant 0 : index
    %c0_68 = arith.constant 0 : index
    %141 = vector.load %arg18[%c0_66, %c0_67, %c0_68] : memref<1x1x128xbf16, #tpu.memory_space<vmem>>, vector<1x1x128xbf16>
    %142 = vector.shape_cast %141 : vector<1x1x128xbf16> to vector<1x128xbf16>
    %c0_69 = arith.constant 0 : index
    %c0_70 = arith.constant 0 : index
    %c0_71 = arith.constant 0 : index
    %143 = vector.load %arg19[%c0_69, %c0_70, %c0_71] : memref<1x1x128xbf16, #tpu.memory_space<vmem>>, vector<1x1x128xbf16>
    %144 = vector.shape_cast %143 : vector<1x1x128xbf16> to vector<1x128xbf16>
    %cst_72 = arith.constant dense<0.000000e+00> : vector<16xf32>
    %145 = vector.multi_reduction <add>, %140, %cst_72 [1] : vector<16x128xf32> to vector<16xf32>
    %146 = vector.shape_cast %145 : vector<16xf32> to vector<16x1xf32>
    %cst_73 = arith.constant 1.280000e+02 : f32
    %147 = vector.broadcast %cst_73 : f32 to vector<16x1xf32>
    %148 = arith.divf %146, %147 : vector<16x1xf32>
    %149 = vector.broadcast %148 : vector<16x1xf32> to vector<16x128xf32>
    %150 = arith.subf %140, %149 : vector<16x128xf32>
    %151 = arith.mulf %150, %150 : vector<16x128xf32>
    %cst_74 = arith.constant dense<0.000000e+00> : vector<16xf32>
    %152 = vector.multi_reduction <add>, %151, %cst_74 [1] : vector<16x128xf32> to vector<16xf32>
    %153 = vector.shape_cast %152 : vector<16xf32> to vector<16x1xf32>
    %cst_75 = arith.constant 1.280000e+02 : f32
    %154 = vector.broadcast %cst_75 : f32 to vector<16x1xf32>
    %155 = arith.divf %153, %154 : vector<16x1xf32>
    %156 = vector.broadcast %148 : vector<16x1xf32> to vector<16x128xf32>
    %157 = arith.subf %140, %156 : vector<16x128xf32>
    %cst_76 = arith.constant 9.99999974E-6 : f32
    %158 = vector.broadcast %cst_76 : f32 to vector<16x1xf32>
    %159 = arith.addf %155, %158 : vector<16x1xf32>
    %160 = math.rsqrt %159 : vector<16x1xf32>
    %161 = vector.broadcast %160 : vector<16x1xf32> to vector<16x128xf32>
    %162 = arith.mulf %157, %161 : vector<16x128xf32>
    %163 = arith.extf %142 : vector<1x128xbf16> to vector<1x128xf32>
    %164 = vector.broadcast %163 : vector<1x128xf32> to vector<16x128xf32>
    %165 = arith.mulf %162, %164 : vector<16x128xf32>
    %166 = arith.extf %144 : vector<1x128xbf16> to vector<1x128xf32>
    %167 = vector.broadcast %166 : vector<1x128xf32> to vector<16x128xf32>
    %168 = arith.addf %165, %167 : vector<16x128xf32>
    %c0_77 = arith.constant 0 : index
    %c0_78 = arith.constant 0 : index
    %169 = vector.load %arg25[%c0_77, %c0_78] : memref<16x128xf32, #tpu.memory_space<vmem>>, vector<16x128xf32>
    tpu.vector_store %arg25[%c0_77, %c0_78], %168 {strides = array<i32>} : memref<16x128xf32, #tpu.memory_space<vmem>>, vector<16x128xf32>,
    %c5_i32 = arith.constant 5 : i32
    %170 = arith.cmpi eq, %arg0, %c5_i32 : i32
    %171 = arith.extui %170 : i1 to i32
    %c0_i32_79 = arith.constant 0 : i32
    %172 = arith.cmpi ne, %171, %c0_i32_79 : i32
    scf.if %172 {
      %c0_80 = arith.constant 0 : index
      %c0_81 = arith.constant 0 : index
      %173 = vector.load %arg20[%c0_80, %c0_81] : memref<128x64xbf16, #tpu.memory_space<vmem>>, vector<128x64xbf16>
      %cst_82 = arith.constant dense<0.000000e+00> : vector<16x64xf32>
      %174 = tpu.matmul %168, %173, %cst_82 {dimension_numbers = #tpu.dot_dimension_numbers<[1], [0], [0], [1], [0, 0, 1, 1], [], []>} : vector<16x128xf32>, vector<128x64xbf16>, vector<16x64xf32> -> vector<16x64xf32>
      %c0_83 = arith.constant 0 : index
      %c0_84 = arith.constant 0 : index
      %175 = vector.load %arg21[%c0_83, %c0_84] : memref<1x64xbf16, #tpu.memory_space<vmem>>, vector<1x64xbf16>
      %176 = arith.extf %175 : vector<1x64xbf16> to vector<1x64xf32>
      %177 = vector.broadcast %176 : vector<1x64xf32> to vector<16x64xf32>
      %178 = arith.addf %174, %177 : vector<16x64xf32>
      %cst_85 = arith.constant 0.000000e+00 : f32
      %179 = vector.broadcast %cst_85 : f32 to vector<16x64xf32>
      %180 = arith.cmpf oge, %178, %179 : vector<16x64xf32>
      %cst_86 = arith.constant 1.000000e-01 : f32
      %181 = vector.broadcast %cst_86 : f32 to vector<16x64xf32>
      %182 = arith.mulf %181, %178 : vector<16x64xf32>
      %183 = arith.select %180, %178, %182 : vector<16x64xi1>, vector<16x64xf32>
      %c0_87 = arith.constant 0 : index
      %c0_88 = arith.constant 0 : index
      %184 = vector.load %arg22[%c0_87, %c0_88] : memref<64x1xbf16, #tpu.memory_space<vmem>>, vector<64x1xbf16>
      %cst_89 = arith.constant dense<0.000000e+00> : vector<16x1xf32>
      %185 = tpu.matmul %183, %184, %cst_89 {dimension_numbers = #tpu.dot_dimension_numbers<[1], [0], [0], [1], [0, 0, 1, 1], [], []>} : vector<16x64xf32>, vector<64x1xbf16>, vector<16x1xf32> -> vector<16x1xf32>
      %c0_90 = arith.constant 0 : index
      %c0_91 = arith.constant 0 : index
      %186 = vector.load %arg23[%c0_90, %c0_91] : memref<1x1xbf16, #tpu.memory_space<vmem>>, vector<1x1xbf16>
      %187 = arith.extf %186 : vector<1x1xbf16> to vector<1x1xf32>
      %188 = vector.broadcast %187 : vector<1x1xf32> to vector<16x1xf32>
      %189 = arith.addf %185, %188 : vector<16x1xf32>
      %c0_92 = arith.constant 0 : index
      %c0_93 = arith.constant 0 : index
      %190 = vector.load %arg24[%c0_92, %c0_93] : memref<16x1xf32, #tpu.memory_space<vmem>>, vector<16x1xf32>
      tpu.vector_store %arg24[%c0_92, %c0_93], %189 {strides = array<i32>} : memref<16x1xf32, #tpu.memory_space<vmem>>, vector<16x1xf32>,
    } else {
    }
    return
  }
  func.func @transform_0(%arg0: i32) -> (i32, i32) {
    %c0_i32 = arith.constant 0 : i32
    %c0_i32_0 = arith.constant 0 : i32
    %c0_i32_1 = arith.constant 0 : i32
    return %c0_i32, %c0_i32_0 : i32, i32
  }
  func.func @transform_1(%arg0: i32) -> (i32, i32) {
    %c0_i32 = arith.constant 0 : i32
    %c0_i32_0 = arith.constant 0 : i32
    %c0_i32_1 = arith.constant 0 : i32
    return %c0_i32, %c0_i32_0 : i32, i32
  }
  func.func @transform_2(%arg0: i32) -> (i32, i32, i32) {
    %c0_i32 = arith.constant 0 : i32
    %c0_i32_0 = arith.constant 0 : i32
    %c0_i32_1 = arith.constant 0 : i32
    %c0_i32_2 = arith.constant 0 : i32
    return %c0_i32, %c0_i32_0, %c0_i32_1 : i32, i32, i32
  }
  func.func @transform_3(%arg0: i32) -> (i32, i32) {
    %c0_i32 = arith.constant 0 : i32
    %c0_i32_0 = arith.constant 0 : i32
    %c0_i32_1 = arith.constant 0 : i32
    return %c0_i32, %c0_i32_0 : i32, i32
  }
  func.func @transform_4(%arg0: i32) -> (i32, i32) {
    %c0_i32 = arith.constant 0 : i32
    %c0_i32_0 = arith.constant 0 : i32
    %c0_i32_1 = arith.constant 0 : i32
    return %c0_i32, %c0_i32_0 : i32, i32
  }
  func.func @transform_5(%arg0: i32) -> (i32, i32) {
    %c0_i32 = arith.constant 0 : i32
    %c0_i32_0 = arith.constant 0 : i32
    %c0_i32_1 = arith.constant 0 : i32
    return %c0_i32, %c0_i32_0 : i32, i32
  }
  func.func @transform_6(%arg0: i32) -> (i32, i32) {
    %c0_i32 = arith.constant 0 : i32
    %c0_i32_0 = arith.constant 0 : i32
    %c0_i32_1 = arith.constant 0 : i32
    return %c0_i32, %c0_i32_0 : i32, i32
  }
  func.func @transform_7(%arg0: i32) -> (i32, i32, i32) {
    %c0_i32 = arith.constant 0 : i32
    %c0_i32_0 = arith.constant 0 : i32
    %c0_i32_1 = arith.constant 0 : i32
    return %arg0, %c0_i32, %c0_i32_0 : i32, i32, i32
  }
  func.func @transform_8(%arg0: i32) -> (i32, i32, i32) {
    %c0_i32 = arith.constant 0 : i32
    %c0_i32_0 = arith.constant 0 : i32
    %c0_i32_1 = arith.constant 0 : i32
    return %arg0, %c0_i32, %c0_i32_0 : i32, i32, i32
  }
  func.func @transform_9(%arg0: i32) -> (i32, i32, i32) {
    %c0_i32 = arith.constant 0 : i32
    %c0_i32_0 = arith.constant 0 : i32
    %c0_i32_1 = arith.constant 0 : i32
    return %arg0, %c0_i32, %c0_i32_0 : i32, i32, i32
  }
  func.func @transform_10(%arg0: i32) -> (i32, i32, i32) {
    %c0_i32 = arith.constant 0 : i32
    %c0_i32_0 = arith.constant 0 : i32
    %c0_i32_1 = arith.constant 0 : i32
    return %arg0, %c0_i32, %c0_i32_0 : i32, i32, i32
  }
  func.func @transform_11(%arg0: i32) -> (i32, i32, i32) {
    %c0_i32 = arith.constant 0 : i32
    %c0_i32_0 = arith.constant 0 : i32
    %c0_i32_1 = arith.constant 0 : i32
    return %arg0, %c0_i32, %c0_i32_0 : i32, i32, i32
  }
  func.func @transform_12(%arg0: i32) -> (i32, i32, i32) {
    %c0_i32 = arith.constant 0 : i32
    %c0_i32_0 = arith.constant 0 : i32
    %c0_i32_1 = arith.constant 0 : i32
    return %arg0, %c0_i32, %c0_i32_0 : i32, i32, i32
  }
  func.func @transform_13(%arg0: i32) -> (i32, i32, i32) {
    %c0_i32 = arith.constant 0 : i32
    %c0_i32_0 = arith.constant 0 : i32
    %c0_i32_1 = arith.constant 0 : i32
    return %arg0, %c0_i32, %c0_i32_0 : i32, i32, i32
  }
  func.func @transform_14(%arg0: i32) -> (i32, i32, i32) {
    %c0_i32 = arith.constant 0 : i32
    %c0_i32_0 = arith.constant 0 : i32
    %c0_i32_1 = arith.constant 0 : i32
    return %arg0, %c0_i32, %c0_i32_0 : i32, i32, i32
  }
  func.func @transform_15(%arg0: i32) -> (i32, i32, i32) {
    %c0_i32 = arith.constant 0 : i32
    %c0_i32_0 = arith.constant 0 : i32
    %c0_i32_1 = arith.constant 0 : i32
    return %arg0, %c0_i32, %c0_i32_0 : i32, i32, i32
  }
  func.func @transform_16(%arg0: i32) -> (i32, i32, i32) {
    %c0_i32 = arith.constant 0 : i32
    %c0_i32_0 = arith.constant 0 : i32
    %c0_i32_1 = arith.constant 0 : i32
    return %arg0, %c0_i32, %c0_i32_0 : i32, i32, i32
  }
  func.func @transform_17(%arg0: i32) -> (i32, i32, i32) {
    %c0_i32 = arith.constant 0 : i32
    %c0_i32_0 = arith.constant 0 : i32
    %c0_i32_1 = arith.constant 0 : i32
    return %arg0, %c0_i32, %c0_i32_0 : i32, i32, i32
  }
  func.func @transform_18(%arg0: i32) -> (i32, i32, i32) {
    %c0_i32 = arith.constant 0 : i32
    %c0_i32_0 = arith.constant 0 : i32
    %c0_i32_1 = arith.constant 0 : i32
    return %arg0, %c0_i32, %c0_i32_0 : i32, i32, i32
  }
  func.func @transform_19(%arg0: i32) -> (i32, i32) {
    %c0_i32 = arith.constant 0 : i32
    %c0_i32_0 = arith.constant 0 : i32
    %c0_i32_1 = arith.constant 0 : i32
    return %c0_i32, %c0_i32_0 : i32, i32
  }
  func.func @transform_20(%arg0: i32) -> (i32, i32) {
    %c0_i32 = arith.constant 0 : i32
    %c0_i32_0 = arith.constant 0 : i32
    %c0_i32_1 = arith.constant 0 : i32
    return %c0_i32, %c0_i32_0 : i32, i32
  }
  func.func @transform_21(%arg0: i32) -> (i32, i32) {
    %c0_i32 = arith.constant 0 : i32
    %c0_i32_0 = arith.constant 0 : i32
    %c0_i32_1 = arith.constant 0 : i32
    return %c0_i32, %c0_i32_0 : i32, i32
  }
  func.func @transform_22(%arg0: i32) -> (i32, i32) {
    %c0_i32 = arith.constant 0 : i32
    %c0_i32_0 = arith.constant 0 : i32
    %c0_i32_1 = arith.constant 0 : i32
    return %c0_i32, %c0_i32_0 : i32, i32
  }
  func.func @transform_23(%arg0: i32) -> (i32, i32) {
    %c0_i32 = arith.constant 0 : i32
    %c0_i32_0 = arith.constant 0 : i32
    %c0_i32_1 = arith.constant 0 : i32
    return %c0_i32, %c0_i32_0 : i32, i32
  }
}

</mosaic_0001>

<llo_original>
// kernel: tpu_custom_call.1
$region0: #{tpu_custom_call.1}
  #allocation0 [shape = 'u32[]', space=smem, size = 0x4, offset = 0x4, fixed_abs, tag = 'smem constant byte address 0x4 - core index']
  #allocation1 [shape = 'u32[144,128]{1,0:T(1,128)}', space=vmem, size = 0x12000, scoped, tag = 'internal scratch']
  #allocation2 [shape = 'f32[16,128]{1,0:T(8,128)}', space=vmem, size = 0x2000, scoped, tag = 'scratch operand']
  #allocation3 [shape = 'bf16[1,1]{1,0:T(2,128)S(1)}', space=vmem, size = 0x200, scoped, tag = 'scoped memory for tpu_custom_call.1']
  %s0 = inlined_call_operand.vmem [shape: f32[16,16], index: 0, kind: input, shape index: {}]
  %s1 = inlined_call_operand.vmem [shape: f32[16,128], index: 1, kind: input, shape index: {}]
  %s2 = inlined_call_operand.vmem [shape: f32[4,16,16], index: 2, kind: input, shape index: {}]
  %s3 = inlined_call_operand.vmem [shape: bf16[16,64], index: 3, kind: input, shape index: {}]
  %s4 = inlined_call_operand.vmem [shape: bf16[1,64], index: 4, kind: input, shape index: {}]
  %s5 = inlined_call_operand.vmem [shape: bf16[64,128], index: 5, kind: input, shape index: {}]
  %s6 = inlined_call_operand.vmem [shape: bf16[1,128], index: 6, kind: input, shape index: {}]
  %s7 = inlined_call_operand.hbm [shape: bf16[6,128,384], index: 7, kind: input, shape index: {}]
  %s8 = inlined_call_operand.vmem [shape: bf16[6,1,384], index: 8, kind: input, shape index: {}]
  %s9 = inlined_call_operand.hbm [shape: bf16[6,128,128], index: 9, kind: input, shape index: {}]
  %s10 = inlined_call_operand.vmem [shape: bf16[6,1,128], index: 10, kind: input, shape index: {}]
  %s11 = inlined_call_operand.vmem [shape: bf16[6,1,128], index: 11, kind: input, shape index: {}]
  %s12 = inlined_call_operand.vmem [shape: bf16[6,1,128], index: 12, kind: input, shape index: {}]
  %s13 = inlined_call_operand.hbm [shape: bf16[6,128,256], index: 13, kind: input, shape index: {}]
  %s14 = inlined_call_operand.vmem [shape: bf16[6,1,256], index: 14, kind: input, shape index: {}]
  %s15 = inlined_call_operand.hbm [shape: bf16[6,256,128], index: 15, kind: input, shape index: {}]
  %s16 = inlined_call_operand.vmem [shape: bf16[6,1,128], index: 16, kind: input, shape index: {}]
  %s17 = inlined_call_operand.vmem [shape: bf16[6,1,128], index: 17, kind: input, shape index: {}]
  %s18 = inlined_call_operand.vmem [shape: bf16[6,1,128], index: 18, kind: input, shape index: {}]
  %s19 = inlined_call_operand.vmem [shape: bf16[128,64], index: 19, kind: input, shape index: {}]
  %s20 = inlined_call_operand.vmem [shape: bf16[1,64], index: 20, kind: input, shape index: {}]
  %s21 = inlined_call_operand.vmem [shape: bf16[64,1], index: 21, kind: input, shape index: {}]
  %s22 = inlined_call_operand.<no memory space> [shape: bf16[1,1], index: 22, kind: input, shape index: {}]
  %s23 = inlined_call_operand.vmem [shape: f32[16,1], index: 23, kind: output, shape index: {}]
  %s24 = sld [smem:[#allocation0]]
  $region149: #{tpu_custom_call.1} parent=0
    _
  %s26 = ssub.s32 1, %s24
  %s27 = scalar_select 0, %s26, %s24
  %v28 = vstv %s22
  %29 = vst [vmem:[#allocation3] sm:$0x1] %v28
  $region1: #{tpu_custom_call.1} parent=0
    #allocation4 [shape = 'u8[196608]{0}', space=vmem, size = 0x30000, scoped, tag = 'input window, operand 7']
    #allocation5 [shape = 's32[2]{0}', space=sflag, size = 0x8, scoped, tag = 'scoped memory for tpu_custom_call.1']
    #allocation6 [shape = 'u8[65536]{0}', space=vmem, size = 0x10000, scoped, tag = 'input window, operand 9']
    #allocation7 [shape = 's32[2]{0}', space=sflag, size = 0x8, scoped, tag = 'scoped memory for tpu_custom_call.1']
    #allocation8 [shape = 'u8[131072]{0}', space=vmem, size = 0x20000, scoped, tag = 'input window, operand 13']
    #allocation9 [shape = 'u8[131072]{0}', space=vmem, size = 0x20000, scoped, tag = 'input window, operand 15']
    #allocation10 [shape = 's32[2]{0}', space=sflag, size = 0x8, scoped, tag = 'scoped memory for tpu_custom_call.1']
    %30 = vsyncpa [#allocation5], 0
    %s31 = scalar_lea.sflag [#allocation5], 1
    %32 = vsyncpa %s31, 0
    %33 = vsyncpa [#allocation7], 0
    %s34 = scalar_lea.sflag [#allocation7], 1
    %35 = vsyncpa %s34, 0
    %36 = vsyncpa [#allocation10], 0
    %s37 = scalar_lea.sflag [#allocation10], 1
    %38 = vsyncpa %s37, 0
    loop: start=0, step=1, limit=8
    $region2: #{tpu_custom_call.1} parent=1 // loop_pre_header
      _
    $region3: #{tpu_custom_call.1} parent=1 // loop_header
      %s40 = sphi 0, %s44
      %p41 = scmp.ge.s32.totalorder %s40, 8
      %s48 = sphi 0, %s48
      %s50 = sphi 0, %s48
      %s51 = sphi 0, %s50
      %s65 = sphi 0, %s51
      %s69 = sphi 0, %s69
      %s71 = sphi 0, %s69
      %s72 = sphi 0, %s71
      %s86 = sphi 0, %s72
      %s90 = sphi 0, %s90
      %s92 = sphi 0, %s90
      %s93 = sphi 0, %s92
      %s107 = sphi 0, %s93
      %s111 = sphi 0, %s111
      %s113 = sphi 0, %s111
      %s114 = sphi 0, %s113
      %s128 = sphi 0, %s114
      %s132 = sphi 0, %s132
      %s134 = sphi 0, %s132
      %s135 = sphi 0, %s134
      %s149 = sphi 0, %s135
      %s153 = sphi 0, %s153
      %s155 = sphi 0, %s153
      %s156 = sphi 0, %s155
      %s170 = sphi 0, %s156
      %s174 = sphi 0, %s174
      %s176 = sphi 0, %s174
      %s177 = sphi 0, %s176
      %s191 = sphi 0, %s177
      %s197 = sphi 0, %s199
      %s200 = sphi 0, %s197
      %s201 = sphi 0, %s200
      %s217 = sphi 0, %s201
      %s223 = sphi 0, %s225
      %s226 = sphi 0, %s223
      %s227 = sphi 0, %s226
      %s243 = sphi 0, %s227
      %s249 = sphi 0, %s251
      %s252 = sphi 0, %s249
      %s253 = sphi 0, %s252
      %s269 = sphi 0, %s253
      %s275 = sphi 0, %s277
      %s278 = sphi 0, %s275
      %s279 = sphi 0, %s278
      %s295 = sphi 0, %s279
      %s301 = sphi 0, %s303
      %s304 = sphi 0, %s301
      %s305 = sphi 0, %s304
      %s321 = sphi 0, %s305
      %s327 = sphi 0, %s329
      %s330 = sphi 0, %s327
      %s331 = sphi 0, %s330
      %s347 = sphi 0, %s331
      %s353 = sphi 0, %s355
      %s356 = sphi 0, %s353
      %s357 = sphi 0, %s356
      %s373 = sphi 0, %s357
      %s379 = sphi 0, %s381
      %s382 = sphi 0, %s379
      %s383 = sphi 0, %s382
      %s399 = sphi 0, %s383
      %s405 = sphi 0, %s407
      %s408 = sphi 0, %s405
      %s409 = sphi 0, %s408
      %s425 = sphi 0, %s409
      %s431 = sphi 0, %s433
      %s434 = sphi 0, %s431
      %s435 = sphi 0, %s434
      %s451 = sphi 0, %s435
      %s457 = sphi 0, %s459
      %s460 = sphi 0, %s457
      %s461 = sphi 0, %s460
      %s477 = sphi 0, %s461
      %s483 = sphi 0, %s485
      %s486 = sphi 0, %s483
      %s487 = sphi 0, %s486
      %s503 = sphi 0, %s487
      %s507 = sphi 0, %s507
      %s509 = sphi 0, %s507
      %s510 = sphi 0, %s509
      %s524 = sphi 0, %s510
      %s528 = sphi 0, %s528
      %s530 = sphi 0, %s528
      %s531 = sphi 0, %s530
      %s545 = sphi 0, %s531
      %s549 = sphi 0, %s549
      %s551 = sphi 0, %s549
      %s552 = sphi 0, %s551
      %s566 = sphi 0, %s552
      %s570 = sphi 0, %s570
      %s572 = sphi 0, %s570
      %s573 = sphi 0, %s572
      %s587 = sphi 0, %s573
      %s591 = sphi 0, %s591
      %s593 = sphi 0, %s591
      %s594 = sphi 0, %s593
      %s608 = sphi 0, %s594
    $region4: #{tpu_custom_call.1} parent=1 // loop_header_branch
      %43 = sbr.rel (%p41) target = $region8
    $region5: #{tpu_custom_call.1} parent=1 // loop_body
      %s45 = ssub.s32 %s40, 1
      %s46 = ssub.s32 %s40, 2
      %s47 = sadd.s32 %s40, 1
      %s49 = sadd.s32 %s48, 1
      %p52 = scmp.eq.s32.totalorder %s40, 5
      %p53 = scmp.ne.s32.totalorder %s48, %s50
      %p54 = scmp.eq.s32.totalorder %s40, 0
      %p55 = por %p53, %p54
      %p56 = scmp.ne.s32.totalorder %s48, %s50
      %p57 = scmp.eq.s32.totalorder %s45, 5
      %p58 = por %p56, %p57
      %p59 = scmp.ne.s32.totalorder %s50, %s51
      %p60 = scmp.eq.s32.totalorder %s45, 0
      %p61 = por %p59, %p60
      %p62 = scmp.ne.s32.totalorder %s50, %s51
      %p63 = scmp.eq.s32.totalorder %s46, 5
      %p64 = por %p62, %p63
      %p66 = scmp.ne.s32.totalorder %s51, %s65
      %p67 = scmp.eq.s32.totalorder %s46, 0
      %p68 = por %p66, %p67
      %s70 = sadd.s32 %s69, 1
      %p73 = scmp.eq.s32.totalorder %s40, 5
      %p74 = scmp.ne.s32.totalorder %s69, %s71
      %p75 = scmp.eq.s32.totalorder %s40, 0
      %p76 = por %p74, %p75
      %p77 = scmp.ne.s32.totalorder %s69, %s71
      %p78 = scmp.eq.s32.totalorder %s45, 5
      %p79 = por %p77, %p78
      %p80 = scmp.ne.s32.totalorder %s71, %s72
      %p81 = scmp.eq.s32.totalorder %s45, 0
      %p82 = por %p80, %p81
      %p83 = scmp.ne.s32.totalorder %s71, %s72
      %p84 = scmp.eq.s32.totalorder %s46, 5
      %p85 = por %p83, %p84
      %p87 = scmp.ne.s32.totalorder %s72, %s86
      %p88 = scmp.eq.s32.totalorder %s46, 0
      %p89 = por %p87, %p88
      %s91 = sadd.s32 %s90, 1
      %p94 = scmp.eq.s32.totalorder %s40, 5
      %p95 = scmp.ne.s32.totalorder %s90, %s92
      %p96 = scmp.eq.s32.totalorder %s40, 0
      %p97 = por %p95, %p96
      %p98 = scmp.ne.s32.totalorder %s90, %s92
      %p99 = scmp.eq.s32.totalorder %s45, 5
      %p100 = por %p98, %p99
      %p101 = scmp.ne.s32.totalorder %s92, %s93
      %p102 = scmp.eq.s32.totalorder %s45, 0
      %p103 = por %p101, %p102
      %p104 = scmp.ne.s32.totalorder %s92, %s93
      %p105 = scmp.eq.s32.totalorder %s46, 5
      %p106 = por %p104, %p105
      %p108 = scmp.ne.s32.totalorder %s93, %s107
      %p109 = scmp.eq.s32.totalorder %s46, 0
      %p110 = por %p108, %p109
      %s112 = sadd.s32 %s111, 1
      %p115 = scmp.eq.s32.totalorder %s40, 5
      %p116 = scmp.ne.s32.totalorder %s111, %s113
      %p117 = scmp.eq.s32.totalorder %s40, 0
      %p118 = por %p116, %p117
      %p119 = scmp.ne.s32.totalorder %s111, %s113
      %p120 = scmp.eq.s32.totalorder %s45, 5
      %p121 = por %p119, %p120
      %p122 = scmp.ne.s32.totalorder %s113, %s114
      %p123 = scmp.eq.s32.totalorder %s45, 0
      %p124 = por %p122, %p123
      %p125 = scmp.ne.s32.totalorder %s113, %s114
      %p126 = scmp.eq.s32.totalorder %s46, 5
      %p127 = por %p125, %p126
      %p129 = scmp.ne.s32.totalorder %s114, %s128
      %p130 = scmp.eq.s32.totalorder %s46, 0
      %p131 = por %p129, %p130
      %s133 = sadd.s32 %s132, 1
      %p136 = scmp.eq.s32.totalorder %s40, 5
      %p137 = scmp.ne.s32.totalorder %s132, %s134
      %p138 = scmp.eq.s32.totalorder %s40, 0
      %p139 = por %p137, %p138
      %p140 = scmp.ne.s32.totalorder %s132, %s134
      %p141 = scmp.eq.s32.totalorder %s45, 5
      %p142 = por %p140, %p141
      %p143 = scmp.ne.s32.totalorder %s134, %s135
      %p144 = scmp.eq.s32.totalorder %s45, 0
      %p145 = por %p143, %p144
      %p146 = scmp.ne.s32.totalorder %s134, %s135
      %p147 = scmp.eq.s32.totalorder %s46, 5
      %p148 = por %p146, %p147
      %p150 = scmp.ne.s32.totalorder %s135, %s149
      %p151 = scmp.eq.s32.totalorder %s46, 0
      %p152 = por %p150, %p151
      %s154 = sadd.s32 %s153, 1
      %p157 = scmp.eq.s32.totalorder %s40, 5
      %p158 = scmp.ne.s32.totalorder %s153, %s155
      %p159 = scmp.eq.s32.totalorder %s40, 0
      %p160 = por %p158, %p159
      %p161 = scmp.ne.s32.totalorder %s153, %s155
      %p162 = scmp.eq.s32.totalorder %s45, 5
      %p163 = por %p161, %p162
      %p164 = scmp.ne.s32.totalorder %s155, %s156
      %p165 = scmp.eq.s32.totalorder %s45, 0
      %p166 = por %p164, %p165
      %p167 = scmp.ne.s32.totalorder %s155, %s156
      %p168 = scmp.eq.s32.totalorder %s46, 5
      %p169 = por %p167, %p168
      %p171 = scmp.ne.s32.totalorder %s156, %s170
      %p172 = scmp.eq.s32.totalorder %s46, 0
      %p173 = por %p171, %p172
      %s175 = sadd.s32 %s174, 1
      %p178 = scmp.eq.s32.totalorder %s40, 5
      %p179 = scmp.ne.s32.totalorder %s174, %s176
      %p180 = scmp.eq.s32.totalorder %s40, 0
      %p181 = por %p179, %p180
      %p182 = scmp.ne.s32.totalorder %s174, %s176
      %p183 = scmp.eq.s32.totalorder %s45, 5
      %p184 = por %p182, %p183
      %p185 = scmp.ne.s32.totalorder %s176, %s177
      %p186 = scmp.eq.s32.totalorder %s45, 0
      %p187 = por %p185, %p186
      %p188 = scmp.ne.s32.totalorder %s176, %s177
      %p189 = scmp.eq.s32.totalorder %s46, 5
      %p190 = por %p188, %p189
      %p192 = scmp.ne.s32.totalorder %s177, %s191
      %p193 = scmp.eq.s32.totalorder %s46, 0
      %p194 = por %p192, %p193
      %s195 = ssub.s32 %s40, %s47
      %p196 = scmp.eq.s32.totalorder %s195, 0
      %s198 = sadd.s32 %s197, 1
      %s199 = scalar_select %p196, %s197, %s198
      %p202 = pneg %p196
      %p203 = scmp.eq.s32.totalorder %s40, 5
      %p204 = por %p202, %p203
      %p205 = scmp.ne.s32.totalorder %s197, %s200
      %p206 = scmp.eq.s32.totalorder %s40, 0
      %p207 = por %p205, %p206
      %p208 = scmp.ne.s32.totalorder %s197, %s200
      %p209 = scmp.eq.s32.totalorder %s45, 5
      %p210 = por %p208, %p209
      %p211 = scmp.ne.s32.totalorder %s200, %s201
      %p212 = scmp.eq.s32.totalorder %s45, 0
      %p213 = por %p211, %p212
      %p214 = scmp.ne.s32.totalorder %s200, %s201
      %p215 = scmp.eq.s32.totalorder %s46, 5
      %p216 = por %p214, %p215
      %p218 = scmp.ne.s32.totalorder %s201, %s217
      %p219 = scmp.eq.s32.totalorder %s46, 0
      %p220 = por %p218, %p219
      %s221 = ssub.s32 %s40, %s47
      %p222 = scmp.eq.s32.totalorder %s221, 0
      %s224 = sadd.s32 %s223, 1
      %s225 = scalar_select %p222, %s223, %s224
      %p228 = pneg %p222
      %p229 = scmp.eq.s32.totalorder %s40, 5
      %p230 = por %p228, %p229
      %p231 = scmp.ne.s32.totalorder %s223, %s226
      %p232 = scmp.eq.s32.totalorder %s40, 0
      %p233 = por %p231, %p232
      %p234 = scmp.ne.s32.totalorder %s223, %s226
      %p235 = scmp.eq.s32.totalorder %s45, 5
      %p236 = por %p234, %p235
      %p237 = scmp.ne.s32.totalorder %s226, %s227
      %p238 = scmp.eq.s32.totalorder %s45, 0
      %p239 = por %p237, %p238
      %p240 = scmp.ne.s32.totalorder %s226, %s227
      %p241 = scmp.eq.s32.totalorder %s46, 5
      %p242 = por %p240, %p241
      %p244 = scmp.ne.s32.totalorder %s227, %s243
      %p245 = scmp.eq.s32.totalorder %s46, 0
      %p246 = por %p244, %p245
      %s247 = ssub.s32 %s40, %s47
      %p248 = scmp.eq.s32.totalorder %s247, 0
      %s250 = sadd.s32 %s249, 1
      %s251 = scalar_select %p248, %s249, %s250
      %p254 = pneg %p248
      %p255 = scmp.eq.s32.totalorder %s40, 5
      %p256 = por %p254, %p255
      %p257 = scmp.ne.s32.totalorder %s249, %s252
      %p258 = scmp.eq.s32.totalorder %s40, 0
      %p259 = por %p257, %p258
      %p260 = scmp.ne.s32.totalorder %s249, %s252
      %p261 = scmp.eq.s32.totalorder %s45, 5
      %p262 = por %p260, %p261
      %p263 = scmp.ne.s32.totalorder %s252, %s253
      %p264 = scmp.eq.s32.totalorder %s45, 0
      %p265 = por %p263, %p264
      %p266 = scmp.ne.s32.totalorder %s252, %s253
      %p267 = scmp.eq.s32.totalorder %s46, 5
      %p268 = por %p266, %p267
      %p270 = scmp.ne.s32.totalorder %s253, %s269
      %p271 = scmp.eq.s32.totalorder %s46, 0
      %p272 = por %p270, %p271
      %s273 = ssub.s32 %s40, %s47
      %p274 = scmp.eq.s32.totalorder %s273, 0
      %s276 = sadd.s32 %s275, 1
      %s277 = scalar_select %p274, %s275, %s276
      %p280 = pneg %p274
      %p281 = scmp.eq.s32.totalorder %s40, 5
      %p282 = por %p280, %p281
      %p283 = scmp.ne.s32.totalorder %s275, %s278
      %p284 = scmp.eq.s32.totalorder %s40, 0
      %p285 = por %p283, %p284
      %p286 = scmp.ne.s32.totalorder %s275, %s278
      %p287 = scmp.eq.s32.totalorder %s45, 5
      %p288 = por %p286, %p287
      %p289 = scmp.ne.s32.totalorder %s278, %s279
      %p290 = scmp.eq.s32.totalorder %s45, 0
      %p291 = por %p289, %p290
      %p292 = scmp.ne.s32.totalorder %s278, %s279
      %p293 = scmp.eq.s32.totalorder %s46, 5
      %p294 = por %p292, %p293
      %p296 = scmp.ne.s32.totalorder %s279, %s295
      %p297 = scmp.eq.s32.totalorder %s46, 0
      %p298 = por %p296, %p297
      %s299 = ssub.s32 %s40, %s47
      %p300 = scmp.eq.s32.totalorder %s299, 0
      %s302 = sadd.s32 %s301, 1
      %s303 = scalar_select %p300, %s301, %s302
      %p306 = pneg %p300
      %p307 = scmp.eq.s32.totalorder %s40, 5
      %p308 = por %p306, %p307
      %p309 = scmp.ne.s32.totalorder %s301, %s304
      %p310 = scmp.eq.s32.totalorder %s40, 0
      %p311 = por %p309, %p310
      %p312 = scmp.ne.s32.totalorder %s301, %s304
      %p313 = scmp.eq.s32.totalorder %s45, 5
      %p314 = por %p312, %p313
      %p315 = scmp.ne.s32.totalorder %s304, %s305
      %p316 = scmp.eq.s32.totalorder %s45, 0
      %p317 = por %p315, %p316
      %p318 = scmp.ne.s32.totalorder %s304, %s305
      %p319 = scmp.eq.s32.totalorder %s46, 5
      %p320 = por %p318, %p319
      %p322 = scmp.ne.s32.totalorder %s305, %s321
      %p323 = scmp.eq.s32.totalorder %s46, 0
      %p324 = por %p322, %p323
      %s325 = ssub.s32 %s40, %s47
      %p326 = scmp.eq.s32.totalorder %s325, 0
      %s328 = sadd.s32 %s327, 1
      %s329 = scalar_select %p326, %s327, %s328
      %p332 = pneg %p326
      %p333 = scmp.eq.s32.totalorder %s40, 5
      %p334 = por %p332, %p333
      %p335 = scmp.ne.s32.totalorder %s327, %s330
      %p336 = scmp.eq.s32.totalorder %s40, 0
      %p337 = por %p335, %p336
      %p338 = scmp.ne.s32.totalorder %s327, %s330
      %p339 = scmp.eq.s32.totalorder %s45, 5
      %p340 = por %p338, %p339
      %p341 = scmp.ne.s32.totalorder %s330, %s331
      %p342 = scmp.eq.s32.totalorder %s45, 0
      %p343 = por %p341, %p342
      %p344 = scmp.ne.s32.totalorder %s330, %s331
      %p345 = scmp.eq.s32.totalorder %s46, 5
      %p346 = por %p344, %p345
      %p348 = scmp.ne.s32.totalorder %s331, %s347
      %p349 = scmp.eq.s32.totalorder %s46, 0
      %p350 = por %p348, %p349
      %s351 = ssub.s32 %s40, %s47
      %p352 = scmp.eq.s32.totalorder %s351, 0
      %s354 = sadd.s32 %s353, 1
      %s355 = scalar_select %p352, %s353, %s354
      %p358 = pneg %p352
      %p359 = scmp.eq.s32.totalorder %s40, 5
      %p360 = por %p358, %p359
      %p361 = scmp.ne.s32.totalorder %s353, %s356
      %p362 = scmp.eq.s32.totalorder %s40, 0
      %p363 = por %p361, %p362
      %p364 = scmp.ne.s32.totalorder %s353, %s356
      %p365 = scmp.eq.s32.totalorder %s45, 5
      %p366 = por %p364, %p365
      %p367 = scmp.ne.s32.totalorder %s356, %s357
      %p368 = scmp.eq.s32.totalorder %s45, 0
      %p369 = por %p367, %p368
      %p370 = scmp.ne.s32.totalorder %s356, %s357
      %p371 = scmp.eq.s32.totalorder %s46, 5
      %p372 = por %p370, %p371
      %p374 = scmp.ne.s32.totalorder %s357, %s373
      %p375 = scmp.eq.s32.totalorder %s46, 0
      %p376 = por %p374, %p375
      %s377 = ssub.s32 %s40, %s47
      %p378 = scmp.eq.s32.totalorder %s377, 0
      %s380 = sadd.s32 %s379, 1
      %s381 = scalar_select %p378, %s379, %s380
      %p384 = pneg %p378
      %p385 = scmp.eq.s32.totalorder %s40, 5
      %p386 = por %p384, %p385
      %p387 = scmp.ne.s32.totalorder %s379, %s382
      %p388 = scmp.eq.s32.totalorder %s40, 0
      %p389 = por %p387, %p388
      %p390 = scmp.ne.s32.totalorder %s379, %s382
      %p391 = scmp.eq.s32.totalorder %s45, 5
      %p392 = por %p390, %p391
      %p393 = scmp.ne.s32.totalorder %s382, %s383
      %p394 = scmp.eq.s32.totalorder %s45, 0
      %p395 = por %p393, %p394
      %p396 = scmp.ne.s32.totalorder %s382, %s383
      %p397 = scmp.eq.s32.totalorder %s46, 5
      %p398 = por %p396, %p397
      %p400 = scmp.ne.s32.totalorder %s383, %s399
      %p401 = scmp.eq.s32.totalorder %s46, 0
      %p402 = por %p400, %p401
      %s403 = ssub.s32 %s40, %s47
      %p404 = scmp.eq.s32.totalorder %s403, 0
      %s406 = sadd.s32 %s405, 1
      %s407 = scalar_select %p404, %s405, %s406
      %p410 = pneg %p404
      %p411 = scmp.eq.s32.totalorder %s40, 5
      %p412 = por %p410, %p411
      %p413 = scmp.ne.s32.totalorder %s405, %s408
      %p414 = scmp.eq.s32.totalorder %s40, 0
      %p415 = por %p413, %p414
      %p416 = scmp.ne.s32.totalorder %s405, %s408
      %p417 = scmp.eq.s32.totalorder %s45, 5
      %p418 = por %p416, %p417
      %p419 = scmp.ne.s32.totalorder %s408, %s409
      %p420 = scmp.eq.s32.totalorder %s45, 0
      %p421 = por %p419, %p420
      %p422 = scmp.ne.s32.totalorder %s408, %s409
      %p423 = scmp.eq.s32.totalorder %s46, 5
      %p424 = por %p422, %p423
      %p426 = scmp.ne.s32.totalorder %s409, %s425
      %p427 = scmp.eq.s32.totalorder %s46, 0
      %p428 = por %p426, %p427
      %s429 = ssub.s32 %s40, %s47
      %p430 = scmp.eq.s32.totalorder %s429, 0
      %s432 = sadd.s32 %s431, 1
      %s433 = scalar_select %p430, %s431, %s432
      %p436 = pneg %p430
      %p437 = scmp.eq.s32.totalorder %s40, 5
      %p438 = por %p436, %p437
      %p439 = scmp.ne.s32.totalorder %s431, %s434
      %p440 = scmp.eq.s32.totalorder %s40, 0
      %p441 = por %p439, %p440
      %p442 = scmp.ne.s32.totalorder %s431, %s434
      %p443 = scmp.eq.s32.totalorder %s45, 5
      %p444 = por %p442, %p443
      %p445 = scmp.ne.s32.totalorder %s434, %s435
      %p446 = scmp.eq.s32.totalorder %s45, 0
      %p447 = por %p445, %p446
      %p448 = scmp.ne.s32.totalorder %s434, %s435
      %p449 = scmp.eq.s32.totalorder %s46, 5
      %p450 = por %p448, %p449
      %p452 = scmp.ne.s32.totalorder %s435, %s451
      %p453 = scmp.eq.s32.totalorder %s46, 0
      %p454 = por %p452, %p453
      %s455 = ssub.s32 %s40, %s47
      %p456 = scmp.eq.s32.totalorder %s455, 0
      %s458 = sadd.s32 %s457, 1
      %s459 = scalar_select %p456, %s457, %s458
      %p462 = pneg %p456
      %p463 = scmp.eq.s32.totalorder %s40, 5
      %p464 = por %p462, %p463
      %p465 = scmp.ne.s32.totalorder %s457, %s460
      %p466 = scmp.eq.s32.totalorder %s40, 0
      %p467 = por %p465, %p466
      %p468 = scmp.ne.s32.totalorder %s457, %s460
      %p469 = scmp.eq.s32.totalorder %s45, 5
      %p470 = por %p468, %p469
      %p471 = scmp.ne.s32.totalorder %s460, %s461
      %p472 = scmp.eq.s32.totalorder %s45, 0
      %p473 = por %p471, %p472
      %p474 = scmp.ne.s32.totalorder %s460, %s461
      %p475 = scmp.eq.s32.totalorder %s46, 5
      %p476 = por %p474, %p475
      %p478 = scmp.ne.s32.totalorder %s461, %s477
      %p479 = scmp.eq.s32.totalorder %s46, 0
      %p480 = por %p478, %p479
      %s481 = ssub.s32 %s40, %s47
      %p482 = scmp.eq.s32.totalorder %s481, 0
      %s484 = sadd.s32 %s483, 1
      %s485 = scalar_select %p482, %s483, %s484
      %p488 = pneg %p482
      %p489 = scmp.eq.s32.totalorder %s40, 5
      %p490 = por %p488, %p489
      %p491 = scmp.ne.s32.totalorder %s483, %s486
      %p492 = scmp.eq.s32.totalorder %s40, 0
      %p493 = por %p491, %p492
      %p494 = scmp.ne.s32.totalorder %s483, %s486
      %p495 = scmp.eq.s32.totalorder %s45, 5
      %p496 = por %p494, %p495
      %p497 = scmp.ne.s32.totalorder %s486, %s487
      %p498 = scmp.eq.s32.totalorder %s45, 0
      %p499 = por %p497, %p498
      %p500 = scmp.ne.s32.totalorder %s486, %s487
      %p501 = scmp.eq.s32.totalorder %s46, 5
      %p502 = por %p500, %p501
      %p504 = scmp.ne.s32.totalorder %s487, %s503
      %p505 = scmp.eq.s32.totalorder %s46, 0
      %p506 = por %p504, %p505
      %s508 = sadd.s32 %s507, 1
      %p511 = scmp.eq.s32.totalorder %s40, 5
      %p512 = scmp.ne.s32.totalorder %s507, %s509
      %p513 = scmp.eq.s32.totalorder %s40, 0
      %p514 = por %p512, %p513
      %p515 = scmp.ne.s32.totalorder %s507, %s509
      %p516 = scmp.eq.s32.totalorder %s45, 5
      %p517 = por %p515, %p516
      %p518 = scmp.ne.s32.totalorder %s509, %s510
      %p519 = scmp.eq.s32.totalorder %s45, 0
      %p520 = por %p518, %p519
      %p521 = scmp.ne.s32.totalorder %s509, %s510
      %p522 = scmp.eq.s32.totalorder %s46, 5
      %p523 = por %p521, %p522
      %p525 = scmp.ne.s32.totalorder %s510, %s524
      %p526 = scmp.eq.s32.totalorder %s46, 0
      %p527 = por %p525, %p526
      %s529 = sadd.s32 %s528, 1
      %p532 = scmp.eq.s32.totalorder %s40, 5
      %p533 = scmp.ne.s32.totalorder %s528, %s530
      %p534 = scmp.eq.s32.totalorder %s40, 0
      %p535 = por %p533, %p534
      %p536 = scmp.ne.s32.totalorder %s528, %s530
      %p537 = scmp.eq.s32.totalorder %s45, 5
      %p538 = por %p536, %p537
      %p539 = scmp.ne.s32.totalorder %s530, %s531
      %p540 = scmp.eq.s32.totalorder %s45, 0
      %p541 = por %p539, %p540
      %p542 = scmp.ne.s32.totalorder %s530, %s531
      %p543 = scmp.eq.s32.totalorder %s46, 5
      %p544 = por %p542, %p543
      %p546 = scmp.ne.s32.totalorder %s531, %s545
      %p547 = scmp.eq.s32.totalorder %s46, 0
      %p548 = por %p546, %p547
      %s550 = sadd.s32 %s549, 1
      %p553 = scmp.eq.s32.totalorder %s40, 5
      %p554 = scmp.ne.s32.totalorder %s549, %s551
      %p555 = scmp.eq.s32.totalorder %s40, 0
      %p556 = por %p554, %p555
      %p557 = scmp.ne.s32.totalorder %s549, %s551
      %p558 = scmp.eq.s32.totalorder %s45, 5
      %p559 = por %p557, %p558
      %p560 = scmp.ne.s32.totalorder %s551, %s552
      %p561 = scmp.eq.s32.totalorder %s45, 0
      %p562 = por %p560, %p561
      %p563 = scmp.ne.s32.totalorder %s551, %s552
      %p564 = scmp.eq.s32.totalorder %s46, 5
      %p565 = por %p563, %p564
      %p567 = scmp.ne.s32.totalorder %s552, %s566
      %p568 = scmp.eq.s32.totalorder %s46, 0
      %p569 = por %p567, %p568
      %s571 = sadd.s32 %s570, 1
      %p574 = scmp.eq.s32.totalorder %s40, 5
      %p575 = scmp.ne.s32.totalorder %s570, %s572
      %p576 = scmp.eq.s32.totalorder %s40, 0
      %p577 = por %p575, %p576
      %p578 = scmp.ne.s32.totalorder %s570, %s572
      %p579 = scmp.eq.s32.totalorder %s45, 5
      %p580 = por %p578, %p579
      %p581 = scmp.ne.s32.totalorder %s572, %s573
      %p582 = scmp.eq.s32.totalorder %s45, 0
      %p583 = por %p581, %p582
      %p584 = scmp.ne.s32.totalorder %s572, %s573
      %p585 = scmp.eq.s32.totalorder %s46, 5
      %p586 = por %p584, %p585
      %p588 = scmp.ne.s32.totalorder %s573, %s587
      %p589 = scmp.eq.s32.totalorder %s46, 0
      %p590 = por %p588, %p589
      %s592 = sadd.s32 %s591, 1
      %p595 = scmp.eq.s32.totalorder %s40, 5
      %p596 = scmp.ne.s32.totalorder %s591, %s593
      %p597 = scmp.eq.s32.totalorder %s40, 0
      %p598 = por %p596, %p597
      %p599 = scmp.ne.s32.totalorder %s591, %s593
      %p600 = scmp.eq.s32.totalorder %s45, 5
      %p601 = por %p599, %p600
      %p602 = scmp.ne.s32.totalorder %s593, %s594
      %p603 = scmp.eq.s32.totalorder %s45, 0
      %p604 = por %p602, %p603
      %p605 = scmp.ne.s32.totalorder %s593, %s594
      %p606 = scmp.eq.s32.totalorder %s46, 5
      %p607 = por %p605, %p606
      %p609 = scmp.ne.s32.totalorder %s594, %s608
      %p610 = scmp.eq.s32.totalorder %s46, 0
      %p611 = por %p609, %p610
      %p612 = scmp.le.s32.totalorder 1, %s40
      %p613 = scmp.lt.s32.totalorder %s40, 7
      %p614 = pnand %p612, %p613
      %p615 = pneg %p614
      // Predicated region
      $region9: #{tpu_custom_call.1} parent=5 // pred_check
        _
      $region10: #{tpu_custom_call.1} parent=5 // pred_check_branch
        %617 = sbr.rel (%p614) target = $region12
      $region11: #{tpu_custom_call.1} parent=5 // pred_region
        %s618 = ssub.s32 %s40, 1
        // Predicated region
        $region13: #{tpu_custom_call.1} parent=11 // pred_check
          %p619 = pneg %p61
        $region14: #{tpu_custom_call.1} parent=11 // pred_check_branch
          %621 = sbr.rel (%p619) target = $region16
        $region15: #{tpu_custom_call.1} parent=11 // pred_region
          _
        $region16: #{tpu_custom_call.1} parent=11 // pred_fallthru
          _
        // Predicated region
        $region17: #{tpu_custom_call.1} parent=11 // pred_check
          %p622 = pneg %p82
        $region18: #{tpu_custom_call.1} parent=11 // pred_check_branch
          %624 = sbr.rel (%p622) target = $region20
        $region19: #{tpu_custom_call.1} parent=11 // pred_region
          _
        $region20: #{tpu_custom_call.1} parent=11 // pred_fallthru
          _
        // Predicated region
        $region21: #{tpu_custom_call.1} parent=11 // pred_check
          %p625 = pneg %p103
        $region22: #{tpu_custom_call.1} parent=11 // pred_check_branch
          %627 = sbr.rel (%p625) target = $region24
        $region23: #{tpu_custom_call.1} parent=11 // pred_region
          _
        $region24: #{tpu_custom_call.1} parent=11 // pred_fallthru
          _
        // Predicated region
        $region25: #{tpu_custom_call.1} parent=11 // pred_check
          %p628 = pneg %p124
        $region26: #{tpu_custom_call.1} parent=11 // pred_check_branch
          %630 = sbr.rel (%p628) target = $region28
        $region27: #{tpu_custom_call.1} parent=11 // pred_region
          _
        $region28: #{tpu_custom_call.1} parent=11 // pred_fallthru
          _
        // Predicated region
        $region29: #{tpu_custom_call.1} parent=11 // pred_check
          %p631 = pneg %p145
        $region30: #{tpu_custom_call.1} parent=11 // pred_check_branch
          %633 = sbr.rel (%p631) target = $region32
        $region31: #{tpu_custom_call.1} parent=11 // pred_region
          _
        $region32: #{tpu_custom_call.1} parent=11 // pred_fallthru
          _
        // Predicated region
        $region33: #{tpu_custom_call.1} parent=11 // pred_check
          %p634 = pneg %p166
        $region34: #{tpu_custom_call.1} parent=11 // pred_check_branch
          %636 = sbr.rel (%p634) target = $region36
        $region35: #{tpu_custom_call.1} parent=11 // pred_region
          _
        $region36: #{tpu_custom_call.1} parent=11 // pred_fallthru
          _
        // Predicated region
        $region37: #{tpu_custom_call.1} parent=11 // pred_check
          %p637 = pneg %p187
        $region38: #{tpu_custom_call.1} parent=11 // pred_check_branch
          %639 = sbr.rel (%p637) target = $region40
        $region39: #{tpu_custom_call.1} parent=11 // pred_region
          _
        $region40: #{tpu_custom_call.1} parent=11 // pred_fallthru
          _
        // Predicated region
        $region41: #{tpu_custom_call.1} parent=11 // pred_check
          %p640 = pneg %p520
        $region42: #{tpu_custom_call.1} parent=11 // pred_check_branch
          %642 = sbr.rel (%p640) target = $region44
        $region43: #{tpu_custom_call.1} parent=11 // pred_region
          _
        $region44: #{tpu_custom_call.1} parent=11 // pred_fallthru
          _
        // Predicated region
        $region45: #{tpu_custom_call.1} parent=11 // pred_check
          %p643 = pneg %p541
        $region46: #{tpu_custom_call.1} parent=11 // pred_check_branch
          %645 = sbr.rel (%p643) target = $region48
        $region47: #{tpu_custom_call.1} parent=11 // pred_region
          _
        $region48: #{tpu_custom_call.1} parent=11 // pred_fallthru
          _
        // Predicated region
        $region49: #{tpu_custom_call.1} parent=11 // pred_check
          %p646 = pneg %p562
        $region50: #{tpu_custom_call.1} parent=11 // pred_check_branch
          %648 = sbr.rel (%p646) target = $region52
        $region51: #{tpu_custom_call.1} parent=11 // pred_region
          _
        $region52: #{tpu_custom_call.1} parent=11 // pred_fallthru
          _
        // Predicated region
        $region53: #{tpu_custom_call.1} parent=11 // pred_check
          %p649 = pneg %p583
        $region54: #{tpu_custom_call.1} parent=11 // pred_check_branch
          %651 = sbr.rel (%p649) target = $region56
        $region55: #{tpu_custom_call.1} parent=11 // pred_region
          _
        $region56: #{tpu_custom_call.1} parent=11 // pred_fallthru
          _
      $region12: #{tpu_custom_call.1} parent=5 // pred_fallthru
        _
      %p652 = scmp.lt.s32.totalorder %s40, 6
      // Predicated region
      $region57: #{tpu_custom_call.1} parent=5 // pred_check
        %p653 = pneg %p652
      $region58: #{tpu_custom_call.1} parent=5 // pred_check_branch
        %655 = sbr.rel (%p653) target = $region60
      $region59: #{tpu_custom_call.1} parent=5 // pred_region
        // Predicated region
        $region61: #{tpu_custom_call.1} parent=59 // pred_check
          %p656 = pneg %p207
        $region62: #{tpu_custom_call.1} parent=59 // pred_check_branch
          %658 = sbr.rel (%p656) target = $region64
        $region63: #{tpu_custom_call.1} parent=59 // pred_region
          %s659 = sand.u32 %s197, 1
          %s660 = scalar_lea.sflag [#allocation5], %s659
          %s661 = sand.u32 %s197, 1
          %s662 = smul.addr %s661, 192
          %s663 = scalar_lea.vmem [#allocation4], %s662
          %s665 = ssub.s32 3072, 3072
          %666 = vsyncadd %s660, %s665
          %s667 = smul.addr %s40, 48
          %s668 = smul.addr %s667, 64
          %s669 = scalar_lea.hbm %s7, %s668
          %s670 = sshll.u32 %s663, 4
          %s671 = int_to_ptr.vmem [resolvable:$true] %s670
          %676 = dma.hbm_to_vmem [thread:$0]  %s669, 3072, %s671, %s660, 192, 192, 12
        $region64: #{tpu_custom_call.1} parent=59 // pred_fallthru
          _
        // Predicated region
        $region65: #{tpu_custom_call.1} parent=59 // pred_check
          %p677 = pneg %p233
        $region66: #{tpu_custom_call.1} parent=59 // pred_check_branch
          %679 = sbr.rel (%p677) target = $region68
        $region67: #{tpu_custom_call.1} parent=59 // pred_region
          %p680 = scmp.lt.s32.totalorder %s40, 5
          %s681 = scalar_select %p680, %s40, 5
          %s682 = smul.addr %s681, 3
          %s683 = scalar_lea.vmem %s8, %s682
        $region68: #{tpu_custom_call.1} parent=59 // pred_fallthru
          _
        // Predicated region
        $region69: #{tpu_custom_call.1} parent=59 // pred_check
          %p684 = pneg %p259
        $region70: #{tpu_custom_call.1} parent=59 // pred_check_branch
          %686 = sbr.rel (%p684) target = $region72
        $region71: #{tpu_custom_call.1} parent=59 // pred_region
          %s687 = sand.u32 %s40, 1
          %s688 = scalar_lea.sflag [#allocation7], %s687
          %s689 = sand.u32 %s249, 1
          %s690 = smul.addr %s689, 64
          %s691 = scalar_lea.vmem [#allocation6], %s690
          %s693 = ssub.s32 1024, 1024
          %694 = vsyncadd %s688, %s693
          %s695 = smul.addr %s40, 16
          %s696 = smul.addr %s695, 64
          %s697 = scalar_lea.hbm %s9, %s696
          %s698 = sshll.u32 %s691, 4
          %s699 = int_to_ptr.vmem [resolvable:$true] %s698
          %704 = dma.hbm_to_vmem [thread:$0]  %s697, 1024, %s699, %s688, 64, 64, 4
        $region72: #{tpu_custom_call.1} parent=59 // pred_fallthru
          _
        // Predicated region
        $region73: #{tpu_custom_call.1} parent=59 // pred_check
          %p705 = pneg %p285
        $region74: #{tpu_custom_call.1} parent=59 // pred_check_branch
          %707 = sbr.rel (%p705) target = $region76
        $region75: #{tpu_custom_call.1} parent=59 // pred_region
          %p708 = scmp.lt.s32.totalorder %s40, 5
          %s709 = scalar_select %p708, %s40, 5
          %s710 = scalar_lea.vmem %s10, %s709
        $region76: #{tpu_custom_call.1} parent=59 // pred_fallthru
          _
        // Predicated region
        $region77: #{tpu_custom_call.1} parent=59 // pred_check
          %p711 = pneg %p311
        $region78: #{tpu_custom_call.1} parent=59 // pred_check_branch
          %713 = sbr.rel (%p711) target = $region80
        $region79: #{tpu_custom_call.1} parent=59 // pred_region
          %p714 = scmp.lt.s32.totalorder %s40, 5
          %s715 = scalar_select %p714, %s40, 5
          %s716 = scalar_lea.vmem %s11, %s715
        $region80: #{tpu_custom_call.1} parent=59 // pred_fallthru
          _
        // Predicated region
        $region81: #{tpu_custom_call.1} parent=59 // pred_check
          %p717 = pneg %p337
        $region82: #{tpu_custom_call.1} parent=59 // pred_check_branch
          %719 = sbr.rel (%p717) target = $region84
        $region83: #{tpu_custom_call.1} parent=59 // pred_region
          %p720 = scmp.lt.s32.totalorder %s40, 5
          %s721 = scalar_select %p720, %s40, 5
          %s722 = scalar_lea.vmem %s12, %s721
        $region84: #{tpu_custom_call.1} parent=59 // pred_fallthru
          _
        // Predicated region
        $region85: #{tpu_custom_call.1} parent=59 // pred_check
          %p723 = pneg %p363
        $region86: #{tpu_custom_call.1} parent=59 // pred_check_branch
          %725 = sbr.rel (%p723) target = $region88
        $region87: #{tpu_custom_call.1} parent=59 // pred_region
          %s726 = sand.u32 %s40, 1
          %s727 = scalar_lea.sflag [#allocation7], %s726
          %s728 = sand.u32 %s353, 1
          %s729 = smul.addr %s728, 128
          %s730 = scalar_lea.vmem [#allocation8], %s729
          %s732 = ssub.s32 2048, 2048
          %733 = vsyncadd %s727, %s732
          %s734 = smul.addr %s40, 32
          %s735 = smul.addr %s734, 64
          %s736 = scalar_lea.hbm %s13, %s735
          %s737 = sshll.u32 %s730, 4
          %s738 = int_to_ptr.vmem [resolvable:$true] %s737
          %743 = dma.hbm_to_vmem [thread:$0]  %s736, 2048, %s738, %s727, 128, 128, 8
        $region88: #{tpu_custom_call.1} parent=59 // pred_fallthru
          _
        // Predicated region
        $region89: #{tpu_custom_call.1} parent=59 // pred_check
          %p744 = pneg %p389
        $region90: #{tpu_custom_call.1} parent=59 // pred_check_branch
          %746 = sbr.rel (%p744) target = $region92
        $region91: #{tpu_custom_call.1} parent=59 // pred_region
          %p747 = scmp.lt.s32.totalorder %s40, 5
          %s748 = scalar_select %p747, %s40, 5
          %s749 = smul.addr %s748, 2
          %s750 = scalar_lea.vmem %s14, %s749
        $region92: #{tpu_custom_call.1} parent=59 // pred_fallthru
          _
        // Predicated region
        $region93: #{tpu_custom_call.1} parent=59 // pred_check
          %p751 = pneg %p415
        $region94: #{tpu_custom_call.1} parent=59 // pred_check_branch
          %753 = sbr.rel (%p751) target = $region96
        $region95: #{tpu_custom_call.1} parent=59 // pred_region
          %s754 = sand.u32 %s405, 1
          %s755 = scalar_lea.sflag [#allocation10], %s754
          %s756 = sand.u32 %s405, 1
          %s757 = smul.addr %s756, 128
          %s758 = scalar_lea.vmem [#allocation9], %s757
          %s760 = ssub.s32 2048, 2048
          %761 = vsyncadd %s755, %s760
          %s762 = smul.addr %s40, 32
          %s763 = smul.addr %s762, 64
          %s764 = scalar_lea.hbm %s15, %s763
          %s765 = sshll.u32 %s758, 4
          %s766 = int_to_ptr.vmem [resolvable:$true] %s765
          %771 = dma.hbm_to_vmem [thread:$0]  %s764, 2048, %s766, %s755, 64, 64, 4
        $region96: #{tpu_custom_call.1} parent=59 // pred_fallthru
          _
        // Predicated region
        $region97: #{tpu_custom_call.1} parent=59 // pred_check
          %p772 = pneg %p441
        $region98: #{tpu_custom_call.1} parent=59 // pred_check_branch
          %774 = sbr.rel (%p772) target = $region100
        $region99: #{tpu_custom_call.1} parent=59 // pred_region
          %p775 = scmp.lt.s32.totalorder %s40, 5
          %s776 = scalar_select %p775, %s40, 5
          %s777 = scalar_lea.vmem %s16, %s776
        $region100: #{tpu_custom_call.1} parent=59 // pred_fallthru
          _
        // Predicated region
        $region101: #{tpu_custom_call.1} parent=59 // pred_check
          %p778 = pneg %p467
        $region102: #{tpu_custom_call.1} parent=59 // pred_check_branch
          %780 = sbr.rel (%p778) target = $region104
        $region103: #{tpu_custom_call.1} parent=59 // pred_region
          %p781 = scmp.lt.s32.totalorder %s40, 5
          %s782 = scalar_select %p781, %s40, 5
          %s783 = scalar_lea.vmem %s17, %s782
        $region104: #{tpu_custom_call.1} parent=59 // pred_fallthru
          _
        // Predicated region
        $region105: #{tpu_custom_call.1} parent=59 // pred_check
          %p784 = pneg %p493
        $region106: #{tpu_custom_call.1} parent=59 // pred_check_branch
          %786 = sbr.rel (%p784) target = $region108
        $region107: #{tpu_custom_call.1} parent=59 // pred_region
          %p787 = scmp.lt.s32.totalorder %s40, 5
          %s788 = scalar_select %p787, %s40, 5
          %s789 = scalar_lea.vmem %s18, %s788
        $region108: #{tpu_custom_call.1} parent=59 // pred_fallthru
          _
      $region60: #{tpu_custom_call.1} parent=5 // pred_fallthru
        _
      %p790 = scmp.le.s32.totalorder 1, %s40
      %p791 = scmp.lt.s32.totalorder %s40, 7
      %p792 = pnand %p790, %p791
      %p793 = pneg %p792
      // Predicated region
      $region109: #{tpu_custom_call.1} parent=5 // pred_check
        _
      $region110: #{tpu_custom_call.1} parent=5 // pred_check_branch
        %795 = sbr.rel (%p792) target = $region112
      $region111: #{tpu_custom_call.1} parent=5 // pred_region
        %s796 = ssub.s32 %s40, 1
        %s797 = sand.u32 %s200, 1
        %s798 = scalar_lea.sflag [#allocation5], %s797
        %s799 = sand.u32 %s200, 1
        %s800 = smul.addr %s799, 192
        %s801 = scalar_lea.vmem [#allocation4], %s800
        // Predicated region
        $region113: #{tpu_custom_call.1} parent=111 // pred_check
          %p802 = pneg %p213
        $region114: #{tpu_custom_call.1} parent=111 // pred_check_branch
          %804 = sbr.rel (%p802) target = $region116
        $region115: #{tpu_custom_call.1} parent=111 // pred_region
          %805 = dma.done %s798, 3072
        $region116: #{tpu_custom_call.1} parent=111 // pred_fallthru
          _
        %s806 = sand.u32 %s45, 1
        %s807 = scalar_lea.sflag [#allocation7], %s806
        %s808 = sand.u32 %s252, 1
        %s809 = smul.addr %s808, 64
        %s810 = scalar_lea.vmem [#allocation6], %s809
        // Predicated region
        $region117: #{tpu_custom_call.1} parent=111 // pred_check
          %p811 = pneg %p265
        $region118: #{tpu_custom_call.1} parent=111 // pred_check_branch
          %813 = sbr.rel (%p811) target = $region120
        $region119: #{tpu_custom_call.1} parent=111 // pred_region
          %814 = dma.done %s807, 1024
        $region120: #{tpu_custom_call.1} parent=111 // pred_fallthru
          _
        %s815 = sand.u32 %s45, 1
        %s816 = scalar_lea.sflag [#allocation7], %s815
        %s817 = sand.u32 %s356, 1
        %s818 = smul.addr %s817, 128
        %s819 = scalar_lea.vmem [#allocation8], %s818
        // Predicated region
        $region121: #{tpu_custom_call.1} parent=111 // pred_check
          %p820 = pneg %p369
        $region122: #{tpu_custom_call.1} parent=111 // pred_check_branch
          %822 = sbr.rel (%p820) target = $region124
        $region123: #{tpu_custom_call.1} parent=111 // pred_region
          %823 = dma.done %s816, 2048
        $region124: #{tpu_custom_call.1} parent=111 // pred_fallthru
          _
        %s824 = sand.u32 %s408, 1
        %s825 = scalar_lea.sflag [#allocation10], %s824
        %s826 = sand.u32 %s408, 1
        %s827 = smul.addr %s826, 128
        %s828 = scalar_lea.vmem [#allocation9], %s827
        // Predicated region
        $region125: #{tpu_custom_call.1} parent=111 // pred_check
          %p829 = pneg %p421
        $region126: #{tpu_custom_call.1} parent=111 // pred_check_branch
          %831 = sbr.rel (%p829) target = $region128
        $region127: #{tpu_custom_call.1} parent=111 // pred_region
          %832 = dma.done %s825, 2048
        $region128: #{tpu_custom_call.1} parent=111 // pred_fallthru
          _
        %p833 = pneg %p61
        %p834 = pneg %p58
        %p835 = pneg %p82
        %p836 = pneg %p79
        %p837 = pneg %p103
        %p838 = pneg %p100
        %p839 = pneg %p124
        %p840 = pneg %p121
        %p841 = pneg %p145
        %p842 = pneg %p142
        %p843 = pneg %p166
        %p844 = pneg %p163
        %p845 = pneg %p187
        %p846 = pneg %p184
        %s847 = sand.u32 %s200, 1
        %s848 = scalar_lea.sflag [#allocation5], %s847
        %s849 = sand.u32 %s200, 1
        %s850 = smul.addr %s849, 192
        %s851 = scalar_lea.vmem [#allocation4], %s850
        %p852 = pneg %p213
        %p853 = pneg %p210
        %p854 = scmp.lt.s32.totalorder %s45, 5
        %s855 = scalar_select %p854, %s45, 5
        %s856 = smul.addr %s855, 3
        %s857 = scalar_lea.vmem %s8, %s856
        %p858 = pneg %p239
        %p859 = pneg %p236
        %s860 = sand.u32 %s45, 1
        %s861 = scalar_lea.sflag [#allocation7], %s860
        %s862 = sand.u32 %s252, 1
        %s863 = smul.addr %s862, 64
        %s864 = scalar_lea.vmem [#allocation6], %s863
        %p865 = pneg %p265
        %p866 = pneg %p262
        %p867 = scmp.lt.s32.totalorder %s45, 5
        %s868 = scalar_select %p867, %s45, 5
        %s869 = scalar_lea.vmem %s10, %s868
        %p870 = pneg %p291
        %p871 = pneg %p288
        %p872 = scmp.lt.s32.totalorder %s45, 5
        %s873 = scalar_select %p872, %s45, 5
        %s874 = scalar_lea.vmem %s11, %s873
        %p875 = pneg %p317
        %p876 = pneg %p314
        %p877 = scmp.lt.s32.totalorder %s45, 5
        %s878 = scalar_select %p877, %s45, 5
        %s879 = scalar_lea.vmem %s12, %s878
        %p880 = pneg %p343
        %p881 = pneg %p340
        %s882 = sand.u32 %s45, 1
        %s883 = scalar_lea.sflag [#allocation7], %s882
        %s884 = sand.u32 %s356, 1
        %s885 = smul.addr %s884, 128
        %s886 = scalar_lea.vmem [#allocation8], %s885
        %p887 = pneg %p369
        %p888 = pneg %p366
        %p889 = scmp.lt.s32.totalorder %s45, 5
        %s890 = scalar_select %p889, %s45, 5
        %s891 = smul.addr %s890, 2
        %s892 = scalar_lea.vmem %s14, %s891
        %p893 = pneg %p395
        %p894 = pneg %p392
        %s895 = sand.u32 %s408, 1
        %s896 = scalar_lea.sflag [#allocation10], %s895
        %s897 = sand.u32 %s408, 1
        %s898 = smul.addr %s897, 128
        %s899 = scalar_lea.vmem [#allocation9], %s898
        %p900 = pneg %p421
        %p901 = pneg %p418
        %p902 = scmp.lt.s32.totalorder %s45, 5
        %s903 = scalar_select %p902, %s45, 5
        %s904 = scalar_lea.vmem %s16, %s903
        %p905 = pneg %p447
        %p906 = pneg %p444
        %p907 = scmp.lt.s32.totalorder %s45, 5
        %s908 = scalar_select %p907, %s45, 5
        %s909 = scalar_lea.vmem %s17, %s908
        %p910 = pneg %p473
        %p911 = pneg %p470
        %p912 = scmp.lt.s32.totalorder %s45, 5
        %s913 = scalar_select %p912, %s45, 5
        %s914 = scalar_lea.vmem %s18, %s913
        %p915 = pneg %p499
        %p916 = pneg %p496
        %p917 = pneg %p520
        %p918 = pneg %p517
        %p919 = pneg %p541
        %p920 = pneg %p538
        %p921 = pneg %p562
        %p922 = pneg %p559
        %p923 = pneg %p583
        %p924 = pneg %p580
        %p925 = pneg %p604
        %p926 = pneg %p601
        %p927 = scmp.lt.s32.totalorder %s45, 5
        %s928 = scalar_select %p927, %s45, 5
        %s929 = smul.addr %s928, 3
        %s930 = scalar_lea.vmem %s8, %s929
        %p931 = scmp.lt.s32.totalorder %s45, 5
        %s932 = scalar_select %p931, %s45, 5
        %s933 = scalar_lea.vmem %s10, %s932
        %p934 = scmp.lt.s32.totalorder %s45, 5
        %s935 = scalar_select %p934, %s45, 5
        %s936 = scalar_lea.vmem %s11, %s935
        %p937 = scmp.lt.s32.totalorder %s45, 5
        %s938 = scalar_select %p937, %s45, 5
        %s939 = scalar_lea.vmem %s12, %s938
        %p940 = scmp.lt.s32.totalorder %s45, 5
        %s941 = scalar_select %p940, %s45, 5
        %s942 = smul.addr %s941, 2
        %s943 = scalar_lea.vmem %s14, %s942
        %p944 = scmp.lt.s32.totalorder %s45, 5
        %s945 = scalar_select %p944, %s45, 5
        %s946 = scalar_lea.vmem %s16, %s945
        %p947 = scmp.lt.s32.totalorder %s45, 5
        %s948 = scalar_select %p947, %s45, 5
        %s949 = scalar_lea.vmem %s17, %s948
        %p950 = scmp.lt.s32.totalorder %s45, 5
        %s951 = scalar_select %p950, %s45, 5
        %s952 = scalar_lea.vmem %s18, %s951
        %p954 = scmp.eq.s32.totalorder %s45, 0
        // Predicated region
        $region129: #{tpu_custom_call.1} parent=111 // pred_check
          %p955 = pneg %p954
        $region130: #{tpu_custom_call.1} parent=111 // pred_check_branch
          %957 = sbr.rel (%p955) target = $region132
        $region131: #{tpu_custom_call.1} parent=111 // pred_region
          %v958 = vld [vmem:[%s0] sm:$0xff]
          %v959 = vld [vmem:[%s0 + $0x8] sm:$0xff]
          %v960 = vld [vmem:[%s3] sm:$0xf]
          %v961 = vld [vmem:[%s3 + $0x4] sm:$0xf]
          %v962 = vld [vmem:[%s4] sm:$0x1]
          %v963 = vunpack.c.l.bf16 %v962
          %v964 = vlaneseq
          %v965 = vshrl.u32 %v964, 7
          %v966 = vsub.s32 0, %v965
          %v967 = vrot.slane %v963, %v966
          %v970 = vunpack.c.l.b16 %v960
          %v971 = vunpack.c.l.b16 %v961
          %v972 = vpack.c.b16 %v971, %v970
          %vm974 = vcmask 130048
          %v976 = vsel %vm974, %v958, 0
          %v979 = vsel %vm974, %v959, 0
          %981 = vmatprep.subr.bf16.mxu0 0
          %982 = vmatpush1.bf16.msra.mxu0 %v972
          %983 = vmatprep.subr.bf16.mxu0 0
          %984 = vmatpush1.bf16.msra.mxu0 0
          %985 = vmatprep.subr.bf16.mxu0 0
          %986 = vmatpush1.bf16.msra.mxu0 0
          %987 = vmatprep.subr.bf16.mxu0 0
          %988 = vmatpush1.bf16.msra.mxu0 0
          %989 = vmatprep.subr.bf16.mxu0 0
          %990 = vmatpush1.bf16.msra.mxu0 0
          %991 = vmatprep.subr.bf16.mxu0 0
          %992 = vmatpush1.bf16.msra.mxu0 0
          %993 = vmatprep.subr.bf16.mxu0 0
          %994 = vmatpush1.bf16.msra.mxu0 0
          %995 = vmatprep.subr.bf16.mxu0 0
          %996 = vmatpush1.bf16.msra.mxu0 0
          %997 = vmatprep.subr.bf16.mxu0 0
          %998 = vmatpush1.bf16.msra.mxu0 0
          %999 = vmatprep.subr.bf16.mxu0 0
          %1000 = vmatpush1.bf16.msra.mxu0 0
          %1001 = vmatprep.subr.bf16.mxu0 0
          %1002 = vmatpush1.bf16.msra.mxu0 0
          %1003 = vmatprep.subr.bf16.mxu0 0
          %1004 = vmatpush1.bf16.msra.mxu0 0
          %1005 = vmatprep.subr.bf16.mxu0 0
          %1006 = vmatpush1.bf16.msra.mxu0 0
          %1007 = vmatprep.subr.bf16.mxu0 0
          %1008 = vmatpush1.bf16.msra.mxu0 0
          %1009 = vmatprep.subr.bf16.mxu0 0
          %1010 = vmatpush1.bf16.msra.mxu0 0
          %1011 = vmatprep.subr.bf16.mxu0 0
          %1012 = vmatpush1.bf16.msra.mxu0 0
          %1013 = vmatprep.mubr.f32.mxu0 0.0
          %1014 = vmatmul.mubr.f32.gmra.mrb[0].mxu0 %v976
          %v1015 = vpop.f32.mrb[0].mxu0
          %v1016 = vadd.f32 %v967, %v1015
          %v1017 = vpop.f32.mrb[0].mxu0
          %1018 = vmatprep.mubr.f32.mxu0 0.0
          %1019 = vmatmul.mubr.f32.gmra.mrb[0].mxu0 %v979
          %v1020 = vpop.f32.mrb[0].mxu0
          %v1021 = vadd.f32 %v967, %v1020
          %v1022 = vpop.f32.mrb[0].mxu0
          %1023 = vdwg.mxu0
          %vm1024 = vcmp.ge.f32.partialorder %v1016, 0.0
          %vm1025 = vcmp.ge.f32.partialorder %v1021, 0.0
          %v1026 = vmul.f32 %v1016, 0.1
          %v1027 = vmul.f32 %v1021, 0.1
          %v1028 = vsel %vm1024, %v1016, %v1026
          %v1029 = vsel %vm1025, %v1021, %v1027
          %v1030 = vld [vmem:[%s5] sm:$0xf]
          %v1031 = vld [vmem:[%s5 + $0x4] sm:$0xf]
          %v1032 = vld [vmem:[%s5 + $0x8] sm:$0xf]
          %v1033 = vld [vmem:[%s5 + $0xc] sm:$0xf]
          %v1034 = vld [vmem:[%s5 + $0x10] sm:$0xf]
          %v1035 = vld [vmem:[%s5 + $0x14] sm:$0xf]
          %v1036 = vld [vmem:[%s5 + $0x18] sm:$0xf]
          %v1037 = vld [vmem:[%s5 + $0x1c] sm:$0xf]
          %v1038 = vld [vmem:[%s6] sm:$0x1]
          %v1039 = vunpack.c.l.bf16 %v1038
          %v1040 = vlaneseq
          %v1041 = vshrl.u32 %v1040, 7
          %v1042 = vsub.s32 0, %v1041
          %v1043 = vrot.slane %v1039, %v1042
          %v1052 = vunpack.c.l.b16 %v1030
          %v1053 = vunpack.c.l.b16 %v1031
          %v1054 = vunpack.c.l.b16 %v1032
          %v1055 = vunpack.c.l.b16 %v1033
          %v1056 = vunpack.c.l.b16 %v1034
          %v1057 = vunpack.c.l.b16 %v1035
          %v1058 = vunpack.c.l.b16 %v1036
          %v1059 = vunpack.c.l.b16 %v1037
          %v1060 = vpack.c.b16 %v1053, %v1052
          %v1061 = vpack.c.b16 %v1055, %v1054
          %v1062 = vpack.c.b16 %v1057, %v1056
          %v1063 = vpack.c.b16 %v1059, %v1058
          %vm1068 = vcmask 523264
          %v1070 = vsel %vm1068, %v1028, 0
          %v1073 = vsel %vm1068, %v1029, 0
          %1075 = vmatprep.subr.bf16.mxu0 0
          %1076 = vmatpush1.bf16.msra.mxu0 %v1060
          %1077 = vmatprep.subr.bf16.mxu0 0
          %1078 = vmatpush1.bf16.msra.mxu0 %v1061
          %1079 = vmatprep.subr.bf16.mxu0 0
          %1080 = vmatpush1.bf16.msra.mxu0 %v1062
          %1081 = vmatprep.subr.bf16.mxu0 0
          %1082 = vmatpush1.bf16.msra.mxu0 %v1063
          %1083 = vmatprep.subr.bf16.mxu0 0
          %1084 = vmatpush1.bf16.msra.mxu0 0
          %1085 = vmatprep.subr.bf16.mxu0 0
          %1086 = vmatpush1.bf16.msra.mxu0 0
          %1087 = vmatprep.subr.bf16.mxu0 0
          %1088 = vmatpush1.bf16.msra.mxu0 0
          %1089 = vmatprep.subr.bf16.mxu0 0
          %1090 = vmatpush1.bf16.msra.mxu0 0
          %1091 = vmatprep.subr.bf16.mxu0 0
          %1092 = vmatpush1.bf16.msra.mxu0 0
          %1093 = vmatprep.subr.bf16.mxu0 0
          %1094 = vmatpush1.bf16.msra.mxu0 0
          %1095 = vmatprep.subr.bf16.mxu0 0
          %1096 = vmatpush1.bf16.msra.mxu0 0
          %1097 = vmatprep.subr.bf16.mxu0 0
          %1098 = vmatpush1.bf16.msra.mxu0 0
          %1099 = vmatprep.subr.bf16.mxu0 0
          %1100 = vmatpush1.bf16.msra.mxu0 0
          %1101 = vmatprep.subr.bf16.mxu0 0
          %1102 = vmatpush1.bf16.msra.mxu0 0
          %1103 = vmatprep.subr.bf16.mxu0 0
          %1104 = vmatpush1.bf16.msra.mxu0 0
          %1105 = vmatprep.subr.bf16.mxu0 0
          %1106 = vmatpush1.bf16.msra.mxu0 0
          %1107 = vmatprep.mubr.f32.mxu0 0.0
          %1108 = vmatmul.mubr.f32.gmra.mrb[0].mxu0 %v1070
          %v1109 = vpop.f32.mrb[0].mxu0
          %v1110 = vadd.f32 %v1043, %v1109
          %v1111 = vpop.f32.mrb[0].mxu0
          %1112 = vmatprep.mubr.f32.mxu0 0.0
          %1113 = vmatmul.mubr.f32.gmra.mrb[0].mxu0 %v1073
          %v1114 = vpop.f32.mrb[0].mxu0
          %v1115 = vadd.f32 %v1043, %v1114
          %v1116 = vpop.f32.mrb[0].mxu0
          %1117 = vdwg.mxu0
          %v1118 = vld [vmem:[%s1] sm:$0xff]
          %v1119 = vld [vmem:[%s1 + $0x8] sm:$0xff]
          %v1120 = vadd.f32 %v1110, %v1118
          %v1121 = vadd.f32 %v1115, %v1119
          %1122 = vst [vmem:[#allocation2] sm:$0xff] %v1120
          %1123 = vst [vmem:[#allocation2 + $0x8] sm:$0xff] %v1121
        $region132: #{tpu_custom_call.1} parent=111 // pred_fallthru
          _
        %v1124 = vld [vmem:[#allocation2] sm:$0xff]
        %v1125 = vld [vmem:[#allocation2 + $0x8] sm:$0xff]
        %v1126 = vld [vmem:[%s801] sm:$0xff]
        %v1127 = vld [vmem:[%s801 + $0x8] sm:$0xf]
        %v1128 = vld [vmem:[%s801 + $0xc] sm:$0xff]
        %v1129 = vld [vmem:[%s801 + $0x14] sm:$0xf]
        %v1130 = vld [vmem:[%s801 + $0x18] sm:$0xff]
        %v1131 = vld [vmem:[%s801 + $0x20] sm:$0xf]
        %v1132 = vld [vmem:[%s801 + $0x24] sm:$0xff]
        %v1133 = vld [vmem:[%s801 + $0x2c] sm:$0xf]
        %v1134 = vld [vmem:[%s801 + $0x30] sm:$0xff]
        %v1135 = vld [vmem:[%s801 + $0x38] sm:$0xf]
        %v1136 = vld [vmem:[%s801 + $0x3c] sm:$0xff]
        %v1137 = vld [vmem:[%s801 + $0x44] sm:$0xf]
        %v1138 = vld [vmem:[%s801 + $0x48] sm:$0xff]
        %v1139 = vld [vmem:[%s801 + $0x50] sm:$0xf]
        %v1140 = vld [vmem:[%s801 + $0x54] sm:$0xff]
        %v1141 = vld [vmem:[%s801 + $0x5c] sm:$0xf]
        %v1142 = vld [vmem:[%s801 + $0x60] sm:$0xff]
        %v1143 = vld [vmem:[%s801 + $0x68] sm:$0xf]
        %v1144 = vld [vmem:[%s801 + $0x6c] sm:$0xff]
        %v1145 = vld [vmem:[%s801 + $0x74] sm:$0xf]
        %v1146 = vld [vmem:[%s801 + $0x78] sm:$0xff]
        %v1147 = vld [vmem:[%s801 + $0x80] sm:$0xf]
        %v1148 = vld [vmem:[%s801 + $0x84] sm:$0xff]
        %v1149 = vld [vmem:[%s801 + $0x8c] sm:$0xf]
        %v1150 = vld [vmem:[%s801 + $0x90] sm:$0xff]
        %v1151 = vld [vmem:[%s801 + $0x98] sm:$0xf]
        %v1152 = vld [vmem:[%s801 + $0x9c] sm:$0xff]
        %v1153 = vld [vmem:[%s801 + $0xa4] sm:$0xf]
        %v1154 = vld [vmem:[%s801 + $0xa8] sm:$0xff]
        %v1155 = vld [vmem:[%s801 + $0xb0] sm:$0xf]
        %v1156 = vld [vmem:[%s801 + $0xb4] sm:$0xff]
        %v1157 = vld [vmem:[%s801 + $0xbc] sm:$0xf]
        %v1158 = vld [vmem:[%s930] sm:$0x7]
        %v1159 = vunpack.c.l.bf16 %v1158
        %v1161 = vlaneseq
        %v1162 = vshrl.u32 %v1161, 7
        %v1163 = vsub.s32 0, %v1162
        %v1164 = vrot.slane %v1159, %v1163
        %v1165 = vlaneseq
        %v1166 = vshrl.u32 %v1165, 7
        %v1167 = vsub.s32 2, %v1166
        %v1168 = vrot.slane %v1159, %v1167
        %v1169 = vlaneseq
        %v1170 = vshrl.u32 %v1169, 7
        %v1171 = vsub.s32 4, %v1170
        %v1172 = vrot.slane %v1159, %v1171
        %v1176 = vlaneseq
        %v1177 = vshrl.u32 %v1176, 7
        %v1178 = vsub.s32 0, %v1177
        %v1179 = vrot.slane %v1164, %v1178
        %v1180 = vlaneseq
        %v1181 = vshrl.u32 %v1180, 7
        %v1182 = vsub.s32 0, %v1181
        %v1183 = vrot.slane %v1168, %v1182
        %v1184 = vlaneseq
        %v1185 = vshrl.u32 %v1184, 7
        %v1186 = vsub.s32 0, %v1185
        %v1187 = vrot.slane %v1172, %v1186
        %v1220 = vunpack.c.l.b16 %v1126
        %v1221 = vunpack.c.h.b16 %v1126
        %v1222 = vunpack.c.l.b16 %v1127
        %v1223 = vunpack.c.l.b16 %v1128
        %v1224 = vunpack.c.h.b16 %v1128
        %v1225 = vunpack.c.l.b16 %v1129
        %v1226 = vunpack.c.l.b16 %v1130
        %v1227 = vunpack.c.h.b16 %v1130
        %v1228 = vunpack.c.l.b16 %v1131
        %v1229 = vunpack.c.l.b16 %v1132
        %v1230 = vunpack.c.h.b16 %v1132
        %v1231 = vunpack.c.l.b16 %v1133
        %v1232 = vunpack.c.l.b16 %v1134
        %v1233 = vunpack.c.h.b16 %v1134
        %v1234 = vunpack.c.l.b16 %v1135
        %v1235 = vunpack.c.l.b16 %v1136
        %v1236 = vunpack.c.h.b16 %v1136
        %v1237 = vunpack.c.l.b16 %v1137
        %v1238 = vunpack.c.l.b16 %v1138
        %v1239 = vunpack.c.h.b16 %v1138
        %v1240 = vunpack.c.l.b16 %v1139
        %v1241 = vunpack.c.l.b16 %v1140
        %v1242 = vunpack.c.h.b16 %v1140
        %v1243 = vunpack.c.l.b16 %v1141
        %v1244 = vunpack.c.l.b16 %v1142
        %v1245 = vunpack.c.h.b16 %v1142
        %v1246 = vunpack.c.l.b16 %v1143
        %v1247 = vunpack.c.l.b16 %v1144
        %v1248 = vunpack.c.h.b16 %v1144
        %v1249 = vunpack.c.l.b16 %v1145
        %v1250 = vunpack.c.l.b16 %v1146
        %v1251 = vunpack.c.h.b16 %v1146
        %v1252 = vunpack.c.l.b16 %v1147
        %v1253 = vunpack.c.l.b16 %v1148
        %v1254 = vunpack.c.h.b16 %v1148
        %v1255 = vunpack.c.l.b16 %v1149
        %v1256 = vunpack.c.l.b16 %v1150
        %v1257 = vunpack.c.h.b16 %v1150
        %v1258 = vunpack.c.l.b16 %v1151
        %v1259 = vunpack.c.l.b16 %v1152
        %v1260 = vunpack.c.h.b16 %v1152
        %v1261 = vunpack.c.l.b16 %v1153
        %v1262 = vunpack.c.l.b16 %v1154
        %v1263 = vunpack.c.h.b16 %v1154
        %v1264 = vunpack.c.l.b16 %v1155
        %v1265 = vunpack.c.l.b16 %v1156
        %v1266 = vunpack.c.h.b16 %v1156
        %v1267 = vunpack.c.l.b16 %v1157
        %v1268 = vpack.c.b16 %v1223, %v1220
        %v1269 = vpack.c.b16 %v1224, %v1221
        %v1270 = vpack.c.b16 %v1225, %v1222
        %v1271 = vpack.c.b16 %v1229, %v1226
        %v1272 = vpack.c.b16 %v1230, %v1227
        %v1273 = vpack.c.b16 %v1231, %v1228
        %v1274 = vpack.c.b16 %v1235, %v1232
        %v1275 = vpack.c.b16 %v1236, %v1233
        %v1276 = vpack.c.b16 %v1237, %v1234
        %v1277 = vpack.c.b16 %v1241, %v1238
        %v1278 = vpack.c.b16 %v1242, %v1239
        %v1279 = vpack.c.b16 %v1243, %v1240
        %v1280 = vpack.c.b16 %v1247, %v1244
        %v1281 = vpack.c.b16 %v1248, %v1245
        %v1282 = vpack.c.b16 %v1249, %v1246
        %v1283 = vpack.c.b16 %v1253, %v1250
        %v1284 = vpack.c.b16 %v1254, %v1251
        %v1285 = vpack.c.b16 %v1255, %v1252
        %v1286 = vpack.c.b16 %v1259, %v1256
        %v1287 = vpack.c.b16 %v1260, %v1257
        %v1288 = vpack.c.b16 %v1261, %v1258
        %v1289 = vpack.c.b16 %v1265, %v1262
        %v1290 = vpack.c.b16 %v1266, %v1263
        %v1291 = vpack.c.b16 %v1267, %v1264
        %1316 = vmatprep.subr.bf16.mxu0 %v1269
        %1317 = vmatpush1.bf16.msra.mxu0 %v1268
        %1318 = vmatprep.subr.bf16.mxu0 %v1272
        %1319 = vmatpush1.bf16.msra.mxu0 %v1271
        %1320 = vmatprep.subr.bf16.mxu0 %v1275
        %1321 = vmatpush1.bf16.msra.mxu0 %v1274
        %1322 = vmatprep.subr.bf16.mxu0 %v1278
        %1323 = vmatpush1.bf16.msra.mxu0 %v1277
        %1324 = vmatprep.subr.bf16.mxu0 %v1281
        %1325 = vmatpush1.bf16.msra.mxu0 %v1280
        %1326 = vmatprep.subr.bf16.mxu0 %v1284
        %1327 = vmatpush1.bf16.msra.mxu0 %v1283
        %1328 = vmatprep.subr.bf16.mxu0 %v1287
        %1329 = vmatpush1.bf16.msra.mxu0 %v1286
        %1330 = vmatprep.subr.bf16.mxu0 %v1290
        %1331 = vmatpush1.bf16.msra.mxu0 %v1289
        %1332 = vmatprep.subr.bf16.mxu0 0
        %1333 = vmatpush1.bf16.msra.mxu0 0
        %1334 = vmatprep.subr.bf16.mxu0 0
        %1335 = vmatpush1.bf16.msra.mxu0 0
        %1336 = vmatprep.subr.bf16.mxu0 0
        %1337 = vmatpush1.bf16.msra.mxu0 0
        %1338 = vmatprep.subr.bf16.mxu0 0
        %1339 = vmatpush1.bf16.msra.mxu0 0
        %1340 = vmatprep.subr.bf16.mxu0 0
        %1341 = vmatpush1.bf16.msra.mxu0 0
        %1342 = vmatprep.subr.bf16.mxu0 0
        %1343 = vmatpush1.bf16.msra.mxu0 0
        %1344 = vmatprep.subr.bf16.mxu0 0
        %1345 = vmatpush1.bf16.msra.mxu0 0
        %1346 = vmatprep.subr.bf16.mxu0 0
        %1347 = vmatpush1.bf16.msra.mxu0 0
        %1348 = vmatprep.mubr.f32.mxu0 0.0
        %1349 = vmatmul.mubr.f32.gmra.mrb[0].mxu0 %v1124
        %v1350 = vpop.f32.mrb[0].mxu0
        %v1351 = vadd.f32 %v1179, %v1350
        %v1352 = vpop.f32.mrb[0].mxu0
        %v1353 = vadd.f32 %v1183, %v1352
        %1354 = vmatprep.mubr.f32.mxu0 0.0
        %1355 = vmatmul.mubr.f32.gmra.mrb[0].mxu0 %v1125
        %v1356 = vpop.f32.mrb[0].mxu0
        %v1357 = vadd.f32 %v1179, %v1356
        %v1358 = vpop.f32.mrb[0].mxu0
        %v1359 = vadd.f32 %v1183, %v1358
        %1360 = vdwg.mxu0
        %1361 = vmatprep.subr.bf16.mxu0 0
        %1362 = vmatpush1.bf16.msra.mxu0 %v1270
        %1363 = vmatprep.subr.bf16.mxu0 0
        %1364 = vmatpush1.bf16.msra.mxu0 %v1273
        %1365 = vmatprep.subr.bf16.mxu0 0
        %1366 = vmatpush1.bf16.msra.mxu0 %v1276
        %1367 = vmatprep.subr.bf16.mxu0 0
        %1368 = vmatpush1.bf16.msra.mxu0 %v1279
        %1369 = vmatprep.subr.bf16.mxu0 0
        %1370 = vmatpush1.bf16.msra.mxu0 %v1282
        %1371 = vmatprep.subr.bf16.mxu0 0
        %1372 = vmatpush1.bf16.msra.mxu0 %v1285
        %1373 = vmatprep.subr.bf16.mxu0 0
        %1374 = vmatpush1.bf16.msra.mxu0 %v1288
        %1375 = vmatprep.subr.bf16.mxu0 0
        %1376 = vmatpush1.bf16.msra.mxu0 %v1291
        %1377 = vmatprep.subr.bf16.mxu0 0
        %1378 = vmatpush1.bf16.msra.mxu0 0
        %1379 = vmatprep.subr.bf16.mxu0 0
        %1380 = vmatpush1.bf16.msra.mxu0 0
        %1381 = vmatprep.subr.bf16.mxu0 0
        %1382 = vmatpush1.bf16.msra.mxu0 0
        %1383 = vmatprep.subr.bf16.mxu0 0
        %1384 = vmatpush1.bf16.msra.mxu0 0
        %1385 = vmatprep.subr.bf16.mxu0 0
        %1386 = vmatpush1.bf16.msra.mxu0 0
        %1387 = vmatprep.subr.bf16.mxu0 0
        %1388 = vmatpush1.bf16.msra.mxu0 0
        %1389 = vmatprep.subr.bf16.mxu0 0
        %1390 = vmatpush1.bf16.msra.mxu0 0
        %1391 = vmatprep.subr.bf16.mxu0 0
        %1392 = vmatpush1.bf16.msra.mxu0 0
        %1393 = vmatprep.mubr.f32.mxu0 0.0
        %1394 = vmatmul.mubr.f32.gmra.mrb[0].mxu0 %v1124
        %v1395 = vpop.f32.mrb[0].mxu0
        %v1396 = vadd.f32 %v1187, %v1395
        %v1397 = vpop.f32.mrb[0].mxu0
        %1398 = vmatprep.mubr.f32.mxu0 0.0
        %1399 = vmatmul.mubr.f32.gmra.mrb[0].mxu0 %v1125
        %v1400 = vpop.f32.mrb[0].mxu0
        %v1401 = vadd.f32 %v1187, %v1400
        %v1402 = vpop.f32.mrb[0].mxu0
        %1403 = vdwg.mxu0
        %v1404 = vld [vmem:[%s2] sm:$0xff]
        %v1405 = vld [vmem:[%s2 + $0x8] sm:$0xff]
        %vm1406 = vcmask 261120
        %v1408 = vsel %vm1406, %v1351, 0
        %v1411 = vsel %vm1406, %v1357, 0
        %v1414 = vsel %vm1406, %v1353, 0
        %v1417 = vsel %vm1406, %v1359, 0
        %1419 = vmatprep.subr.mxu0 0.0
        %1420 = vmatpush1.xpose.msra.mxu0 %v1414
        %1421 = vmatprep.subr.mxu0 0.0
        %1422 = vmatpush1.xpose.msra.mxu0 %v1417
        %1423 = vmatprep.subr.mxu0 0.0
        %1424 = vmatpush1.xpose.msra.mxu0 0.0
        %1425 = vmatprep.subr.mxu0 0.0
        %1426 = vmatpush1.xpose.msra.mxu0 0.0
        %1427 = vmatprep.subr.mxu0 0.0
        %1428 = vmatpush1.xpose.msra.mxu0 0.0
        %1429 = vmatprep.subr.mxu0 0.0
        %1430 = vmatpush1.xpose.msra.mxu0 0.0
        %1431 = vmatprep.subr.mxu0 0.0
        %1432 = vmatpush1.xpose.msra.mxu0 0.0
        %1433 = vmatprep.subr.mxu0 0.0
        %1434 = vmatpush1.xpose.msra.mxu0 0.0
        %1435 = vmatprep.subr.mxu0 0.0
        %1436 = vmatpush1.xpose.msra.mxu0 0.0
        %1437 = vmatprep.subr.mxu0 0.0
        %1438 = vmatpush1.xpose.msra.mxu0 0.0
        %1439 = vmatprep.subr.mxu0 0.0
        %1440 = vmatpush1.xpose.msra.mxu0 0.0
        %1441 = vmatprep.subr.mxu0 0.0
        %1442 = vmatpush1.xpose.msra.mxu0 0.0
        %1443 = vmatprep.subr.mxu0 0.0
        %1444 = vmatpush1.xpose.msra.mxu0 0.0
        %1445 = vmatprep.subr.mxu0 0.0
        %1446 = vmatpush1.xpose.msra.mxu0 0.0
        %1447 = vmatprep.subr.mxu0 0.0
        %1448 = vmatpush1.xpose.msra.mxu0 0.0
        %1449 = vmatprep.subr.mxu0 0.0
        %1450 = vmatpush1.xpose.msra.mxu0 0.0
        %1451 = vmatprep.subr.mxu0 0.0
        %1452 = vmatpush1.xpose.msra.mxu0 0.0
        %1453 = vmatprep.subr.mxu0 0.0
        %1454 = vmatpush1.xpose.msra.mxu0 0.0
        %1455 = vmatprep.subr.mxu0 0.0
        %1456 = vmatpush1.xpose.msra.mxu0 0.0
        %1457 = vmatprep.subr.mxu0 0.0
        %1458 = vmatpush1.xpose.msra.mxu0 0.0
        %1459 = vmatprep.subr.mxu0 0.0
        %1460 = vmatpush1.xpose.msra.mxu0 0.0
        %1461 = vmatprep.subr.mxu0 0.0
        %1462 = vmatpush1.xpose.msra.mxu0 0.0
        %1463 = vmatprep.subr.mxu0 0.0
        %1464 = vmatpush1.xpose.msra.mxu0 0.0
        %1465 = vmatprep.subr.mxu0 0.0
        %1466 = vmatpush1.xpose.msra.mxu0 0.0
        %1467 = vmatprep.subr.mxu0 0.0
        %1468 = vmatpush1.xpose.msra.mxu0 0.0
        %1469 = vmatprep.subr.mxu0 0.0
        %1470 = vmatpush1.xpose.msra.mxu0 0.0
        %1471 = vmatprep.subr.mxu0 0.0
        %1472 = vmatpush1.xpose.msra.mxu0 0.0
        %1473 = vmatprep.subr.mxu0 0.0
        %1474 = vmatpush1.xpose.msra.mxu0 0.0
        %1475 = vmatprep.subr.mxu0 0.0
        %1476 = vmatpush1.xpose.msra.mxu0 0.0
        %1477 = vmatprep.subr.mxu0 0.0
        %1478 = vmatpush1.xpose.msra.mxu0 0.0
        %1479 = vmatprep.subr.mxu0 0.0
        %1480 = vmatpush1.xpose.msra.mxu0 0.0
        %1481 = vmatprep.subr.mxu0 0.0
        %1482 = vmatpush1.xpose.msra.mxu0 0.0
        %1483 = vmatprep.mubr.f32.mxu0 0.0
        %1484 = vmatmul.mubr.f32.gmra.mrb[0].mxu0 %v1408
        %v1485 = vpop.f32.mrb[0].mxu0
        %v1486 = vadd.f32 %v1404, %v1485
        %v1487 = vpop.f32.mrb[0].mxu0
        %1488 = vmatprep.mubr.f32.mxu0 0.0
        %1489 = vmatmul.mubr.f32.gmra.mrb[0].mxu0 %v1411
        %v1490 = vpop.f32.mrb[0].mxu0
        %v1491 = vadd.f32 %v1405, %v1490
        %v1492 = vpop.f32.mrb[0].mxu0
        %1493 = vdwg.mxu0
        %vm1494 = vcmask 130048
        %v1495 = vsel %vm1494, %v1486, -inf
        %1496 = vmax.xlane.f32.xlu0 %v1495
        %v1497 = vpop.xlane.xlu0 %1496
        %v1498 = vsel %vm1494, %v1491, -inf
        %1499 = vmax.xlane.f32.xlu0 %v1498
        %v1500 = vpop.xlane.xlu0 %1499
        %v1501 = vsub.f32 %v1486, %v1497
        %v1502 = vsub.f32 %v1491, %v1500
        %v1503 = vmul.f32 %v1501, 1.442695
        %v1504 = vpow.pop %v1503
        %v1505 = vmul.f32 %v1502, 1.442695
        %v1506 = vpow.pop %v1505
        %v1507 = vsel %vm1494, %v1504, 0.0
        %1508 = vadd.xlane.f32.xlu0 %v1507
        %v1509 = vpop.xlane.xlu0 %1508
        %v1510 = vsel %vm1494, %v1506, 0.0
        %1511 = vadd.xlane.f32.xlu0 %v1510
        %v1512 = vpop.xlane.xlu0 %1511
        %v1513 = vrcp.pop %v1509
        %v1514 = vmul.f32 %v1504, %v1513
        %v1515 = vrcp.pop %v1512
        %v1516 = vmul.f32 %v1506, %v1515
        %v1518 = vsel %vm1494, %v1514, 0
        %v1521 = vsel %vm1494, %v1516, 0
        %1523 = vmatprep.subr.mxu0 0.0
        %1524 = vmatpush1.msra.mxu0 %v1396
        %1525 = vmatprep.subr.mxu0 0.0
        %1526 = vmatpush1.msra.mxu0 %v1401
        %1527 = vmatprep.subr.mxu0 0.0
        %1528 = vmatpush1.msra.mxu0 0.0
        %1529 = vmatprep.subr.mxu0 0.0
        %1530 = vmatpush1.msra.mxu0 0.0
        %1531 = vmatprep.subr.mxu0 0.0
        %1532 = vmatpush1.msra.mxu0 0.0
        %1533 = vmatprep.subr.mxu0 0.0
        %1534 = vmatpush1.msra.mxu0 0.0
        %1535 = vmatprep.subr.mxu0 0.0
        %1536 = vmatpush1.msra.mxu0 0.0
        %1537 = vmatprep.subr.mxu0 0.0
        %1538 = vmatpush1.msra.mxu0 0.0
        %1539 = vmatprep.subr.mxu0 0.0
        %1540 = vmatpush1.msra.mxu0 0.0
        %1541 = vmatprep.subr.mxu0 0.0
        %1542 = vmatpush1.msra.mxu0 0.0
        %1543 = vmatprep.subr.mxu0 0.0
        %1544 = vmatpush1.msra.mxu0 0.0
        %1545 = vmatprep.subr.mxu0 0.0
        %1546 = vmatpush1.msra.mxu0 0.0
        %1547 = vmatprep.subr.mxu0 0.0
        %1548 = vmatpush1.msra.mxu0 0.0
        %1549 = vmatprep.subr.mxu0 0.0
        %1550 = vmatpush1.msra.mxu0 0.0
        %1551 = vmatprep.subr.mxu0 0.0
        %1552 = vmatpush1.msra.mxu0 0.0
        %1553 = vmatprep.subr.mxu0 0.0
        %1554 = vmatpush1.msra.mxu0 0.0
        %1555 = vmatprep.subr.mxu0 0.0
        %1556 = vmatpush1.msra.mxu0 0.0
        %1557 = vmatprep.subr.mxu0 0.0
        %1558 = vmatpush1.msra.mxu0 0.0
        %1559 = vmatprep.subr.mxu0 0.0
        %1560 = vmatpush1.msra.mxu0 0.0
        %1561 = vmatprep.subr.mxu0 0.0
        %1562 = vmatpush1.msra.mxu0 0.0
        %1563 = vmatprep.subr.mxu0 0.0
        %1564 = vmatpush1.msra.mxu0 0.0
        %1565 = vmatprep.subr.mxu0 0.0
        %1566 = vmatpush1.msra.mxu0 0.0
        %1567 = vmatprep.subr.mxu0 0.0
        %1568 = vmatpush1.msra.mxu0 0.0
        %1569 = vmatprep.subr.mxu0 0.0
        %1570 = vmatpush1.msra.mxu0 0.0
        %1571 = vmatprep.subr.mxu0 0.0
        %1572 = vmatpush1.msra.mxu0 0.0
        %1573 = vmatprep.subr.mxu0 0.0
        %1574 = vmatpush1.msra.mxu0 0.0
        %1575 = vmatprep.subr.mxu0 0.0
        %1576 = vmatpush1.msra.mxu0 0.0
        %1577 = vmatprep.subr.mxu0 0.0
        %1578 = vmatpush1.msra.mxu0 0.0
        %1579 = vmatprep.subr.mxu0 0.0
        %1580 = vmatpush1.msra.mxu0 0.0
        %1581 = vmatprep.subr.mxu0 0.0
        %1582 = vmatpush1.msra.mxu0 0.0
        %1583 = vmatprep.subr.mxu0 0.0
        %1584 = vmatpush1.msra.mxu0 0.0
        %1585 = vmatprep.subr.mxu0 0.0
        %1586 = vmatpush1.msra.mxu0 0.0
        %1587 = vmatprep.mubr.f32.mxu0 0.0
        %1588 = vmatmul.mubr.f32.gmra.mrb[0].mxu0 %v1518
        %v1589 = vpop.f32.mrb[0].mxu0
        %v1590 = vadd.f32 0.0, %v1589
        %v1591 = vpop.f32.mrb[0].mxu0
        %1592 = vmatprep.mubr.f32.mxu0 0.0
        %1593 = vmatmul.mubr.f32.gmra.mrb[0].mxu0 %v1521
        %v1594 = vpop.f32.mrb[0].mxu0
        %v1595 = vadd.f32 0.0, %v1594
        %v1596 = vpop.f32.mrb[0].mxu0
        %1597 = vdwg.mxu0
        %s1598 = scalar_lea.vmem %s2, 16
        %v1599 = vld [vmem:[%s1598] sm:$0xff]
        %v1600 = vld [vmem:[%s1598 + $0x8] sm:$0xff]
        %1601 = vrot.lane.b32.xlu0 %v1351, 96
        %v1602 = vpop.permute.xlu0 %1601
        %1603 = vrot.lane.b32.xlu0 %v1357, 96
        %v1604 = vpop.permute.xlu0 %1603
        %1605 = vrot.lane.b32.xlu0 %v1353, 96
        %v1606 = vpop.permute.xlu0 %1605
        %1607 = vrot.lane.b32.xlu0 %v1359, 96
        %v1608 = vpop.permute.xlu0 %1607
        %v1609 = vsel %vm1406, %v1602, 0
        %v1611 = vsel %vm1406, %v1604, 0
        %v1613 = vsel %vm1406, %v1606, 0
        %v1615 = vsel %vm1406, %v1608, 0
        %1617 = vmatprep.subr.mxu0 0.0
        %1618 = vmatpush1.xpose.msra.mxu0 %v1613
        %1619 = vmatprep.subr.mxu0 0.0
        %1620 = vmatpush1.xpose.msra.mxu0 %v1615
        %1621 = vmatprep.subr.mxu0 0.0
        %1622 = vmatpush1.xpose.msra.mxu0 0.0
        %1623 = vmatprep.subr.mxu0 0.0
        %1624 = vmatpush1.xpose.msra.mxu0 0.0
        %1625 = vmatprep.subr.mxu0 0.0
        %1626 = vmatpush1.xpose.msra.mxu0 0.0
        %1627 = vmatprep.subr.mxu0 0.0
        %1628 = vmatpush1.xpose.msra.mxu0 0.0
        %1629 = vmatprep.subr.mxu0 0.0
        %1630 = vmatpush1.xpose.msra.mxu0 0.0
        %1631 = vmatprep.subr.mxu0 0.0
        %1632 = vmatpush1.xpose.msra.mxu0 0.0
        %1633 = vmatprep.subr.mxu0 0.0
        %1634 = vmatpush1.xpose.msra.mxu0 0.0
        %1635 = vmatprep.subr.mxu0 0.0
        %1636 = vmatpush1.xpose.msra.mxu0 0.0
        %1637 = vmatprep.subr.mxu0 0.0
        %1638 = vmatpush1.xpose.msra.mxu0 0.0
        %1639 = vmatprep.subr.mxu0 0.0
        %1640 = vmatpush1.xpose.msra.mxu0 0.0
        %1641 = vmatprep.subr.mxu0 0.0
        %1642 = vmatpush1.xpose.msra.mxu0 0.0
        %1643 = vmatprep.subr.mxu0 0.0
        %1644 = vmatpush1.xpose.msra.mxu0 0.0
        %1645 = vmatprep.subr.mxu0 0.0
        %1646 = vmatpush1.xpose.msra.mxu0 0.0
        %1647 = vmatprep.subr.mxu0 0.0
        %1648 = vmatpush1.xpose.msra.mxu0 0.0
        %1649 = vmatprep.subr.mxu0 0.0
        %1650 = vmatpush1.xpose.msra.mxu0 0.0
        %1651 = vmatprep.subr.mxu0 0.0
        %1652 = vmatpush1.xpose.msra.mxu0 0.0
        %1653 = vmatprep.subr.mxu0 0.0
        %1654 = vmatpush1.xpose.msra.mxu0 0.0
        %1655 = vmatprep.subr.mxu0 0.0
        %1656 = vmatpush1.xpose.msra.mxu0 0.0
        %1657 = vmatprep.subr.mxu0 0.0
        %1658 = vmatpush1.xpose.msra.mxu0 0.0
        %1659 = vmatprep.subr.mxu0 0.0
        %1660 = vmatpush1.xpose.msra.mxu0 0.0
        %1661 = vmatprep.subr.mxu0 0.0
        %1662 = vmatpush1.xpose.msra.mxu0 0.0
        %1663 = vmatprep.subr.mxu0 0.0
        %1664 = vmatpush1.xpose.msra.mxu0 0.0
        %1665 = vmatprep.subr.mxu0 0.0
        %1666 = vmatpush1.xpose.msra.mxu0 0.0
        %1667 = vmatprep.subr.mxu0 0.0
        %1668 = vmatpush1.xpose.msra.mxu0 0.0
        %1669 = vmatprep.subr.mxu0 0.0
        %1670 = vmatpush1.xpose.msra.mxu0 0.0
        %1671 = vmatprep.subr.mxu0 0.0
        %1672 = vmatpush1.xpose.msra.mxu0 0.0
        %1673 = vmatprep.subr.mxu0 0.0
        %1674 = vmatpush1.xpose.msra.mxu0 0.0
        %1675 = vmatprep.subr.mxu0 0.0
        %1676 = vmatpush1.xpose.msra.mxu0 0.0
        %1677 = vmatprep.subr.mxu0 0.0
        %1678 = vmatpush1.xpose.msra.mxu0 0.0
        %1679 = vmatprep.subr.mxu0 0.0
        %1680 = vmatpush1.xpose.msra.mxu0 0.0
        %1681 = vmatprep.mubr.f32.mxu0 0.0
        %1682 = vmatmul.mubr.f32.gmra.mrb[0].mxu0 %v1609
        %v1683 = vpop.f32.mrb[0].mxu0
        %v1684 = vadd.f32 %v1599, %v1683
        %v1685 = vpop.f32.mrb[0].mxu0
        %1686 = vmatprep.mubr.f32.mxu0 0.0
        %1687 = vmatmul.mubr.f32.gmra.mrb[0].mxu0 %v1611
        %v1688 = vpop.f32.mrb[0].mxu0
        %v1689 = vadd.f32 %v1600, %v1688
        %v1690 = vpop.f32.mrb[0].mxu0
        %1691 = vdwg.mxu0
        %v1692 = vsel %vm1494, %v1684, -inf
        %1693 = vmax.xlane.f32.xlu0 %v1692
        %v1694 = vpop.xlane.xlu0 %1693
        %v1695 = vsel %vm1494, %v1689, -inf
        %1696 = vmax.xlane.f32.xlu0 %v1695
        %v1697 = vpop.xlane.xlu0 %1696
        %v1698 = vsub.f32 %v1684, %v1694
        %v1699 = vsub.f32 %v1689, %v1697
        %v1700 = vmul.f32 %v1698, 1.442695
        %v1701 = vpow.pop %v1700
        %v1702 = vmul.f32 %v1699, 1.442695
        %v1703 = vpow.pop %v1702
        %v1704 = vsel %vm1494, %v1701, 0.0
        %1705 = vadd.xlane.f32.xlu0 %v1704
        %v1706 = vpop.xlane.xlu0 %1705
        %v1707 = vsel %vm1494, %v1703, 0.0
        %1708 = vadd.xlane.f32.xlu0 %v1707
        %v1709 = vpop.xlane.xlu0 %1708
        %v1710 = vrcp.pop %v1706
        %v1711 = vmul.f32 %v1701, %v1710
        %v1712 = vrcp.pop %v1709
        %v1713 = vmul.f32 %v1703, %v1712
        %1716 = vrot.lane.b32.xlu0 %v1396, 96
        %v1717 = vpop.permute.xlu0 %1716
        %1718 = vrot.lane.b32.xlu0 %v1401, 96
        %v1719 = vpop.permute.xlu0 %1718
        %v1723 = vsel %vm1494, %v1711, 0
        %v1726 = vsel %vm1494, %v1713, 0
        %1728 = vmatprep.subr.mxu0 0.0
        %1729 = vmatpush1.msra.mxu0 %v1717
        %1730 = vmatprep.subr.mxu0 0.0
        %1731 = vmatpush1.msra.mxu0 %v1719
        %1732 = vmatprep.subr.mxu0 0.0
        %1733 = vmatpush1.msra.mxu0 0.0
        %1734 = vmatprep.subr.mxu0 0.0
        %1735 = vmatpush1.msra.mxu0 0.0
        %1736 = vmatprep.subr.mxu0 0.0
        %1737 = vmatpush1.msra.mxu0 0.0
        %1738 = vmatprep.subr.mxu0 0.0
        %1739 = vmatpush1.msra.mxu0 0.0
        %1740 = vmatprep.subr.mxu0 0.0
        %1741 = vmatpush1.msra.mxu0 0.0
        %1742 = vmatprep.subr.mxu0 0.0
        %1743 = vmatpush1.msra.mxu0 0.0
        %1744 = vmatprep.subr.mxu0 0.0
        %1745 = vmatpush1.msra.mxu0 0.0
        %1746 = vmatprep.subr.mxu0 0.0
        %1747 = vmatpush1.msra.mxu0 0.0
        %1748 = vmatprep.subr.mxu0 0.0
        %1749 = vmatpush1.msra.mxu0 0.0
        %1750 = vmatprep.subr.mxu0 0.0
        %1751 = vmatpush1.msra.mxu0 0.0
        %1752 = vmatprep.subr.mxu0 0.0
        %1753 = vmatpush1.msra.mxu0 0.0
        %1754 = vmatprep.subr.mxu0 0.0
        %1755 = vmatpush1.msra.mxu0 0.0
        %1756 = vmatprep.subr.mxu0 0.0
        %1757 = vmatpush1.msra.mxu0 0.0
        %1758 = vmatprep.subr.mxu0 0.0
        %1759 = vmatpush1.msra.mxu0 0.0
        %1760 = vmatprep.subr.mxu0 0.0
        %1761 = vmatpush1.msra.mxu0 0.0
        %1762 = vmatprep.subr.mxu0 0.0
        %1763 = vmatpush1.msra.mxu0 0.0
        %1764 = vmatprep.subr.mxu0 0.0
        %1765 = vmatpush1.msra.mxu0 0.0
        %1766 = vmatprep.subr.mxu0 0.0
        %1767 = vmatpush1.msra.mxu0 0.0
        %1768 = vmatprep.subr.mxu0 0.0
        %1769 = vmatpush1.msra.mxu0 0.0
        %1770 = vmatprep.subr.mxu0 0.0
        %1771 = vmatpush1.msra.mxu0 0.0
        %1772 = vmatprep.subr.mxu0 0.0
        %1773 = vmatpush1.msra.mxu0 0.0
        %1774 = vmatprep.subr.mxu0 0.0
        %1775 = vmatpush1.msra.mxu0 0.0
        %1776 = vmatprep.subr.mxu0 0.0
        %1777 = vmatpush1.msra.mxu0 0.0
        %1778 = vmatprep.subr.mxu0 0.0
        %1779 = vmatpush1.msra.mxu0 0.0
        %1780 = vmatprep.subr.mxu0 0.0
        %1781 = vmatpush1.msra.mxu0 0.0
        %1782 = vmatprep.subr.mxu0 0.0
        %1783 = vmatpush1.msra.mxu0 0.0
        %1784 = vmatprep.subr.mxu0 0.0
        %1785 = vmatpush1.msra.mxu0 0.0
        %1786 = vmatprep.subr.mxu0 0.0
        %1787 = vmatpush1.msra.mxu0 0.0
        %1788 = vmatprep.subr.mxu0 0.0
        %1789 = vmatpush1.msra.mxu0 0.0
        %1790 = vmatprep.subr.mxu0 0.0
        %1791 = vmatpush1.msra.mxu0 0.0
        %1792 = vmatprep.mubr.f32.mxu0 0.0
        %1793 = vmatmul.mubr.f32.gmra.mrb[0].mxu0 %v1723
        %v1794 = vpop.f32.mrb[0].mxu0
        %v1795 = vadd.f32 0.0, %v1794
        %v1796 = vpop.f32.mrb[0].mxu0
        %1797 = vmatprep.mubr.f32.mxu0 0.0
        %1798 = vmatmul.mubr.f32.gmra.mrb[0].mxu0 %v1726
        %v1799 = vpop.f32.mrb[0].mxu0
        %v1800 = vadd.f32 0.0, %v1799
        %v1801 = vpop.f32.mrb[0].mxu0
        %1802 = vdwg.mxu0
        %s1803 = scalar_lea.vmem %s2, 32
        %v1804 = vld [vmem:[%s1803] sm:$0xff]
        %v1805 = vld [vmem:[%s1803 + $0x8] sm:$0xff]
        %1806 = vrot.lane.b32.xlu0 %v1351, 64
        %v1807 = vpop.permute.xlu0 %1806
        %1808 = vrot.lane.b32.xlu0 %v1357, 64
        %v1809 = vpop.permute.xlu0 %1808
        %1810 = vrot.lane.b32.xlu0 %v1353, 64
        %v1811 = vpop.permute.xlu0 %1810
        %1812 = vrot.lane.b32.xlu0 %v1359, 64
        %v1813 = vpop.permute.xlu0 %1812
        %v1814 = vsel %vm1406, %v1807, 0
        %v1816 = vsel %vm1406, %v1809, 0
        %v1818 = vsel %vm1406, %v1811, 0
        %v1820 = vsel %vm1406, %v1813, 0
        %1822 = vmatprep.subr.mxu0 0.0
        %1823 = vmatpush1.xpose.msra.mxu0 %v1818
        %1824 = vmatprep.subr.mxu0 0.0
        %1825 = vmatpush1.xpose.msra.mxu0 %v1820
        %1826 = vmatprep.subr.mxu0 0.0
        %1827 = vmatpush1.xpose.msra.mxu0 0.0
        %1828 = vmatprep.subr.mxu0 0.0
        %1829 = vmatpush1.xpose.msra.mxu0 0.0
        %1830 = vmatprep.subr.mxu0 0.0
        %1831 = vmatpush1.xpose.msra.mxu0 0.0
        %1832 = vmatprep.subr.mxu0 0.0
        %1833 = vmatpush1.xpose.msra.mxu0 0.0
        %1834 = vmatprep.subr.mxu0 0.0
        %1835 = vmatpush1.xpose.msra.mxu0 0.0
        %1836 = vmatprep.subr.mxu0 0.0
        %1837 = vmatpush1.xpose.msra.mxu0 0.0
        %1838 = vmatprep.subr.mxu0 0.0
        %1839 = vmatpush1.xpose.msra.mxu0 0.0
        %1840 = vmatprep.subr.mxu0 0.0
        %1841 = vmatpush1.xpose.msra.mxu0 0.0
        %1842 = vmatprep.subr.mxu0 0.0
        %1843 = vmatpush1.xpose.msra.mxu0 0.0
        %1844 = vmatprep.subr.mxu0 0.0
        %1845 = vmatpush1.xpose.msra.mxu0 0.0
        %1846 = vmatprep.subr.mxu0 0.0
        %1847 = vmatpush1.xpose.msra.mxu0 0.0
        %1848 = vmatprep.subr.mxu0 0.0
        %1849 = vmatpush1.xpose.msra.mxu0 0.0
        %1850 = vmatprep.subr.mxu0 0.0
        %1851 = vmatpush1.xpose.msra.mxu0 0.0
        %1852 = vmatprep.subr.mxu0 0.0
        %1853 = vmatpush1.xpose.msra.mxu0 0.0
        %1854 = vmatprep.subr.mxu0 0.0
        %1855 = vmatpush1.xpose.msra.mxu0 0.0
        %1856 = vmatprep.subr.mxu0 0.0
        %1857 = vmatpush1.xpose.msra.mxu0 0.0
        %1858 = vmatprep.subr.mxu0 0.0
        %1859 = vmatpush1.xpose.msra.mxu0 0.0
        %1860 = vmatprep.subr.mxu0 0.0
        %1861 = vmatpush1.xpose.msra.mxu0 0.0
        %1862 = vmatprep.subr.mxu0 0.0
        %1863 = vmatpush1.xpose.msra.mxu0 0.0
        %1864 = vmatprep.subr.mxu0 0.0
        %1865 = vmatpush1.xpose.msra.mxu0 0.0
        %1866 = vmatprep.subr.mxu0 0.0
        %1867 = vmatpush1.xpose.msra.mxu0 0.0
        %1868 = vmatprep.subr.mxu0 0.0
        %1869 = vmatpush1.xpose.msra.mxu0 0.0
        %1870 = vmatprep.subr.mxu0 0.0
        %1871 = vmatpush1.xpose.msra.mxu0 0.0
        %1872 = vmatprep.subr.mxu0 0.0
        %1873 = vmatpush1.xpose.msra.mxu0 0.0
        %1874 = vmatprep.subr.mxu0 0.0
        %1875 = vmatpush1.xpose.msra.mxu0 0.0
        %1876 = vmatprep.subr.mxu0 0.0
        %1877 = vmatpush1.xpose.msra.mxu0 0.0
        %1878 = vmatprep.subr.mxu0 0.0
        %1879 = vmatpush1.xpose.msra.mxu0 0.0
        %1880 = vmatprep.subr.mxu0 0.0
        %1881 = vmatpush1.xpose.msra.mxu0 0.0
        %1882 = vmatprep.subr.mxu0 0.0
        %1883 = vmatpush1.xpose.msra.mxu0 0.0
        %1884 = vmatprep.subr.mxu0 0.0
        %1885 = vmatpush1.xpose.msra.mxu0 0.0
        %1886 = vmatprep.mubr.f32.mxu0 0.0
        %1887 = vmatmul.mubr.f32.gmra.mrb[0].mxu0 %v1814
        %v1888 = vpop.f32.mrb[0].mxu0
        %v1889 = vadd.f32 %v1804, %v1888
        %v1890 = vpop.f32.mrb[0].mxu0
        %1891 = vmatprep.mubr.f32.mxu0 0.0
        %1892 = vmatmul.mubr.f32.gmra.mrb[0].mxu0 %v1816
        %v1893 = vpop.f32.mrb[0].mxu0
        %v1894 = vadd.f32 %v1805, %v1893
        %v1895 = vpop.f32.mrb[0].mxu0
        %1896 = vdwg.mxu0
        %v1897 = vsel %vm1494, %v1889, -inf
        %1898 = vmax.xlane.f32.xlu0 %v1897
        %v1899 = vpop.xlane.xlu0 %1898
        %v1900 = vsel %vm1494, %v1894, -inf
        %1901 = vmax.xlane.f32.xlu0 %v1900
        %v1902 = vpop.xlane.xlu0 %1901
        %v1903 = vsub.f32 %v1889, %v1899
        %v1904 = vsub.f32 %v1894, %v1902
        %v1905 = vmul.f32 %v1903, 1.442695
        %v1906 = vpow.pop %v1905
        %v1907 = vmul.f32 %v1904, 1.442695
        %v1908 = vpow.pop %v1907
        %v1909 = vsel %vm1494, %v1906, 0.0
        %1910 = vadd.xlane.f32.xlu0 %v1909
        %v1911 = vpop.xlane.xlu0 %1910
        %v1912 = vsel %vm1494, %v1908, 0.0
        %1913 = vadd.xlane.f32.xlu0 %v1912
        %v1914 = vpop.xlane.xlu0 %1913
        %v1915 = vrcp.pop %v1911
        %v1916 = vmul.f32 %v1906, %v1915
        %v1917 = vrcp.pop %v1914
        %v1918 = vmul.f32 %v1908, %v1917
        %1919 = vrot.lane.b32.xlu0 %v1396, 64
        %v1920 = vpop.permute.xlu0 %1919
        %1921 = vrot.lane.b32.xlu0 %v1401, 64
        %v1922 = vpop.permute.xlu0 %1921
        %v1926 = vsel %vm1494, %v1916, 0
        %v1929 = vsel %vm1494, %v1918, 0
        %1931 = vmatprep.subr.mxu0 0.0
        %1932 = vmatpush1.msra.mxu0 %v1920
        %1933 = vmatprep.subr.mxu0 0.0
        %1934 = vmatpush1.msra.mxu0 %v1922
        %1935 = vmatprep.subr.mxu0 0.0
        %1936 = vmatpush1.msra.mxu0 0.0
        %1937 = vmatprep.subr.mxu0 0.0
        %1938 = vmatpush1.msra.mxu0 0.0
        %1939 = vmatprep.subr.mxu0 0.0
        %1940 = vmatpush1.msra.mxu0 0.0
        %1941 = vmatprep.subr.mxu0 0.0
        %1942 = vmatpush1.msra.mxu0 0.0
        %1943 = vmatprep.subr.mxu0 0.0
        %1944 = vmatpush1.msra.mxu0 0.0
        %1945 = vmatprep.subr.mxu0 0.0
        %1946 = vmatpush1.msra.mxu0 0.0
        %1947 = vmatprep.subr.mxu0 0.0
        %1948 = vmatpush1.msra.mxu0 0.0
        %1949 = vmatprep.subr.mxu0 0.0
        %1950 = vmatpush1.msra.mxu0 0.0
        %1951 = vmatprep.subr.mxu0 0.0
        %1952 = vmatpush1.msra.mxu0 0.0
        %1953 = vmatprep.subr.mxu0 0.0
        %1954 = vmatpush1.msra.mxu0 0.0
        %1955 = vmatprep.subr.mxu0 0.0
        %1956 = vmatpush1.msra.mxu0 0.0
        %1957 = vmatprep.subr.mxu0 0.0
        %1958 = vmatpush1.msra.mxu0 0.0
        %1959 = vmatprep.subr.mxu0 0.0
        %1960 = vmatpush1.msra.mxu0 0.0
        %1961 = vmatprep.subr.mxu0 0.0
        %1962 = vmatpush1.msra.mxu0 0.0
        %1963 = vmatprep.subr.mxu0 0.0
        %1964 = vmatpush1.msra.mxu0 0.0
        %1965 = vmatprep.subr.mxu0 0.0
        %1966 = vmatpush1.msra.mxu0 0.0
        %1967 = vmatprep.subr.mxu0 0.0
        %1968 = vmatpush1.msra.mxu0 0.0
        %1969 = vmatprep.subr.mxu0 0.0
        %1970 = vmatpush1.msra.mxu0 0.0
        %1971 = vmatprep.subr.mxu0 0.0
        %1972 = vmatpush1.msra.mxu0 0.0
        %1973 = vmatprep.subr.mxu0 0.0
        %1974 = vmatpush1.msra.mxu0 0.0
        %1975 = vmatprep.subr.mxu0 0.0
        %1976 = vmatpush1.msra.mxu0 0.0
        %1977 = vmatprep.subr.mxu0 0.0
        %1978 = vmatpush1.msra.mxu0 0.0
        %1979 = vmatprep.subr.mxu0 0.0
        %1980 = vmatpush1.msra.mxu0 0.0
        %1981 = vmatprep.subr.mxu0 0.0
        %1982 = vmatpush1.msra.mxu0 0.0
        %1983 = vmatprep.subr.mxu0 0.0
        %1984 = vmatpush1.msra.mxu0 0.0
        %1985 = vmatprep.subr.mxu0 0.0
        %1986 = vmatpush1.msra.mxu0 0.0
        %1987 = vmatprep.subr.mxu0 0.0
        %1988 = vmatpush1.msra.mxu0 0.0
        %1989 = vmatprep.subr.mxu0 0.0
        %1990 = vmatpush1.msra.mxu0 0.0
        %1991 = vmatprep.subr.mxu0 0.0
        %1992 = vmatpush1.msra.mxu0 0.0
        %1993 = vmatprep.subr.mxu0 0.0
        %1994 = vmatpush1.msra.mxu0 0.0
        %1995 = vmatprep.mubr.f32.mxu0 0.0
        %1996 = vmatmul.mubr.f32.gmra.mrb[0].mxu0 %v1926
        %v1997 = vpop.f32.mrb[0].mxu0
        %v1998 = vadd.f32 0.0, %v1997
        %v1999 = vpop.f32.mrb[0].mxu0
        %2000 = vmatprep.mubr.f32.mxu0 0.0
        %2001 = vmatmul.mubr.f32.gmra.mrb[0].mxu0 %v1929
        %v2002 = vpop.f32.mrb[0].mxu0
        %v2003 = vadd.f32 0.0, %v2002
        %v2004 = vpop.f32.mrb[0].mxu0
        %2005 = vdwg.mxu0
        %s2006 = scalar_lea.vmem %s2, 48
        %v2007 = vld [vmem:[%s2006] sm:$0xff]
        %v2008 = vld [vmem:[%s2006 + $0x8] sm:$0xff]
        %2009 = vrot.lane.b32.xlu0 %v1351, 32
        %v2010 = vpop.permute.xlu0 %2009
        %2011 = vrot.lane.b32.xlu0 %v1357, 32
        %v2012 = vpop.permute.xlu0 %2011
        %2013 = vrot.lane.b32.xlu0 %v1353, 32
        %v2014 = vpop.permute.xlu0 %2013
        %2015 = vrot.lane.b32.xlu0 %v1359, 32
        %v2016 = vpop.permute.xlu0 %2015
        %v2017 = vsel %vm1406, %v2010, 0
        %v2019 = vsel %vm1406, %v2012, 0
        %v2021 = vsel %vm1406, %v2014, 0
        %v2023 = vsel %vm1406, %v2016, 0
        %2025 = vmatprep.subr.mxu0 0.0
        %2026 = vmatpush1.xpose.msra.mxu0 %v2021
        %2027 = vmatprep.subr.mxu0 0.0
        %2028 = vmatpush1.xpose.msra.mxu0 %v2023
        %2029 = vmatprep.subr.mxu0 0.0
        %2030 = vmatpush1.xpose.msra.mxu0 0.0
        %2031 = vmatprep.subr.mxu0 0.0
        %2032 = vmatpush1.xpose.msra.mxu0 0.0
        %2033 = vmatprep.subr.mxu0 0.0
        %2034 = vmatpush1.xpose.msra.mxu0 0.0
        %2035 = vmatprep.subr.mxu0 0.0
        %2036 = vmatpush1.xpose.msra.mxu0 0.0
        %2037 = vmatprep.subr.mxu0 0.0
        %2038 = vmatpush1.xpose.msra.mxu0 0.0
        %2039 = vmatprep.subr.mxu0 0.0
        %2040 = vmatpush1.xpose.msra.mxu0 0.0
        %2041 = vmatprep.subr.mxu0 0.0
        %2042 = vmatpush1.xpose.msra.mxu0 0.0
        %2043 = vmatprep.subr.mxu0 0.0
        %2044 = vmatpush1.xpose.msra.mxu0 0.0
        %2045 = vmatprep.subr.mxu0 0.0
        %2046 = vmatpush1.xpose.msra.mxu0 0.0
        %2047 = vmatprep.subr.mxu0 0.0
        %2048 = vmatpush1.xpose.msra.mxu0 0.0
        %2049 = vmatprep.subr.mxu0 0.0
        %2050 = vmatpush1.xpose.msra.mxu0 0.0
        %2051 = vmatprep.subr.mxu0 0.0
        %2052 = vmatpush1.xpose.msra.mxu0 0.0
        %2053 = vmatprep.subr.mxu0 0.0
        %2054 = vmatpush1.xpose.msra.mxu0 0.0
        %2055 = vmatprep.subr.mxu0 0.0
        %2056 = vmatpush1.xpose.msra.mxu0 0.0
        %2057 = vmatprep.subr.mxu0 0.0
        %2058 = vmatpush1.xpose.msra.mxu0 0.0
        %2059 = vmatprep.subr.mxu0 0.0
        %2060 = vmatpush1.xpose.msra.mxu0 0.0
        %2061 = vmatprep.subr.mxu0 0.0
        %2062 = vmatpush1.xpose.msra.mxu0 0.0
        %2063 = vmatprep.subr.mxu0 0.0
        %2064 = vmatpush1.xpose.msra.mxu0 0.0
        %2065 = vmatprep.subr.mxu0 0.0
        %2066 = vmatpush1.xpose.msra.mxu0 0.0
        %2067 = vmatprep.subr.mxu0 0.0
        %2068 = vmatpush1.xpose.msra.mxu0 0.0
        %2069 = vmatprep.subr.mxu0 0.0
        %2070 = vmatpush1.xpose.msra.mxu0 0.0
        %2071 = vmatprep.subr.mxu0 0.0
        %2072 = vmatpush1.xpose.msra.mxu0 0.0
        %2073 = vmatprep.subr.mxu0 0.0
        %2074 = vmatpush1.xpose.msra.mxu0 0.0
        %2075 = vmatprep.subr.mxu0 0.0
        %2076 = vmatpush1.xpose.msra.mxu0 0.0
        %2077 = vmatprep.subr.mxu0 0.0
        %2078 = vmatpush1.xpose.msra.mxu0 0.0
        %2079 = vmatprep.subr.mxu0 0.0
        %2080 = vmatpush1.xpose.msra.mxu0 0.0
        %2081 = vmatprep.subr.mxu0 0.0
        %2082 = vmatpush1.xpose.msra.mxu0 0.0
        %2083 = vmatprep.subr.mxu0 0.0
        %2084 = vmatpush1.xpose.msra.mxu0 0.0
        %2085 = vmatprep.subr.mxu0 0.0
        %2086 = vmatpush1.xpose.msra.mxu0 0.0
        %2087 = vmatprep.subr.mxu0 0.0
        %2088 = vmatpush1.xpose.msra.mxu0 0.0
        %2089 = vmatprep.mubr.f32.mxu0 0.0
        %2090 = vmatmul.mubr.f32.gmra.mrb[0].mxu0 %v2017
        %v2091 = vpop.f32.mrb[0].mxu0
        %v2092 = vadd.f32 %v2007, %v2091
        %v2093 = vpop.f32.mrb[0].mxu0
        %2094 = vmatprep.mubr.f32.mxu0 0.0
        %2095 = vmatmul.mubr.f32.gmra.mrb[0].mxu0 %v2019
        %v2096 = vpop.f32.mrb[0].mxu0
        %v2097 = vadd.f32 %v2008, %v2096
        %v2098 = vpop.f32.mrb[0].mxu0
        %2099 = vdwg.mxu0
        %v2100 = vsel %vm1494, %v2092, -inf
        %2101 = vmax.xlane.f32.xlu0 %v2100
        %v2102 = vpop.xlane.xlu0 %2101
        %v2103 = vsel %vm1494, %v2097, -inf
        %2104 = vmax.xlane.f32.xlu0 %v2103
        %v2105 = vpop.xlane.xlu0 %2104
        %v2106 = vsub.f32 %v2092, %v2102
        %v2107 = vsub.f32 %v2097, %v2105
        %v2108 = vmul.f32 %v2106, 1.442695
        %v2109 = vpow.pop %v2108
        %v2110 = vmul.f32 %v2107, 1.442695
        %v2111 = vpow.pop %v2110
        %v2112 = vsel %vm1494, %v2109, 0.0
        %2113 = vadd.xlane.f32.xlu0 %v2112
        %v2114 = vpop.xlane.xlu0 %2113
        %v2115 = vsel %vm1494, %v2111, 0.0
        %2116 = vadd.xlane.f32.xlu0 %v2115
        %v2117 = vpop.xlane.xlu0 %2116
        %v2118 = vrcp.pop %v2114
        %v2119 = vmul.f32 %v2109, %v2118
        %v2120 = vrcp.pop %v2117
        %v2121 = vmul.f32 %v2111, %v2120
        %2122 = vrot.lane.b32.xlu0 %v1396, 32
        %v2123 = vpop.permute.xlu0 %2122
        %2124 = vrot.lane.b32.xlu0 %v1401, 32
        %v2125 = vpop.permute.xlu0 %2124
        %v2129 = vsel %vm1494, %v2119, 0
        %v2132 = vsel %vm1494, %v2121, 0
        %2134 = vmatprep.subr.mxu0 0.0
        %2135 = vmatpush1.msra.mxu0 %v2123
        %2136 = vmatprep.subr.mxu0 0.0
        %2137 = vmatpush1.msra.mxu0 %v2125
        %2138 = vmatprep.subr.mxu0 0.0
        %2139 = vmatpush1.msra.mxu0 0.0
        %2140 = vmatprep.subr.mxu0 0.0
        %2141 = vmatpush1.msra.mxu0 0.0
        %2142 = vmatprep.subr.mxu0 0.0
        %2143 = vmatpush1.msra.mxu0 0.0
        %2144 = vmatprep.subr.mxu0 0.0
        %2145 = vmatpush1.msra.mxu0 0.0
        %2146 = vmatprep.subr.mxu0 0.0
        %2147 = vmatpush1.msra.mxu0 0.0
        %2148 = vmatprep.subr.mxu0 0.0
        %2149 = vmatpush1.msra.mxu0 0.0
        %2150 = vmatprep.subr.mxu0 0.0
        %2151 = vmatpush1.msra.mxu0 0.0
        %2152 = vmatprep.subr.mxu0 0.0
        %2153 = vmatpush1.msra.mxu0 0.0
        %2154 = vmatprep.subr.mxu0 0.0
        %2155 = vmatpush1.msra.mxu0 0.0
        %2156 = vmatprep.subr.mxu0 0.0
        %2157 = vmatpush1.msra.mxu0 0.0
        %2158 = vmatprep.subr.mxu0 0.0
        %2159 = vmatpush1.msra.mxu0 0.0
        %2160 = vmatprep.subr.mxu0 0.0
        %2161 = vmatpush1.msra.mxu0 0.0
        %2162 = vmatprep.subr.mxu0 0.0
        %2163 = vmatpush1.msra.mxu0 0.0
        %2164 = vmatprep.subr.mxu0 0.0
        %2165 = vmatpush1.msra.mxu0 0.0
        %2166 = vmatprep.subr.mxu0 0.0
        %2167 = vmatpush1.msra.mxu0 0.0
        %2168 = vmatprep.subr.mxu0 0.0
        %2169 = vmatpush1.msra.mxu0 0.0
        %2170 = vmatprep.subr.mxu0 0.0
        %2171 = vmatpush1.msra.mxu0 0.0
        %2172 = vmatprep.subr.mxu0 0.0
        %2173 = vmatpush1.msra.mxu0 0.0
        %2174 = vmatprep.subr.mxu0 0.0
        %2175 = vmatpush1.msra.mxu0 0.0
        %2176 = vmatprep.subr.mxu0 0.0
        %2177 = vmatpush1.msra.mxu0 0.0
        %2178 = vmatprep.subr.mxu0 0.0
        %2179 = vmatpush1.msra.mxu0 0.0
        %2180 = vmatprep.subr.mxu0 0.0
        %2181 = vmatpush1.msra.mxu0 0.0
        %2182 = vmatprep.subr.mxu0 0.0
        %2183 = vmatpush1.msra.mxu0 0.0
        %2184 = vmatprep.subr.mxu0 0.0
        %2185 = vmatpush1.msra.mxu0 0.0
        %2186 = vmatprep.subr.mxu0 0.0
        %2187 = vmatpush1.msra.mxu0 0.0
        %2188 = vmatprep.subr.mxu0 0.0
        %2189 = vmatpush1.msra.mxu0 0.0
        %2190 = vmatprep.subr.mxu0 0.0
        %2191 = vmatpush1.msra.mxu0 0.0
        %2192 = vmatprep.subr.mxu0 0.0
        %2193 = vmatpush1.msra.mxu0 0.0
        %2194 = vmatprep.subr.mxu0 0.0
        %2195 = vmatpush1.msra.mxu0 0.0
        %2196 = vmatprep.subr.mxu0 0.0
        %2197 = vmatpush1.msra.mxu0 0.0
        %2198 = vmatprep.mubr.f32.mxu0 0.0
        %2199 = vmatmul.mubr.f32.gmra.mrb[0].mxu0 %v2129
        %v2200 = vpop.f32.mrb[0].mxu0
        %v2201 = vadd.f32 0.0, %v2200
        %v2202 = vpop.f32.mrb[0].mxu0
        %2203 = vmatprep.mubr.f32.mxu0 0.0
        %2204 = vmatmul.mubr.f32.gmra.mrb[0].mxu0 %v2132
        %v2205 = vpop.f32.mrb[0].mxu0
        %v2206 = vadd.f32 0.0, %v2205
        %v2207 = vpop.f32.mrb[0].mxu0
        %2208 = vdwg.mxu0
        %2211 = vrot.lane.b32.xlu0 %v1795, 32
        %v2212 = vpop.permute.xlu0 %2211
        %2213 = vrot.lane.b32.xlu0 %v1800, 32
        %v2214 = vpop.permute.xlu0 %2213
        %2219 = vrot.lane.b32.xlu0 %v1998, 64
        %v2220 = vpop.permute.xlu0 %2219
        %2221 = vrot.lane.b32.xlu0 %v2003, 64
        %v2222 = vpop.permute.xlu0 %2221
        %2227 = vrot.lane.b32.xlu0 %v2201, 96
        %v2228 = vpop.permute.xlu0 %2227
        %2229 = vrot.lane.b32.xlu0 %v2206, 96
        %v2230 = vpop.permute.xlu0 %2229
        %v2233 = vsel %vm1406, %v1590, %v2212
        %v2234 = vsel %vm1406, %v1595, %v2214
        %vm2235 = vcmask 523264
        %v2236 = vsel %vm2235, %v2233, %v2220
        %v2237 = vsel %vm2235, %v2234, %v2222
        %vm2238 = vcmask 785408
        %v2239 = vsel %vm2238, %v2236, %v2228
        %v2240 = vsel %vm2238, %v2237, %v2230
        %v2241 = vld [vmem:[%s810] sm:$0xf]
        %v2242 = vld [vmem:[%s810 + $0x4] sm:$0xf]
        %v2243 = vld [vmem:[%s810 + $0x8] sm:$0xf]
        %v2244 = vld [vmem:[%s810 + $0xc] sm:$0xf]
        %v2245 = vld [vmem:[%s810 + $0x10] sm:$0xf]
        %v2246 = vld [vmem:[%s810 + $0x14] sm:$0xf]
        %v2247 = vld [vmem:[%s810 + $0x18] sm:$0xf]
        %v2248 = vld [vmem:[%s810 + $0x1c] sm:$0xf]
        %v2249 = vld [vmem:[%s810 + $0x20] sm:$0xf]
        %v2250 = vld [vmem:[%s810 + $0x24] sm:$0xf]
        %v2251 = vld [vmem:[%s810 + $0x28] sm:$0xf]
        %v2252 = vld [vmem:[%s810 + $0x2c] sm:$0xf]
        %v2253 = vld [vmem:[%s810 + $0x30] sm:$0xf]
        %v2254 = vld [vmem:[%s810 + $0x34] sm:$0xf]
        %v2255 = vld [vmem:[%s810 + $0x38] sm:$0xf]
        %v2256 = vld [vmem:[%s810 + $0x3c] sm:$0xf]
        %v2257 = vld [vmem:[%s933] sm:$0x1]
        %v2258 = vunpack.c.l.bf16 %v2257
        %v2259 = vlaneseq
        %v2260 = vshrl.u32 %v2259, 7
        %v2261 = vsub.s32 0, %v2260
        %v2262 = vrot.slane %v2258, %v2261
        %v2279 = vunpack.c.l.b16 %v2241
        %v2280 = vunpack.c.l.b16 %v2242
        %v2281 = vunpack.c.l.b16 %v2243
        %v2282 = vunpack.c.l.b16 %v2244
        %v2283 = vunpack.c.l.b16 %v2245
        %v2284 = vunpack.c.l.b16 %v2246
        %v2285 = vunpack.c.l.b16 %v2247
        %v2286 = vunpack.c.l.b16 %v2248
        %v2287 = vunpack.c.l.b16 %v2249
        %v2288 = vunpack.c.l.b16 %v2250
        %v2289 = vunpack.c.l.b16 %v2251
        %v2290 = vunpack.c.l.b16 %v2252
        %v2291 = vunpack.c.l.b16 %v2253
        %v2292 = vunpack.c.l.b16 %v2254
        %v2293 = vunpack.c.l.b16 %v2255
        %v2294 = vunpack.c.l.b16 %v2256
        %v2295 = vpack.c.b16 %v2280, %v2279
        %v2296 = vpack.c.b16 %v2282, %v2281
        %v2297 = vpack.c.b16 %v2284, %v2283
        %v2298 = vpack.c.b16 %v2286, %v2285
        %v2299 = vpack.c.b16 %v2288, %v2287
        %v2300 = vpack.c.b16 %v2290, %v2289
        %v2301 = vpack.c.b16 %v2292, %v2291
        %v2302 = vpack.c.b16 %v2294, %v2293
        %2311 = vmatprep.subr.bf16.mxu0 0
        %2312 = vmatpush1.bf16.msra.mxu0 %v2295
        %2313 = vmatprep.subr.bf16.mxu0 0
        %2314 = vmatpush1.bf16.msra.mxu0 %v2296
        %2315 = vmatprep.subr.bf16.mxu0 0
        %2316 = vmatpush1.bf16.msra.mxu0 %v2297
        %2317 = vmatprep.subr.bf16.mxu0 0
        %2318 = vmatpush1.bf16.msra.mxu0 %v2298
        %2319 = vmatprep.subr.bf16.mxu0 0
        %2320 = vmatpush1.bf16.msra.mxu0 %v2299
        %2321 = vmatprep.subr.bf16.mxu0 0
        %2322 = vmatpush1.bf16.msra.mxu0 %v2300
        %2323 = vmatprep.subr.bf16.mxu0 0
        %2324 = vmatpush1.bf16.msra.mxu0 %v2301
        %2325 = vmatprep.subr.bf16.mxu0 0
        %2326 = vmatpush1.bf16.msra.mxu0 %v2302
        %2327 = vmatprep.subr.bf16.mxu0 0
        %2328 = vmatpush1.bf16.msra.mxu0 0
        %2329 = vmatprep.subr.bf16.mxu0 0
        %2330 = vmatpush1.bf16.msra.mxu0 0
        %2331 = vmatprep.subr.bf16.mxu0 0
        %2332 = vmatpush1.bf16.msra.mxu0 0
        %2333 = vmatprep.subr.bf16.mxu0 0
        %2334 = vmatpush1.bf16.msra.mxu0 0
        %2335 = vmatprep.subr.bf16.mxu0 0
        %2336 = vmatpush1.bf16.msra.mxu0 0
        %2337 = vmatprep.subr.bf16.mxu0 0
        %2338 = vmatpush1.bf16.msra.mxu0 0
        %2339 = vmatprep.subr.bf16.mxu0 0
        %2340 = vmatpush1.bf16.msra.mxu0 0
        %2341 = vmatprep.subr.bf16.mxu0 0
        %2342 = vmatpush1.bf16.msra.mxu0 0
        %2343 = vmatprep.mubr.f32.mxu0 0.0
        %2344 = vmatmul.mubr.f32.gmra.mrb[0].mxu0 %v2239
        %v2345 = vpop.f32.mrb[0].mxu0
        %v2346 = vadd.f32 %v2262, %v2345
        %v2347 = vpop.f32.mrb[0].mxu0
        %2348 = vmatprep.mubr.f32.mxu0 0.0
        %2349 = vmatmul.mubr.f32.gmra.mrb[0].mxu0 %v2240
        %v2350 = vpop.f32.mrb[0].mxu0
        %v2351 = vadd.f32 %v2262, %v2350
        %v2352 = vpop.f32.mrb[0].mxu0
        %2353 = vdwg.mxu0
        %v2354 = vadd.f32 %v1124, %v2346
        %v2355 = vadd.f32 %v1125, %v2351
        %v2356 = vld [vmem:[%s936] sm:$0x1]
        %v2357 = vld [vmem:[%s939] sm:$0x1]
        %2358 = vadd.xlane.f32.xlu0 %v2354
        %v2359 = vpop.xlane.xlu0 %2358
        %2360 = vadd.xlane.f32.xlu0 %v2355
        %v2361 = vpop.xlane.xlu0 %2360
        %v2362 = vrcp.pop 128.0
        %v2363 = vmul.f32 %v2359, %v2362
        %v2364 = vmul.f32 %v2361, %v2362
        %v2365 = vsub.f32 %v2354, %v2363
        %v2366 = vsub.f32 %v2355, %v2364
        %v2367 = vmul.f32 %v2365, %v2365
        %v2368 = vmul.f32 %v2366, %v2366
        %2369 = vadd.xlane.f32.xlu0 %v2367
        %v2370 = vpop.xlane.xlu0 %2369
        %2371 = vadd.xlane.f32.xlu0 %v2368
        %v2372 = vpop.xlane.xlu0 %2371
        %v2373 = vmul.f32 %v2370, %v2362
        %v2374 = vmul.f32 %v2372, %v2362
        %v2375 = vadd.f32 %v2373, 1e-05
        %v2376 = vadd.f32 %v2374, 1e-05
        %v2377 = vrsqrt.pop %v2375
        %v2378 = vrsqrt.pop %v2376
        %v2379 = vmul.f32 %v2365, %v2377
        %v2380 = vmul.f32 %v2366, %v2378
        %v2381 = vunpack.c.l.bf16 %v2356
        %v2382 = vlaneseq
        %v2383 = vshrl.u32 %v2382, 7
        %v2384 = vsub.s32 0, %v2383
        %v2385 = vrot.slane %v2381, %v2384
        %v2386 = vmul.f32 %v2379, %v2385
        %v2387 = vmul.f32 %v2380, %v2385
        %v2388 = vunpack.c.l.bf16 %v2357
        %v2389 = vlaneseq
        %v2390 = vshrl.u32 %v2389, 7
        %v2391 = vsub.s32 0, %v2390
        %v2392 = vrot.slane %v2388, %v2391
        %v2393 = vadd.f32 %v2386, %v2392
        %v2394 = vadd.f32 %v2387, %v2392
        %v2395 = vld [vmem:[%s819] sm:$0xff]
        %v2396 = vld [vmem:[%s819 + $0x8] sm:$0xff]
        %v2397 = vld [vmem:[%s819 + $0x10] sm:$0xff]
        %v2398 = vld [vmem:[%s819 + $0x18] sm:$0xff]
        %v2399 = vld [vmem:[%s819 + $0x20] sm:$0xff]
        %v2400 = vld [vmem:[%s819 + $0x28] sm:$0xff]
        %v2401 = vld [vmem:[%s819 + $0x30] sm:$0xff]
        %v2402 = vld [vmem:[%s819 + $0x38] sm:$0xff]
        %v2403 = vld [vmem:[%s819 + $0x40] sm:$0xff]
        %v2404 = vld [vmem:[%s819 + $0x48] sm:$0xff]
        %v2405 = vld [vmem:[%s819 + $0x50] sm:$0xff]
        %v2406 = vld [vmem:[%s819 + $0x58] sm:$0xff]
        %v2407 = vld [vmem:[%s819 + $0x60] sm:$0xff]
        %v2408 = vld [vmem:[%s819 + $0x68] sm:$0xff]
        %v2409 = vld [vmem:[%s819 + $0x70] sm:$0xff]
        %v2410 = vld [vmem:[%s819 + $0x78] sm:$0xff]
        %v2411 = vld [vmem:[%s943] sm:$0x3]
        %v2412 = vunpack.c.l.bf16 %v2411
        %v2414 = vlaneseq
        %v2415 = vshrl.u32 %v2414, 7
        %v2416 = vsub.s32 0, %v2415
        %v2417 = vrot.slane %v2412, %v2416
        %v2418 = vlaneseq
        %v2419 = vshrl.u32 %v2418, 7
        %v2420 = vsub.s32 2, %v2419
        %v2421 = vrot.slane %v2412, %v2420
        %v2424 = vlaneseq
        %v2425 = vshrl.u32 %v2424, 7
        %v2426 = vsub.s32 0, %v2425
        %v2427 = vrot.slane %v2417, %v2426
        %v2428 = vlaneseq
        %v2429 = vshrl.u32 %v2428, 7
        %v2430 = vsub.s32 0, %v2429
        %v2431 = vrot.slane %v2421, %v2430
        %v2448 = vunpack.c.l.b16 %v2395
        %v2449 = vunpack.c.h.b16 %v2395
        %v2450 = vunpack.c.l.b16 %v2396
        %v2451 = vunpack.c.h.b16 %v2396
        %v2452 = vunpack.c.l.b16 %v2397
        %v2453 = vunpack.c.h.b16 %v2397
        %v2454 = vunpack.c.l.b16 %v2398
        %v2455 = vunpack.c.h.b16 %v2398
        %v2456 = vunpack.c.l.b16 %v2399
        %v2457 = vunpack.c.h.b16 %v2399
        %v2458 = vunpack.c.l.b16 %v2400
        %v2459 = vunpack.c.h.b16 %v2400
        %v2460 = vunpack.c.l.b16 %v2401
        %v2461 = vunpack.c.h.b16 %v2401
        %v2462 = vunpack.c.l.b16 %v2402
        %v2463 = vunpack.c.h.b16 %v2402
        %v2464 = vunpack.c.l.b16 %v2403
        %v2465 = vunpack.c.h.b16 %v2403
        %v2466 = vunpack.c.l.b16 %v2404
        %v2467 = vunpack.c.h.b16 %v2404
        %v2468 = vunpack.c.l.b16 %v2405
        %v2469 = vunpack.c.h.b16 %v2405
        %v2470 = vunpack.c.l.b16 %v2406
        %v2471 = vunpack.c.h.b16 %v2406
        %v2472 = vunpack.c.l.b16 %v2407
        %v2473 = vunpack.c.h.b16 %v2407
        %v2474 = vunpack.c.l.b16 %v2408
        %v2475 = vunpack.c.h.b16 %v2408
        %v2476 = vunpack.c.l.b16 %v2409
        %v2477 = vunpack.c.h.b16 %v2409
        %v2478 = vunpack.c.l.b16 %v2410
        %v2479 = vunpack.c.h.b16 %v2410
        %v2480 = vpack.c.b16 %v2450, %v2448
        %v2481 = vpack.c.b16 %v2451, %v2449
        %v2482 = vpack.c.b16 %v2454, %v2452
        %v2483 = vpack.c.b16 %v2455, %v2453
        %v2484 = vpack.c.b16 %v2458, %v2456
        %v2485 = vpack.c.b16 %v2459, %v2457
        %v2486 = vpack.c.b16 %v2462, %v2460
        %v2487 = vpack.c.b16 %v2463, %v2461
        %v2488 = vpack.c.b16 %v2466, %v2464
        %v2489 = vpack.c.b16 %v2467, %v2465
        %v2490 = vpack.c.b16 %v2470, %v2468
        %v2491 = vpack.c.b16 %v2471, %v2469
        %v2492 = vpack.c.b16 %v2474, %v2472
        %v2493 = vpack.c.b16 %v2475, %v2473
        %v2494 = vpack.c.b16 %v2478, %v2476
        %v2495 = vpack.c.b16 %v2479, %v2477
        %2512 = vmatprep.subr.bf16.mxu0 %v2481
        %2513 = vmatpush1.bf16.msra.mxu0 %v2480
        %2514 = vmatprep.subr.bf16.mxu0 %v2483
        %2515 = vmatpush1.bf16.msra.mxu0 %v2482
        %2516 = vmatprep.subr.bf16.mxu0 %v2485
        %2517 = vmatpush1.bf16.msra.mxu0 %v2484
        %2518 = vmatprep.subr.bf16.mxu0 %v2487
        %2519 = vmatpush1.bf16.msra.mxu0 %v2486
        %2520 = vmatprep.subr.bf16.mxu0 %v2489
        %2521 = vmatpush1.bf16.msra.mxu0 %v2488
        %2522 = vmatprep.subr.bf16.mxu0 %v2491
        %2523 = vmatpush1.bf16.msra.mxu0 %v2490
        %2524 = vmatprep.subr.bf16.mxu0 %v2493
        %2525 = vmatpush1.bf16.msra.mxu0 %v2492
        %2526 = vmatprep.subr.bf16.mxu0 %v2495
        %2527 = vmatpush1.bf16.msra.mxu0 %v2494
        %2528 = vmatprep.subr.bf16.mxu0 0
        %2529 = vmatpush1.bf16.msra.mxu0 0
        %2530 = vmatprep.subr.bf16.mxu0 0
        %2531 = vmatpush1.bf16.msra.mxu0 0
        %2532 = vmatprep.subr.bf16.mxu0 0
        %2533 = vmatpush1.bf16.msra.mxu0 0
        %2534 = vmatprep.subr.bf16.mxu0 0
        %2535 = vmatpush1.bf16.msra.mxu0 0
        %2536 = vmatprep.subr.bf16.mxu0 0
        %2537 = vmatpush1.bf16.msra.mxu0 0
        %2538 = vmatprep.subr.bf16.mxu0 0
        %2539 = vmatpush1.bf16.msra.mxu0 0
        %2540 = vmatprep.subr.bf16.mxu0 0
        %2541 = vmatpush1.bf16.msra.mxu0 0
        %2542 = vmatprep.subr.bf16.mxu0 0
        %2543 = vmatpush1.bf16.msra.mxu0 0
        %2544 = vmatprep.mubr.f32.mxu0 0.0
        %2545 = vmatmul.mubr.f32.gmra.mrb[0].mxu0 %v2393
        %v2546 = vpop.f32.mrb[0].mxu0
        %v2547 = vadd.f32 %v2427, %v2546
        %v2548 = vpop.f32.mrb[0].mxu0
        %v2549 = vadd.f32 %v2431, %v2548
        %2550 = vmatprep.mubr.f32.mxu0 0.0
        %2551 = vmatmul.mubr.f32.gmra.mrb[0].mxu0 %v2394
        %v2552 = vpop.f32.mrb[0].mxu0
        %v2553 = vadd.f32 %v2427, %v2552
        %v2554 = vpop.f32.mrb[0].mxu0
        %v2555 = vadd.f32 %v2431, %v2554
        %2556 = vdwg.mxu0
        %v2557 = vmax.f32 %v2547, 0.0
        %v2558 = vmax.f32 %v2549, 0.0
        %v2559 = vmax.f32 %v2553, 0.0
        %v2560 = vmax.f32 %v2555, 0.0
        %v2561 = vld [vmem:[%s828] sm:$0xf]
        %v2562 = vld [vmem:[%s828 + $0x4] sm:$0xf]
        %v2563 = vld [vmem:[%s828 + $0x8] sm:$0xf]
        %v2564 = vld [vmem:[%s828 + $0xc] sm:$0xf]
        %v2565 = vld [vmem:[%s828 + $0x10] sm:$0xf]
        %v2566 = vld [vmem:[%s828 + $0x14] sm:$0xf]
        %v2567 = vld [vmem:[%s828 + $0x18] sm:$0xf]
        %v2568 = vld [vmem:[%s828 + $0x1c] sm:$0xf]
        %v2569 = vld [vmem:[%s828 + $0x20] sm:$0xf]
        %v2570 = vld [vmem:[%s828 + $0x24] sm:$0xf]
        %v2571 = vld [vmem:[%s828 + $0x28] sm:$0xf]
        %v2572 = vld [vmem:[%s828 + $0x2c] sm:$0xf]
        %v2573 = vld [vmem:[%s828 + $0x30] sm:$0xf]
        %v2574 = vld [vmem:[%s828 + $0x34] sm:$0xf]
        %v2575 = vld [vmem:[%s828 + $0x38] sm:$0xf]
        %v2576 = vld [vmem:[%s828 + $0x3c] sm:$0xf]
        %v2577 = vld [vmem:[%s828 + $0x40] sm:$0xf]
        %v2578 = vld [vmem:[%s828 + $0x44] sm:$0xf]
        %v2579 = vld [vmem:[%s828 + $0x48] sm:$0xf]
        %v2580 = vld [vmem:[%s828 + $0x4c] sm:$0xf]
        %v2581 = vld [vmem:[%s828 + $0x50] sm:$0xf]
        %v2582 = vld [vmem:[%s828 + $0x54] sm:$0xf]
        %v2583 = vld [vmem:[%s828 + $0x58] sm:$0xf]
        %v2584 = vld [vmem:[%s828 + $0x5c] sm:$0xf]
        %v2585 = vld [vmem:[%s828 + $0x60] sm:$0xf]
        %v2586 = vld [vmem:[%s828 + $0x64] sm:$0xf]
        %v2587 = vld [vmem:[%s828 + $0x68] sm:$0xf]
        %v2588 = vld [vmem:[%s828 + $0x6c] sm:$0xf]
        %v2589 = vld [vmem:[%s828 + $0x70] sm:$0xf]
        %v2590 = vld [vmem:[%s828 + $0x74] sm:$0xf]
        %v2591 = vld [vmem:[%s828 + $0x78] sm:$0xf]
        %v2592 = vld [vmem:[%s828 + $0x7c] sm:$0xf]
        %v2593 = vld [vmem:[%s946] sm:$0x1]
        %v2594 = vunpack.c.l.bf16 %v2593
        %v2595 = vlaneseq
        %v2596 = vshrl.u32 %v2595, 7
        %v2597 = vsub.s32 0, %v2596
        %v2598 = vrot.slane %v2594, %v2597
        %v2631 = vunpack.c.l.b16 %v2561
        %v2632 = vunpack.c.l.b16 %v2562
        %v2633 = vunpack.c.l.b16 %v2563
        %v2634 = vunpack.c.l.b16 %v2564
        %v2635 = vunpack.c.l.b16 %v2565
        %v2636 = vunpack.c.l.b16 %v2566
        %v2637 = vunpack.c.l.b16 %v2567
        %v2638 = vunpack.c.l.b16 %v2568
        %v2639 = vunpack.c.l.b16 %v2569
        %v2640 = vunpack.c.l.b16 %v2570
        %v2641 = vunpack.c.l.b16 %v2571
        %v2642 = vunpack.c.l.b16 %v2572
        %v2643 = vunpack.c.l.b16 %v2573
        %v2644 = vunpack.c.l.b16 %v2574
        %v2645 = vunpack.c.l.b16 %v2575
        %v2646 = vunpack.c.l.b16 %v2576
        %v2647 = vunpack.c.l.b16 %v2577
        %v2648 = vunpack.c.l.b16 %v2578
        %v2649 = vunpack.c.l.b16 %v2579
        %v2650 = vunpack.c.l.b16 %v2580
        %v2651 = vunpack.c.l.b16 %v2581
        %v2652 = vunpack.c.l.b16 %v2582
        %v2653 = vunpack.c.l.b16 %v2583
        %v2654 = vunpack.c.l.b16 %v2584
        %v2655 = vunpack.c.l.b16 %v2585
        %v2656 = vunpack.c.l.b16 %v2586
        %v2657 = vunpack.c.l.b16 %v2587
        %v2658 = vunpack.c.l.b16 %v2588
        %v2659 = vunpack.c.l.b16 %v2589
        %v2660 = vunpack.c.l.b16 %v2590
        %v2661 = vunpack.c.l.b16 %v2591
        %v2662 = vunpack.c.l.b16 %v2592
        %v2663 = vpack.c.b16 %v2632, %v2631
        %v2664 = vpack.c.b16 %v2634, %v2633
        %v2665 = vpack.c.b16 %v2636, %v2635
        %v2666 = vpack.c.b16 %v2638, %v2637
        %v2667 = vpack.c.b16 %v2640, %v2639
        %v2668 = vpack.c.b16 %v2642, %v2641
        %v2669 = vpack.c.b16 %v2644, %v2643
        %v2670 = vpack.c.b16 %v2646, %v2645
        %v2671 = vpack.c.b16 %v2648, %v2647
        %v2672 = vpack.c.b16 %v2650, %v2649
        %v2673 = vpack.c.b16 %v2652, %v2651
        %v2674 = vpack.c.b16 %v2654, %v2653
        %v2675 = vpack.c.b16 %v2656, %v2655
        %v2676 = vpack.c.b16 %v2658, %v2657
        %v2677 = vpack.c.b16 %v2660, %v2659
        %v2678 = vpack.c.b16 %v2662, %v2661
        %2695 = vmatprep.subr.bf16.mxu0 0
        %2696 = vmatpush1.bf16.msra.mxu0 %v2663
        %2697 = vmatprep.subr.bf16.mxu0 0
        %2698 = vmatpush1.bf16.msra.mxu0 %v2664
        %2699 = vmatprep.subr.bf16.mxu0 0
        %2700 = vmatpush1.bf16.msra.mxu0 %v2665
        %2701 = vmatprep.subr.bf16.mxu0 0
        %2702 = vmatpush1.bf16.msra.mxu0 %v2666
        %2703 = vmatprep.subr.bf16.mxu0 0
        %2704 = vmatpush1.bf16.msra.mxu0 %v2667
        %2705 = vmatprep.subr.bf16.mxu0 0
        %2706 = vmatpush1.bf16.msra.mxu0 %v2668
        %2707 = vmatprep.subr.bf16.mxu0 0
        %2708 = vmatpush1.bf16.msra.mxu0 %v2669
        %2709 = vmatprep.subr.bf16.mxu0 0
        %2710 = vmatpush1.bf16.msra.mxu0 %v2670
        %2711 = vmatprep.subr.bf16.mxu0 0
        %2712 = vmatpush1.bf16.msra.mxu0 %v2671
        %2713 = vmatprep.subr.bf16.mxu0 0
        %2714 = vmatpush1.bf16.msra.mxu0 %v2672
        %2715 = vmatprep.subr.bf16.mxu0 0
        %2716 = vmatpush1.bf16.msra.mxu0 %v2673
        %2717 = vmatprep.subr.bf16.mxu0 0
        %2718 = vmatpush1.bf16.msra.mxu0 %v2674
        %2719 = vmatprep.subr.bf16.mxu0 0
        %2720 = vmatpush1.bf16.msra.mxu0 %v2675
        %2721 = vmatprep.subr.bf16.mxu0 0
        %2722 = vmatpush1.bf16.msra.mxu0 %v2676
        %2723 = vmatprep.subr.bf16.mxu0 0
        %2724 = vmatpush1.bf16.msra.mxu0 %v2677
        %2725 = vmatprep.subr.bf16.mxu0 0
        %2726 = vmatpush1.bf16.msra.mxu0 %v2678
        %2727 = vmatprep.mubr.f32.mxu0 %v2558
        %2728 = vmatmul.mubr.f32.gmra.mrb[0].mxu0 %v2557
        %v2729 = vpop.f32.mrb[0].mxu0
        %v2730 = vadd.f32 %v2598, %v2729
        %v2731 = vpop.f32.mrb[0].mxu0
        %2732 = vmatprep.mubr.f32.mxu0 %v2560
        %2733 = vmatmul.mubr.f32.gmra.mrb[0].mxu0 %v2559
        %v2734 = vpop.f32.mrb[0].mxu0
        %v2735 = vadd.f32 %v2598, %v2734
        %v2736 = vpop.f32.mrb[0].mxu0
        %2737 = vdwg.mxu0
        %v2738 = vadd.f32 %v2393, %v2730
        %v2739 = vadd.f32 %v2394, %v2735
        %v2740 = vld [vmem:[%s949] sm:$0x1]
        %v2741 = vld [vmem:[%s952] sm:$0x1]
        %2742 = vadd.xlane.f32.xlu0 %v2738
        %v2743 = vpop.xlane.xlu0 %2742
        %2744 = vadd.xlane.f32.xlu0 %v2739
        %v2745 = vpop.xlane.xlu0 %2744
        %v2746 = vmul.f32 %v2743, %v2362
        %v2747 = vmul.f32 %v2745, %v2362
        %v2748 = vsub.f32 %v2738, %v2746
        %v2749 = vsub.f32 %v2739, %v2747
        %v2750 = vmul.f32 %v2748, %v2748
        %v2751 = vmul.f32 %v2749, %v2749
        %2752 = vadd.xlane.f32.xlu0 %v2750
        %v2753 = vpop.xlane.xlu0 %2752
        %2754 = vadd.xlane.f32.xlu0 %v2751
        %v2755 = vpop.xlane.xlu0 %2754
        %v2756 = vmul.f32 %v2753, %v2362
        %v2757 = vmul.f32 %v2755, %v2362
        %v2758 = vadd.f32 %v2756, 1e-05
        %v2759 = vadd.f32 %v2757, 1e-05
        %v2760 = vrsqrt.pop %v2758
        %v2761 = vrsqrt.pop %v2759
        %v2762 = vmul.f32 %v2748, %v2760
        %v2763 = vmul.f32 %v2749, %v2761
        %v2764 = vunpack.c.l.bf16 %v2740
        %v2765 = vlaneseq
        %v2766 = vshrl.u32 %v2765, 7
        %v2767 = vsub.s32 0, %v2766
        %v2768 = vrot.slane %v2764, %v2767
        %v2769 = vmul.f32 %v2762, %v2768
        %v2770 = vmul.f32 %v2763, %v2768
        %v2771 = vunpack.c.l.bf16 %v2741
        %v2772 = vlaneseq
        %v2773 = vshrl.u32 %v2772, 7
        %v2774 = vsub.s32 0, %v2773
        %v2775 = vrot.slane %v2771, %v2774
        %v2776 = vadd.f32 %v2769, %v2775
        %v2777 = vadd.f32 %v2770, %v2775
        %2778 = vst [vmem:[#allocation2] sm:$0xff] %v2776
        %2779 = vst [vmem:[#allocation2 + $0x8] sm:$0xff] %v2777
        %p2780 = scmp.eq.s32.totalorder %s45, 5
        // Predicated region
        $region133: #{tpu_custom_call.1} parent=111 // pred_check
          %p2781 = pneg %p2780
        $region134: #{tpu_custom_call.1} parent=111 // pred_check_branch
          %2783 = sbr.rel (%p2781) target = $region136
        $region135: #{tpu_custom_call.1} parent=111 // pred_region
          %v2784 = vld [vmem:[%s19] sm:$0xf]
          %v2785 = vld [vmem:[%s19 + $0x4] sm:$0xf]
          %v2786 = vld [vmem:[%s19 + $0x8] sm:$0xf]
          %v2787 = vld [vmem:[%s19 + $0xc] sm:$0xf]
          %v2788 = vld [vmem:[%s19 + $0x10] sm:$0xf]
          %v2789 = vld [vmem:[%s19 + $0x14] sm:$0xf]
          %v2790 = vld [vmem:[%s19 + $0x18] sm:$0xf]
          %v2791 = vld [vmem:[%s19 + $0x1c] sm:$0xf]
          %v2792 = vld [vmem:[%s19 + $0x20] sm:$0xf]
          %v2793 = vld [vmem:[%s19 + $0x24] sm:$0xf]
          %v2794 = vld [vmem:[%s19 + $0x28] sm:$0xf]
          %v2795 = vld [vmem:[%s19 + $0x2c] sm:$0xf]
          %v2796 = vld [vmem:[%s19 + $0x30] sm:$0xf]
          %v2797 = vld [vmem:[%s19 + $0x34] sm:$0xf]
          %v2798 = vld [vmem:[%s19 + $0x38] sm:$0xf]
          %v2799 = vld [vmem:[%s19 + $0x3c] sm:$0xf]
          %v2800 = vld [vmem:[%s20] sm:$0x1]
          %v2801 = vunpack.c.l.bf16 %v2800
          %v2802 = vlaneseq
          %v2803 = vshrl.u32 %v2802, 7
          %v2804 = vsub.s32 0, %v2803
          %v2805 = vrot.slane %v2801, %v2804
          %v2822 = vunpack.c.l.b16 %v2784
          %v2823 = vunpack.c.l.b16 %v2785
          %v2824 = vunpack.c.l.b16 %v2786
          %v2825 = vunpack.c.l.b16 %v2787
          %v2826 = vunpack.c.l.b16 %v2788
          %v2827 = vunpack.c.l.b16 %v2789
          %v2828 = vunpack.c.l.b16 %v2790
          %v2829 = vunpack.c.l.b16 %v2791
          %v2830 = vunpack.c.l.b16 %v2792
          %v2831 = vunpack.c.l.b16 %v2793
          %v2832 = vunpack.c.l.b16 %v2794
          %v2833 = vunpack.c.l.b16 %v2795
          %v2834 = vunpack.c.l.b16 %v2796
          %v2835 = vunpack.c.l.b16 %v2797
          %v2836 = vunpack.c.l.b16 %v2798
          %v2837 = vunpack.c.l.b16 %v2799
          %v2838 = vpack.c.b16 %v2823, %v2822
          %v2839 = vpack.c.b16 %v2825, %v2824
          %v2840 = vpack.c.b16 %v2827, %v2826
          %v2841 = vpack.c.b16 %v2829, %v2828
          %v2842 = vpack.c.b16 %v2831, %v2830
          %v2843 = vpack.c.b16 %v2833, %v2832
          %v2844 = vpack.c.b16 %v2835, %v2834
          %v2845 = vpack.c.b16 %v2837, %v2836
          %2854 = vmatprep.subr.bf16.mxu0 0
          %2855 = vmatpush1.bf16.msra.mxu0 %v2838
          %2856 = vmatprep.subr.bf16.mxu0 0
          %2857 = vmatpush1.bf16.msra.mxu0 %v2839
          %2858 = vmatprep.subr.bf16.mxu0 0
          %2859 = vmatpush1.bf16.msra.mxu0 %v2840
          %2860 = vmatprep.subr.bf16.mxu0 0
          %2861 = vmatpush1.bf16.msra.mxu0 %v2841
          %2862 = vmatprep.subr.bf16.mxu0 0
          %2863 = vmatpush1.bf16.msra.mxu0 %v2842
          %2864 = vmatprep.subr.bf16.mxu0 0
          %2865 = vmatpush1.bf16.msra.mxu0 %v2843
          %2866 = vmatprep.subr.bf16.mxu0 0
          %2867 = vmatpush1.bf16.msra.mxu0 %v2844
          %2868 = vmatprep.subr.bf16.mxu0 0
          %2869 = vmatpush1.bf16.msra.mxu0 %v2845
          %2870 = vmatprep.subr.bf16.mxu0 0
          %2871 = vmatpush1.bf16.msra.mxu0 0
          %2872 = vmatprep.subr.bf16.mxu0 0
          %2873 = vmatpush1.bf16.msra.mxu0 0
          %2874 = vmatprep.subr.bf16.mxu0 0
          %2875 = vmatpush1.bf16.msra.mxu0 0
          %2876 = vmatprep.subr.bf16.mxu0 0
          %2877 = vmatpush1.bf16.msra.mxu0 0
          %2878 = vmatprep.subr.bf16.mxu0 0
          %2879 = vmatpush1.bf16.msra.mxu0 0
          %2880 = vmatprep.subr.bf16.mxu0 0
          %2881 = vmatpush1.bf16.msra.mxu0 0
          %2882 = vmatprep.subr.bf16.mxu0 0
          %2883 = vmatpush1.bf16.msra.mxu0 0
          %2884 = vmatprep.subr.bf16.mxu0 0
          %2885 = vmatpush1.bf16.msra.mxu0 0
          %2886 = vmatprep.mubr.f32.mxu0 0.0
          %2887 = vmatmul.mubr.f32.gmra.mrb[0].mxu0 %v2776
          %v2888 = vpop.f32.mrb[0].mxu0
          %v2889 = vadd.f32 %v2805, %v2888
          %v2890 = vpop.f32.mrb[0].mxu0
          %2891 = vmatprep.mubr.f32.mxu0 0.0
          %2892 = vmatmul.mubr.f32.gmra.mrb[0].mxu0 %v2777
          %v2893 = vpop.f32.mrb[0].mxu0
          %v2894 = vadd.f32 %v2805, %v2893
          %v2895 = vpop.f32.mrb[0].mxu0
          %2896 = vdwg.mxu0
          %vm2897 = vcmp.ge.f32.partialorder %v2889, 0.0
          %vm2898 = vcmp.ge.f32.partialorder %v2894, 0.0
          %v2899 = vmul.f32 %v2889, 0.1
          %v2900 = vmul.f32 %v2894, 0.1
          %v2901 = vsel %vm2897, %v2889, %v2899
          %v2902 = vsel %vm2898, %v2894, %v2900
          %v2903 = vld [vmem:[%s21] sm:$0xf]
          %v2904 = vld [vmem:[%s21 + $0x4] sm:$0xf]
          %v2905 = vld [vmem:[%s21 + $0x8] sm:$0xf]
          %v2906 = vld [vmem:[%s21 + $0xc] sm:$0xf]
          %v2907 = vld [vmem:[%s21 + $0x10] sm:$0xf]
          %v2908 = vld [vmem:[%s21 + $0x14] sm:$0xf]
          %v2909 = vld [vmem:[%s21 + $0x18] sm:$0xf]
          %v2910 = vld [vmem:[%s21 + $0x1c] sm:$0xf]
          %v2911 = vld [vmem:[#allocation3] sm:$0x1]
          %v2912 = vunpack.c.l.bf16 %v2911
          %v2913 = vlaneseq
          %v2914 = vshrl.u32 %v2913, 7
          %v2915 = vsub.s32 0, %v2914
          %v2916 = vrot.slane %v2912, %v2915
          %v2925 = vunpack.c.l.b16 %v2903
          %v2926 = vunpack.c.l.b16 %v2904
          %v2927 = vunpack.c.l.b16 %v2905
          %v2928 = vunpack.c.l.b16 %v2906
          %v2929 = vunpack.c.l.b16 %v2907
          %v2930 = vunpack.c.l.b16 %v2908
          %v2931 = vunpack.c.l.b16 %v2909
          %v2932 = vunpack.c.l.b16 %v2910
          %v2933 = vpack.c.b16 %v2926, %v2925
          %v2934 = vpack.c.b16 %v2928, %v2927
          %v2935 = vpack.c.b16 %v2930, %v2929
          %v2936 = vpack.c.b16 %v2932, %v2931
          %v2942 = vsel %vm2235, %v2901, 0
          %v2945 = vsel %vm2235, %v2902, 0
          %2947 = vmatprep.subr.bf16.mxu0 0
          %2948 = vmatpush1.bf16.msra.mxu0 %v2933
          %2949 = vmatprep.subr.bf16.mxu0 0
          %2950 = vmatpush1.bf16.msra.mxu0 %v2934
          %2951 = vmatprep.subr.bf16.mxu0 0
          %2952 = vmatpush1.bf16.msra.mxu0 %v2935
          %2953 = vmatprep.subr.bf16.mxu0 0
          %2954 = vmatpush1.bf16.msra.mxu0 %v2936
          %2955 = vmatprep.subr.bf16.mxu0 0
          %2956 = vmatpush1.bf16.msra.mxu0 0
          %2957 = vmatprep.subr.bf16.mxu0 0
          %2958 = vmatpush1.bf16.msra.mxu0 0
          %2959 = vmatprep.subr.bf16.mxu0 0
          %2960 = vmatpush1.bf16.msra.mxu0 0
          %2961 = vmatprep.subr.bf16.mxu0 0
          %2962 = vmatpush1.bf16.msra.mxu0 0
          %2963 = vmatprep.subr.bf16.mxu0 0
          %2964 = vmatpush1.bf16.msra.mxu0 0
          %2965 = vmatprep.subr.bf16.mxu0 0
          %2966 = vmatpush1.bf16.msra.mxu0 0
          %2967 = vmatprep.subr.bf16.mxu0 0
          %2968 = vmatpush1.bf16.msra.mxu0 0
          %2969 = vmatprep.subr.bf16.mxu0 0
          %2970 = vmatpush1.bf16.msra.mxu0 0
          %2971 = vmatprep.subr.bf16.mxu0 0
          %2972 = vmatpush1.bf16.msra.mxu0 0
          %2973 = vmatprep.subr.bf16.mxu0 0
          %2974 = vmatpush1.bf16.msra.mxu0 0
          %2975 = vmatprep.subr.bf16.mxu0 0
          %2976 = vmatpush1.bf16.msra.mxu0 0
          %2977 = vmatprep.subr.bf16.mxu0 0
          %2978 = vmatpush1.bf16.msra.mxu0 0
          %2979 = vmatprep.mubr.f32.mxu0 0.0
          %2980 = vmatmul.mubr.f32.gmra.mrb[0].mxu0 %v2942
          %v2981 = vpop.f32.mrb[0].mxu0
          %v2982 = vadd.f32 %v2916, %v2981
          %v2983 = vpop.f32.mrb[0].mxu0
          %2984 = vmatprep.mubr.f32.mxu0 0.0
          %2985 = vmatmul.mubr.f32.gmra.mrb[0].mxu0 %v2945
          %v2986 = vpop.f32.mrb[0].mxu0
          %v2987 = vadd.f32 %v2916, %v2986
          %v2988 = vpop.f32.mrb[0].mxu0
          %2989 = vdwg.mxu0
          %vm2990 = vcmask 7168
          %2991 = vst.msk [vmem:[%s23] sm:$0xff] %vm2990, %v2982
          %2992 = vst.msk [vmem:[%s23 + $0x8] sm:$0xff] %vm2990, %v2987
        $region136: #{tpu_custom_call.1} parent=111 // pred_fallthru
          _
        // Predicated region
        $region137: #{tpu_custom_call.1} parent=111 // pred_check
          %p2993 = pneg %p601
        $region138: #{tpu_custom_call.1} parent=111 // pred_check_branch
          %2995 = sbr.rel (%p2993) target = $region140
        $region139: #{tpu_custom_call.1} parent=111 // pred_region
          _
        $region140: #{tpu_custom_call.1} parent=111 // pred_fallthru
          _
        // Predicated region
        $region141: #{tpu_custom_call.1} parent=111 // pred_check
          %p2996 = pneg %p601
        $region142: #{tpu_custom_call.1} parent=111 // pred_check_branch
          %2998 = sbr.rel (%p2996) target = $region144
        $region143: #{tpu_custom_call.1} parent=111 // pred_region
          _
        $region144: #{tpu_custom_call.1} parent=111 // pred_fallthru
          _
      $region112: #{tpu_custom_call.1} parent=5 // pred_fallthru
        _
      %p2999 = scmp.le.s32.totalorder 2, %s40
      // Predicated region
      $region145: #{tpu_custom_call.1} parent=5 // pred_check
        %p3000 = pneg %p2999
      $region146: #{tpu_custom_call.1} parent=5 // pred_check_branch
        %3002 = sbr.rel (%p3000) target = $region148
      $region147: #{tpu_custom_call.1} parent=5 // pred_region
        %s3003 = ssub.s32 %s40, 2
      $region148: #{tpu_custom_call.1} parent=5 // pred_fallthru
        _
    $region6: #{tpu_custom_call.1} parent=1 // loop_footer
      %s44 = sadd.s32 1, %s40
    $region7: #{tpu_custom_call.1} parent=1 // loop_footer_branch
      %39 = sbr.rel target = $region3
    $region8: #{tpu_custom_call.1} parent=1 // loop_exit
      _
    %3004 = vsyncpa [#allocation5], 1
    %s3005 = scalar_lea.sflag [#allocation5], 1
    %3006 = vsyncpa %s3005, 1
    %3007 = vsyncpa [#allocation7], 1
    %s3008 = scalar_lea.sflag [#allocation7], 1
    %3009 = vsyncpa %s3008, 1
    %3010 = vsyncpa [#allocation10], 1
    %s3011 = scalar_lea.sflag [#allocation10], 1
    %3012 = vsyncpa %s3011, 1

</llo_original>
